<compile_context>
chip_gen: v6e
topology: v6e:2x2x1
jax: 0.10.0
libtpu: 0.0.40
codegen_flags: <defaults>
</compile_context>

<pallas_src>
import jax
import jax.numpy as jnp
from jax.experimental import pallas as pl
from jax.experimental.pallas import tpu as pltpu


# ----------------------------------------------------------------------------
# Fused kernel: [Conv1d(k)+bias+ReLU+BN] x L  ->  mean-pool  ->  Linear
# ----------------------------------------------------------------------------
def _fused_style_encoder_kernel(x_ref, wc_ref, b_ref, sc_ref, sh_ref,
                                wl_ref, bl_ref, o_ref, hp_ref):
    # x_ref : (bb, T, Cin)      input batch block (Cin may be < H)
    # wc_ref: (L, K, H, H)      per-layer, per-tap conv weights (layer-0 Cin rows zero-padded)
    # b_ref : (L, 1, H)         conv biases            (f32)
    # sc_ref: (L, 1, H)         gamma / sqrt(var+eps)  (f32)
    # sh_ref: (L, 1, H)         beta - mean*scale      (f32)
    # wl_ref: (H, S)            final Linear weight    (f32)
    # bl_ref: (1, S)            final Linear bias      (f32)
    # o_ref : (bb, 1, S)        output block
    # hp_ref: (bb, T+2*pad, H)  VMEM scratch: time-padded activation buffer (f32)
    bb, T, Cin = x_ref.shape
    L, K, H, _ = wc_ref.shape
    pad = (K - 1) // 2
    cd = wc_ref.dtype  # MXU input dtype (bf16 or f32); accumulation is f32

    # Zero ONLY the halo rows; interior rows are fully overwritten each layer.
    hp_ref[:, :pad, :] = jnp.zeros((bb, pad, H), jnp.float32)
    hp_ref[:, pad + T:, :] = jnp.zeros((bb, pad, H), jnp.float32)

    # In-kernel channel pad (Cin -> H lanes); layer-0 weight rows for the
    # padded channels are zero, so this only has to avoid garbage lanes.
    h = x_ref[...].astype(jnp.float32)
    if Cin < H:
        h = jnp.concatenate(
            [h, jnp.zeros((bb, T, H - Cin), jnp.float32)], axis=-1)

    for l in range(L):                               # static unroll over layers
        hp_ref[:, pad:pad + T, :] = h
        acc = None
        for k in range(K):                           # tap-wise MXU matmuls, f32 accumulate
            tap = hp_ref[:, k:k + T, :].reshape(bb * T, H).astype(cd)
            part = jnp.dot(tap, wc_ref[l, k],
                           preferred_element_type=jnp.float32)   # (bb*T, H)
            acc = part if acc is None else acc + part
        y = jnp.maximum(acc + b_ref[l], 0.0)         # conv bias + ReLU
        y = y * sc_ref[l] + sh_ref[l]                # BatchNorm (eval), f32 epilogue
        h = y.reshape(bb, T, H)

    # AdaptiveAvgPool1d(1): XLU sublane reduction over time (off the MXU path).
    pooled = jnp.sum(h, axis=1) * (1.0 / T)          # (bb, H) f32
    out = jnp.dot(pooled, wl_ref[...],
                  preferred_element_type=jnp.float32) + bl_ref[...]
    o_ref[...] = out.reshape(o_ref.shape).astype(o_ref.dtype)


def simple_style_encoder(x, packed, batch_block=None):
    """x: (B, T, input_dim) -> (B, style_dim). `packed` from pack_params()."""
    wc, b, sc, sh, wl, bl = packed
    B, T, Cin = x.shape
    L, K, H, _ = wc.shape
    pad = (K - 1) // 2
    S = wl.shape[-1]
    assert Cin <= H, "simple_style_encoder assumes input_dim <= hidden_dim"
    bb = B if batch_block is None else batch_block
    assert B % bb == 0, "batch_block must divide B"
    grid = (B // bb,)

    out = pl.pallas_call(
        _fused_style_encoder_kernel,
        out_shape=jax.ShapeDtypeStruct((B, 1, S), jnp.float32),
        grid_spec=pltpu.PrefetchScalarGridSpec(
            num_scalar_prefetch=0,
            grid=grid,
            in_specs=[
                pl.BlockSpec((bb, T, Cin), lambda i: (i, 0, 0)),      # x: tiled over batch
                pl.BlockSpec((L, K, H, H), lambda i: (0, 0, 0, 0)),   # conv weights: resident
                pl.BlockSpec((L, 1, H), lambda i: (0, 0, 0)),         # conv bias
                pl.BlockSpec((L, 1, H), lambda i: (0, 0, 0)),         # BN scale
                pl.BlockSpec((L, 1, H), lambda i: (0, 0, 0)),         # BN shift
                pl.BlockSpec((H, S), lambda i: (0, 0)),               # linear weight
                pl.BlockSpec((1, S), lambda i: (0, 0)),               # linear bias
            ],
            out_specs=pl.BlockSpec((bb, 1, S), lambda i: (i, 0, 0)),
            scratch_shapes=[pltpu.VMEM((bb, T + 2 * pad, H), jnp.float32)],
        ),
        compiler_params=pltpu.CompilerParams(
            dimension_semantics=("parallel",)),       # batch axis -> 2 TCs on v7x
    )(x, wc, b, sc, sh, wl, bl)
    return out.reshape(B, S)


# ----------------------------------------------------------------------------
# Parameter construction (PyTorch-like layout) + packing for the fused kernel
# ----------------------------------------------------------------------------
def init_params(key, input_dim, style_dim, hidden_dim, num_layers, ksize=5):
    conv_params = []
    for i in range(num_layers):
        cin = input_dim if i == 0 else hidden_dim
        key, k1, k2, k3, k4, k5, k6 = jax.random.split(key, 7)
        w = 0.1 * jax.random.normal(k1, (ksize, cin, hidden_dim), jnp.float32)
        bias = 0.1 * jax.random.normal(k2, (hidden_dim,), jnp.float32)
        gamma = 1.0 + 0.1 * jax.random.normal(k3, (hidden_dim,), jnp.float32)
        beta = 0.1 * jax.random.normal(k4, (hidden_dim,), jnp.float32)
        r_mean = 0.1 * jax.random.normal(k5, (hidden_dim,), jnp.float32)
        r_var = jnp.abs(1.0 + 0.1 * jax.random.normal(k6, (hidden_dim,),
                                                      jnp.float32))
        eps = 1e-5
        scale = gamma / jnp.sqrt(r_var + eps)        # fold BN (eval mode)
        shift = beta - r_mean * scale
        conv_params.append((w, bias, scale, shift))
    key, k7, k8 = jax.random.split(key, 3)
    wl = 0.1 * jax.random.normal(k7, (hidden_dim, style_dim), jnp.float32)
    bl = 0.1 * jax.random.normal(k8, (style_dim,), jnp.float32)
    return conv_params, wl, bl


def pack_params(conv_params, wl, bl, compute_dtype=jnp.bfloat16):
    """Zero-pad layer-0 Cin rows, stack conv weights as (L, K, H, H)."""
    K, _, H = conv_params[0][0].shape
    ws, bs, scs, shs = [], [], [], []
    for (w, bias, scale, shift) in conv_params:
        cin = w.shape[1]
        assert cin <= H, "pack_params assumes Cin <= hidden_dim"
        if cin < H:                                  # zero rows for padded input lanes
            w = jnp.pad(w, ((0, 0), (0, H - cin), (0, 0)))
        ws.append(w)                                 # (K, H, H)
        bs.append(bias.reshape(1, H))
        scs.append(scale.reshape(1, H))
        shs.append(shift.reshape(1, H))
    wc = jnp.stack(ws).astype(compute_dtype)         # (L, K, H, H), bf16 by default
    b = jnp.stack(bs).astype(jnp.float32)            # (L, 1, H)
    sc = jnp.stack(scs).astype(jnp.float32)
    sh = jnp.stack(shs).astype(jnp.float32)
    wl_p = wl.astype(jnp.float32)                    # tiny; keep pool+linear exact
    bl_p = bl.reshape(1, -1).astype(jnp.float32)     # (1, S)
    return wc, b, sc, sh, wl_p, bl_p


# ----------------------------------------------------------------------------
# Pure-JAX reference (Conv -> ReLU -> BN(eval), mean-pool, Linear)
# ----------------------------------------------------------------------------
def _reference(x, conv_params, wl, bl):
    h = x
    for (w, bias, scale, shift) in conv_params:
        K = w.shape[0]
        pad = (K - 1) // 2
        T = h.shape[1]
        hp = jnp.pad(h, ((0, 0), (pad, pad), (0, 0)))
        acc = sum(jnp.einsum('btc,cd->btd', hp[:, k:k + T, :], w[k])
                  for k in range(K))
        h = jnp.maximum(acc + bias, 0.0) * scale + shift
    pooled = jnp.mean(h, axis=1)
    return pooled @ wl + bl


if __name__ == "__main__":
    B, T = 2, 16
    input_dim, style_dim, hidden_dim, num_layers = 80, 48, 128, 4

    key = jax.random.PRNGKey(0)
    key, kx = jax.random.split(key)
    x = jax.random.normal(kx, (B, T, input_dim), jnp.float32)

    conv_params, wl, bl = init_params(key, input_dim, style_dim,
                                      hidden_dim, num_layers)
    ref = _reference(x, conv_params, wl, bl)

    # Default path: bf16 conv weights, f32 accumulation/epilogue, grid over batch.
    packed_bf16 = pack_params(conv_params, wl, bl)
    out = jax.block_until_ready(
        simple_style_encoder(x, packed_bf16, batch_block=1))
    assert out.shape == (B, style_dim)
    assert jnp.allclose(out, ref, atol=1e-1, rtol=1e-1), "bf16 mismatch vs reference"

    # f32 weights, single batch block (tight numerical check vs reference).
    packed_f32 = pack_params(conv_params, wl, bl, jnp.float32)
    out_f32 = jax.block_until_ready(simple_style_encoder(x, packed_f32))
    assert out_f32.shape == (B, style_dim)
    assert jnp.allclose(out_f32, ref, atol=1e-3, rtol=1e-3), "f32 mismatch vs reference"

    print("KERNEL_OK")
</pallas_src>

<mosaic_0001>
module attributes {stable_mosaic.version = 11 : i64} {
  func.func @_fused_style_encoder_kernel(%arg0: i32, %arg1: memref<1x16x80xf32, #tpu.memory_space<vmem>>, %arg2: memref<4x5x128x128xbf16, #tpu.memory_space<vmem>>, %arg3: memref<4x1x128xf32, #tpu.memory_space<vmem>>, %arg4: memref<4x1x128xf32, #tpu.memory_space<vmem>>, %arg5: memref<4x1x128xf32, #tpu.memory_space<vmem>>, %arg6: memref<128x48xf32, #tpu.memory_space<vmem>>, %arg7: memref<1x48xf32, #tpu.memory_space<vmem>>, %arg8: memref<1x1x48xf32, #tpu.memory_space<vmem>>, %arg9: memref<1x20x128xf32, #tpu.memory_space<vmem>>) attributes {dimension_semantics = [#tpu.dimension_semantics<parallel>], iteration_bounds = array<i64: 2>, scalar_prefetch = 0 : i64, scratch_operands = 1 : i64, tpu.core_type = #tpu.core_type<tc>, window_params = [{transform_indices = @transform_0, window_bounds = array<i64: 1, 16, 80>}, {pipeline_mode = #tpu.pipeline_mode<synchronous>, transform_indices = @transform_1, window_bounds = array<i64: 4, 5, 128, 128>}, {pipeline_mode = #tpu.pipeline_mode<synchronous>, transform_indices = @transform_2, window_bounds = array<i64: 4, 1, 128>}, {pipeline_mode = #tpu.pipeline_mode<synchronous>, transform_indices = @transform_3, window_bounds = array<i64: 4, 1, 128>}, {pipeline_mode = #tpu.pipeline_mode<synchronous>, transform_indices = @transform_4, window_bounds = array<i64: 4, 1, 128>}, {pipeline_mode = #tpu.pipeline_mode<synchronous>, transform_indices = @transform_5, window_bounds = array<i64: 128, 48>}, {pipeline_mode = #tpu.pipeline_mode<synchronous>, transform_indices = @transform_6, window_bounds = array<i64: 1, 48>}, {transform_indices = @transform_7, window_bounds = array<i64: 1, 1, 48>}]} {
    %cst = arith.constant 0.000000e+00 : f32
    %0 = vector.broadcast %cst : f32 to vector<1x2x128xf32>
    %c0 = arith.constant 0 : index
    %c0_0 = arith.constant 0 : index
    %c0_1 = arith.constant 0 : index
    %1 = vector.load %arg9[%c0, %c0_0, %c0_1] : memref<1x20x128xf32, #tpu.memory_space<vmem>>, vector<1x2x128xf32>
    tpu.vector_store %arg9[%c0, %c0_0, %c0_1], %0 {strides = array<i32>} : memref<1x20x128xf32, #tpu.memory_space<vmem>>, vector<1x2x128xf32>,
    %cst_2 = arith.constant 0.000000e+00 : f32
    %2 = vector.broadcast %cst_2 : f32 to vector<1x2x128xf32>
    %c0_3 = arith.constant 0 : index
    %c18 = arith.constant 18 : index
    %c0_4 = arith.constant 0 : index
    %3 = vector.load %arg9[%c0_3, %c18, %c0_4] : memref<1x20x128xf32, #tpu.memory_space<vmem>>, vector<1x2x128xf32>
    tpu.vector_store %arg9[%c0_3, %c18, %c0_4], %2 {strides = array<i32>} : memref<1x20x128xf32, #tpu.memory_space<vmem>>, vector<1x2x128xf32>,
    %c0_5 = arith.constant 0 : index
    %c0_6 = arith.constant 0 : index
    %c0_7 = arith.constant 0 : index
    %4 = vector.load %arg1[%c0_5, %c0_6, %c0_7] : memref<1x16x80xf32, #tpu.memory_space<vmem>>, vector<1x16x80xf32>
    %cst_8 = arith.constant 0.000000e+00 : f32
    %5 = vector.broadcast %cst_8 : f32 to vector<1x16x48xf32>
    %6 = tpu.concatenate %4, %5 in 2 : vector<1x16x80xf32>, vector<1x16x48xf32> -> vector<1x16x128xf32>
    %c0_9 = arith.constant 0 : index
    %c2 = arith.constant 2 : index
    %c0_10 = arith.constant 0 : index
    %7 = vector.load %arg9[%c0_9, %c2, %c0_10] : memref<1x20x128xf32, #tpu.memory_space<vmem>>, vector<1x16x128xf32>
    tpu.vector_store %arg9[%c0_9, %c2, %c0_10], %6 {strides = array<i32>} : memref<1x20x128xf32, #tpu.memory_space<vmem>>, vector<1x16x128xf32>,
    %c0_11 = arith.constant 0 : index
    %c0_12 = arith.constant 0 : index
    %c0_13 = arith.constant 0 : index
    %8 = vector.load %arg9[%c0_11, %c0_12, %c0_13] : memref<1x20x128xf32, #tpu.memory_space<vmem>>, vector<1x16x128xf32>
    %9 = vector.shape_cast %8 : vector<1x16x128xf32> to vector<16x128xf32>
    %10 = arith.truncf %9 : vector<16x128xf32> to vector<16x128xbf16>
    %c0_14 = arith.constant 0 : index
    %c0_15 = arith.constant 0 : index
    %c0_16 = arith.constant 0 : index
    %c0_17 = arith.constant 0 : index
    %11 = vector.load %arg2[%c0_14, %c0_15, %c0_16, %c0_17] : memref<4x5x128x128xbf16, #tpu.memory_space<vmem>>, vector<1x1x128x128xbf16>
    %12 = vector.shape_cast %11 : vector<1x1x128x128xbf16> to vector<128x128xbf16>
    %cst_18 = arith.constant dense<0.000000e+00> : vector<16x128xf32>
    %13 = tpu.matmul %10, %12, %cst_18 {dimension_numbers = #tpu.dot_dimension_numbers<[1], [0], [0], [1], [0, 0, 1, 1], [], []>} : vector<16x128xbf16>, vector<128x128xbf16>, vector<16x128xf32> -> vector<16x128xf32>
    %c0_19 = arith.constant 0 : index
    %c1 = arith.constant 1 : index
    %c0_20 = arith.constant 0 : index
    %14 = vector.load %arg9[%c0_19, %c1, %c0_20] : memref<1x20x128xf32, #tpu.memory_space<vmem>>, vector<1x16x128xf32>
    %15 = vector.shape_cast %14 : vector<1x16x128xf32> to vector<16x128xf32>
    %16 = arith.truncf %15 : vector<16x128xf32> to vector<16x128xbf16>
    %c0_21 = arith.constant 0 : index
    %c1_22 = arith.constant 1 : index
    %c0_23 = arith.constant 0 : index
    %c0_24 = arith.constant 0 : index
    %17 = vector.load %arg2[%c0_21, %c1_22, %c0_23, %c0_24] : memref<4x5x128x128xbf16, #tpu.memory_space<vmem>>, vector<1x1x128x128xbf16>
    %18 = vector.shape_cast %17 : vector<1x1x128x128xbf16> to vector<128x128xbf16>
    %cst_25 = arith.constant dense<0.000000e+00> : vector<16x128xf32>
    %19 = tpu.matmul %16, %18, %cst_25 {dimension_numbers = #tpu.dot_dimension_numbers<[1], [0], [0], [1], [0, 0, 1, 1], [], []>} : vector<16x128xbf16>, vector<128x128xbf16>, vector<16x128xf32> -> vector<16x128xf32>
    %20 = arith.addf %13, %19 : vector<16x128xf32>
    %c0_26 = arith.constant 0 : index
    %c2_27 = arith.constant 2 : index
    %c0_28 = arith.constant 0 : index
    %21 = vector.load %arg9[%c0_26, %c2_27, %c0_28] : memref<1x20x128xf32, #tpu.memory_space<vmem>>, vector<1x16x128xf32>
    %22 = vector.shape_cast %21 : vector<1x16x128xf32> to vector<16x128xf32>
    %23 = arith.truncf %22 : vector<16x128xf32> to vector<16x128xbf16>
    %c0_29 = arith.constant 0 : index
    %c2_30 = arith.constant 2 : index
    %c0_31 = arith.constant 0 : index
    %c0_32 = arith.constant 0 : index
    %24 = vector.load %arg2[%c0_29, %c2_30, %c0_31, %c0_32] : memref<4x5x128x128xbf16, #tpu.memory_space<vmem>>, vector<1x1x128x128xbf16>
    %25 = vector.shape_cast %24 : vector<1x1x128x128xbf16> to vector<128x128xbf16>
    %cst_33 = arith.constant dense<0.000000e+00> : vector<16x128xf32>
    %26 = tpu.matmul %23, %25, %cst_33 {dimension_numbers = #tpu.dot_dimension_numbers<[1], [0], [0], [1], [0, 0, 1, 1], [], []>} : vector<16x128xbf16>, vector<128x128xbf16>, vector<16x128xf32> -> vector<16x128xf32>
    %27 = arith.addf %20, %26 : vector<16x128xf32>
    %c0_34 = arith.constant 0 : index
    %c3 = arith.constant 3 : index
    %c0_35 = arith.constant 0 : index
    %28 = vector.load %arg9[%c0_34, %c3, %c0_35] : memref<1x20x128xf32, #tpu.memory_space<vmem>>, vector<1x16x128xf32>
    %29 = vector.shape_cast %28 : vector<1x16x128xf32> to vector<16x128xf32>
    %30 = arith.truncf %29 : vector<16x128xf32> to vector<16x128xbf16>
    %c0_36 = arith.constant 0 : index
    %c3_37 = arith.constant 3 : index
    %c0_38 = arith.constant 0 : index
    %c0_39 = arith.constant 0 : index
    %31 = vector.load %arg2[%c0_36, %c3_37, %c0_38, %c0_39] : memref<4x5x128x128xbf16, #tpu.memory_space<vmem>>, vector<1x1x128x128xbf16>
    %32 = vector.shape_cast %31 : vector<1x1x128x128xbf16> to vector<128x128xbf16>
    %cst_40 = arith.constant dense<0.000000e+00> : vector<16x128xf32>
    %33 = tpu.matmul %30, %32, %cst_40 {dimension_numbers = #tpu.dot_dimension_numbers<[1], [0], [0], [1], [0, 0, 1, 1], [], []>} : vector<16x128xbf16>, vector<128x128xbf16>, vector<16x128xf32> -> vector<16x128xf32>
    %34 = arith.addf %27, %33 : vector<16x128xf32>
    %c0_41 = arith.constant 0 : index
    %c4 = arith.constant 4 : index
    %c0_42 = arith.constant 0 : index
    %35 = vector.load %arg9[%c0_41, %c4, %c0_42] : memref<1x20x128xf32, #tpu.memory_space<vmem>>, vector<1x16x128xf32>
    %36 = vector.shape_cast %35 : vector<1x16x128xf32> to vector<16x128xf32>
    %37 = arith.truncf %36 : vector<16x128xf32> to vector<16x128xbf16>
    %c0_43 = arith.constant 0 : index
    %c4_44 = arith.constant 4 : index
    %c0_45 = arith.constant 0 : index
    %c0_46 = arith.constant 0 : index
    %38 = vector.load %arg2[%c0_43, %c4_44, %c0_45, %c0_46] : memref<4x5x128x128xbf16, #tpu.memory_space<vmem>>, vector<1x1x128x128xbf16>
    %39 = vector.shape_cast %38 : vector<1x1x128x128xbf16> to vector<128x128xbf16>
    %cst_47 = arith.constant dense<0.000000e+00> : vector<16x128xf32>
    %40 = tpu.matmul %37, %39, %cst_47 {dimension_numbers = #tpu.dot_dimension_numbers<[1], [0], [0], [1], [0, 0, 1, 1], [], []>} : vector<16x128xbf16>, vector<128x128xbf16>, vector<16x128xf32> -> vector<16x128xf32>
    %41 = arith.addf %34, %40 : vector<16x128xf32>
    %c0_48 = arith.constant 0 : index
    %c0_49 = arith.constant 0 : index
    %c0_50 = arith.constant 0 : index
    %42 = vector.load %arg3[%c0_48, %c0_49, %c0_50] : memref<4x1x128xf32, #tpu.memory_space<vmem>>, vector<1x1x128xf32>
    %43 = vector.shape_cast %42 : vector<1x1x128xf32> to vector<1x128xf32>
    %44 = vector.broadcast %43 : vector<1x128xf32> to vector<16x128xf32>
    %45 = arith.addf %41, %44 : vector<16x128xf32>
    %cst_51 = arith.constant 0.000000e+00 : f32
    %46 = vector.broadcast %cst_51 : f32 to vector<16x128xf32>
    %47 = arith.maximumf %45, %46 : vector<16x128xf32>
    %c0_52 = arith.constant 0 : index
    %c0_53 = arith.constant 0 : index
    %c0_54 = arith.constant 0 : index
    %48 = vector.load %arg4[%c0_52, %c0_53, %c0_54] : memref<4x1x128xf32, #tpu.memory_space<vmem>>, vector<1x1x128xf32>
    %49 = vector.shape_cast %48 : vector<1x1x128xf32> to vector<1x128xf32>
    %50 = vector.broadcast %49 : vector<1x128xf32> to vector<16x128xf32>
    %51 = arith.mulf %47, %50 : vector<16x128xf32>
    %c0_55 = arith.constant 0 : index
    %c0_56 = arith.constant 0 : index
    %c0_57 = arith.constant 0 : index
    %52 = vector.load %arg5[%c0_55, %c0_56, %c0_57] : memref<4x1x128xf32, #tpu.memory_space<vmem>>, vector<1x1x128xf32>
    %53 = vector.shape_cast %52 : vector<1x1x128xf32> to vector<1x128xf32>
    %54 = vector.broadcast %53 : vector<1x128xf32> to vector<16x128xf32>
    %55 = arith.addf %51, %54 : vector<16x128xf32>
    %56 = vector.shape_cast %55 : vector<16x128xf32> to vector<1x16x128xf32>
    %c0_58 = arith.constant 0 : index
    %c2_59 = arith.constant 2 : index
    %c0_60 = arith.constant 0 : index
    %57 = vector.load %arg9[%c0_58, %c2_59, %c0_60] : memref<1x20x128xf32, #tpu.memory_space<vmem>>, vector<1x16x128xf32>
    tpu.vector_store %arg9[%c0_58, %c2_59, %c0_60], %56 {strides = array<i32>} : memref<1x20x128xf32, #tpu.memory_space<vmem>>, vector<1x16x128xf32>,
    %c0_61 = arith.constant 0 : index
    %c0_62 = arith.constant 0 : index
    %c0_63 = arith.constant 0 : index
    %58 = vector.load %arg9[%c0_61, %c0_62, %c0_63] : memref<1x20x128xf32, #tpu.memory_space<vmem>>, vector<1x16x128xf32>
    %59 = vector.shape_cast %58 : vector<1x16x128xf32> to vector<16x128xf32>
    %60 = arith.truncf %59 : vector<16x128xf32> to vector<16x128xbf16>
    %c1_64 = arith.constant 1 : index
    %c0_65 = arith.constant 0 : index
    %c0_66 = arith.constant 0 : index
    %c0_67 = arith.constant 0 : index
    %61 = vector.load %arg2[%c1_64, %c0_65, %c0_66, %c0_67] : memref<4x5x128x128xbf16, #tpu.memory_space<vmem>>, vector<1x1x128x128xbf16>
    %62 = vector.shape_cast %61 : vector<1x1x128x128xbf16> to vector<128x128xbf16>
    %cst_68 = arith.constant dense<0.000000e+00> : vector<16x128xf32>
    %63 = tpu.matmul %60, %62, %cst_68 {dimension_numbers = #tpu.dot_dimension_numbers<[1], [0], [0], [1], [0, 0, 1, 1], [], []>} : vector<16x128xbf16>, vector<128x128xbf16>, vector<16x128xf32> -> vector<16x128xf32>
    %c0_69 = arith.constant 0 : index
    %c1_70 = arith.constant 1 : index
    %c0_71 = arith.constant 0 : index
    %64 = vector.load %arg9[%c0_69, %c1_70, %c0_71] : memref<1x20x128xf32, #tpu.memory_space<vmem>>, vector<1x16x128xf32>
    %65 = vector.shape_cast %64 : vector<1x16x128xf32> to vector<16x128xf32>
    %66 = arith.truncf %65 : vector<16x128xf32> to vector<16x128xbf16>
    %c1_72 = arith.constant 1 : index
    %c1_73 = arith.constant 1 : index
    %c0_74 = arith.constant 0 : index
    %c0_75 = arith.constant 0 : index
    %67 = vector.load %arg2[%c1_72, %c1_73, %c0_74, %c0_75] : memref<4x5x128x128xbf16, #tpu.memory_space<vmem>>, vector<1x1x128x128xbf16>
    %68 = vector.shape_cast %67 : vector<1x1x128x128xbf16> to vector<128x128xbf16>
    %cst_76 = arith.constant dense<0.000000e+00> : vector<16x128xf32>
    %69 = tpu.matmul %66, %68, %cst_76 {dimension_numbers = #tpu.dot_dimension_numbers<[1], [0], [0], [1], [0, 0, 1, 1], [], []>} : vector<16x128xbf16>, vector<128x128xbf16>, vector<16x128xf32> -> vector<16x128xf32>
    %70 = arith.addf %63, %69 : vector<16x128xf32>
    %c0_77 = arith.constant 0 : index
    %c2_78 = arith.constant 2 : index
    %c0_79 = arith.constant 0 : index
    %71 = vector.load %arg9[%c0_77, %c2_78, %c0_79] : memref<1x20x128xf32, #tpu.memory_space<vmem>>, vector<1x16x128xf32>
    %72 = vector.shape_cast %71 : vector<1x16x128xf32> to vector<16x128xf32>
    %73 = arith.truncf %72 : vector<16x128xf32> to vector<16x128xbf16>
    %c1_80 = arith.constant 1 : index
    %c2_81 = arith.constant 2 : index
    %c0_82 = arith.constant 0 : index
    %c0_83 = arith.constant 0 : index
    %74 = vector.load %arg2[%c1_80, %c2_81, %c0_82, %c0_83] : memref<4x5x128x128xbf16, #tpu.memory_space<vmem>>, vector<1x1x128x128xbf16>
    %75 = vector.shape_cast %74 : vector<1x1x128x128xbf16> to vector<128x128xbf16>
    %cst_84 = arith.constant dense<0.000000e+00> : vector<16x128xf32>
    %76 = tpu.matmul %73, %75, %cst_84 {dimension_numbers = #tpu.dot_dimension_numbers<[1], [0], [0], [1], [0, 0, 1, 1], [], []>} : vector<16x128xbf16>, vector<128x128xbf16>, vector<16x128xf32> -> vector<16x128xf32>
    %77 = arith.addf %70, %76 : vector<16x128xf32>
    %c0_85 = arith.constant 0 : index
    %c3_86 = arith.constant 3 : index
    %c0_87 = arith.constant 0 : index
    %78 = vector.load %arg9[%c0_85, %c3_86, %c0_87] : memref<1x20x128xf32, #tpu.memory_space<vmem>>, vector<1x16x128xf32>
    %79 = vector.shape_cast %78 : vector<1x16x128xf32> to vector<16x128xf32>
    %80 = arith.truncf %79 : vector<16x128xf32> to vector<16x128xbf16>
    %c1_88 = arith.constant 1 : index
    %c3_89 = arith.constant 3 : index
    %c0_90 = arith.constant 0 : index
    %c0_91 = arith.constant 0 : index
    %81 = vector.load %arg2[%c1_88, %c3_89, %c0_90, %c0_91] : memref<4x5x128x128xbf16, #tpu.memory_space<vmem>>, vector<1x1x128x128xbf16>
    %82 = vector.shape_cast %81 : vector<1x1x128x128xbf16> to vector<128x128xbf16>
    %cst_92 = arith.constant dense<0.000000e+00> : vector<16x128xf32>
    %83 = tpu.matmul %80, %82, %cst_92 {dimension_numbers = #tpu.dot_dimension_numbers<[1], [0], [0], [1], [0, 0, 1, 1], [], []>} : vector<16x128xbf16>, vector<128x128xbf16>, vector<16x128xf32> -> vector<16x128xf32>
    %84 = arith.addf %77, %83 : vector<16x128xf32>
    %c0_93 = arith.constant 0 : index
    %c4_94 = arith.constant 4 : index
    %c0_95 = arith.constant 0 : index
    %85 = vector.load %arg9[%c0_93, %c4_94, %c0_95] : memref<1x20x128xf32, #tpu.memory_space<vmem>>, vector<1x16x128xf32>
    %86 = vector.shape_cast %85 : vector<1x16x128xf32> to vector<16x128xf32>
    %87 = arith.truncf %86 : vector<16x128xf32> to vector<16x128xbf16>
    %c1_96 = arith.constant 1 : index
    %c4_97 = arith.constant 4 : index
    %c0_98 = arith.constant 0 : index
    %c0_99 = arith.constant 0 : index
    %88 = vector.load %arg2[%c1_96, %c4_97, %c0_98, %c0_99] : memref<4x5x128x128xbf16, #tpu.memory_space<vmem>>, vector<1x1x128x128xbf16>
    %89 = vector.shape_cast %88 : vector<1x1x128x128xbf16> to vector<128x128xbf16>
    %cst_100 = arith.constant dense<0.000000e+00> : vector<16x128xf32>
    %90 = tpu.matmul %87, %89, %cst_100 {dimension_numbers = #tpu.dot_dimension_numbers<[1], [0], [0], [1], [0, 0, 1, 1], [], []>} : vector<16x128xbf16>, vector<128x128xbf16>, vector<16x128xf32> -> vector<16x128xf32>
    %91 = arith.addf %84, %90 : vector<16x128xf32>
    %c1_101 = arith.constant 1 : index
    %c0_102 = arith.constant 0 : index
    %c0_103 = arith.constant 0 : index
    %92 = vector.load %arg3[%c1_101, %c0_102, %c0_103] : memref<4x1x128xf32, #tpu.memory_space<vmem>>, vector<1x1x128xf32>
    %93 = vector.shape_cast %92 : vector<1x1x128xf32> to vector<1x128xf32>
    %94 = vector.broadcast %93 : vector<1x128xf32> to vector<16x128xf32>
    %95 = arith.addf %91, %94 : vector<16x128xf32>
    %cst_104 = arith.constant 0.000000e+00 : f32
    %96 = vector.broadcast %cst_104 : f32 to vector<16x128xf32>
    %97 = arith.maximumf %95, %96 : vector<16x128xf32>
    %c1_105 = arith.constant 1 : index
    %c0_106 = arith.constant 0 : index
    %c0_107 = arith.constant 0 : index
    %98 = vector.load %arg4[%c1_105, %c0_106, %c0_107] : memref<4x1x128xf32, #tpu.memory_space<vmem>>, vector<1x1x128xf32>
    %99 = vector.shape_cast %98 : vector<1x1x128xf32> to vector<1x128xf32>
    %100 = vector.broadcast %99 : vector<1x128xf32> to vector<16x128xf32>
    %101 = arith.mulf %97, %100 : vector<16x128xf32>
    %c1_108 = arith.constant 1 : index
    %c0_109 = arith.constant 0 : index
    %c0_110 = arith.constant 0 : index
    %102 = vector.load %arg5[%c1_108, %c0_109, %c0_110] : memref<4x1x128xf32, #tpu.memory_space<vmem>>, vector<1x1x128xf32>
    %103 = vector.shape_cast %102 : vector<1x1x128xf32> to vector<1x128xf32>
    %104 = vector.broadcast %103 : vector<1x128xf32> to vector<16x128xf32>
    %105 = arith.addf %101, %104 : vector<16x128xf32>
    %106 = vector.shape_cast %105 : vector<16x128xf32> to vector<1x16x128xf32>
    %c0_111 = arith.constant 0 : index
    %c2_112 = arith.constant 2 : index
    %c0_113 = arith.constant 0 : index
    %107 = vector.load %arg9[%c0_111, %c2_112, %c0_113] : memref<1x20x128xf32, #tpu.memory_space<vmem>>, vector<1x16x128xf32>
    tpu.vector_store %arg9[%c0_111, %c2_112, %c0_113], %106 {strides = array<i32>} : memref<1x20x128xf32, #tpu.memory_space<vmem>>, vector<1x16x128xf32>,
    %c0_114 = arith.constant 0 : index
    %c0_115 = arith.constant 0 : index
    %c0_116 = arith.constant 0 : index
    %108 = vector.load %arg9[%c0_114, %c0_115, %c0_116] : memref<1x20x128xf32, #tpu.memory_space<vmem>>, vector<1x16x128xf32>
    %109 = vector.shape_cast %108 : vector<1x16x128xf32> to vector<16x128xf32>
    %110 = arith.truncf %109 : vector<16x128xf32> to vector<16x128xbf16>
    %c2_117 = arith.constant 2 : index
    %c0_118 = arith.constant 0 : index
    %c0_119 = arith.constant 0 : index
    %c0_120 = arith.constant 0 : index
    %111 = vector.load %arg2[%c2_117, %c0_118, %c0_119, %c0_120] : memref<4x5x128x128xbf16, #tpu.memory_space<vmem>>, vector<1x1x128x128xbf16>
    %112 = vector.shape_cast %111 : vector<1x1x128x128xbf16> to vector<128x128xbf16>
    %cst_121 = arith.constant dense<0.000000e+00> : vector<16x128xf32>
    %113 = tpu.matmul %110, %112, %cst_121 {dimension_numbers = #tpu.dot_dimension_numbers<[1], [0], [0], [1], [0, 0, 1, 1], [], []>} : vector<16x128xbf16>, vector<128x128xbf16>, vector<16x128xf32> -> vector<16x128xf32>
    %c0_122 = arith.constant 0 : index
    %c1_123 = arith.constant 1 : index
    %c0_124 = arith.constant 0 : index
    %114 = vector.load %arg9[%c0_122, %c1_123, %c0_124] : memref<1x20x128xf32, #tpu.memory_space<vmem>>, vector<1x16x128xf32>
    %115 = vector.shape_cast %114 : vector<1x16x128xf32> to vector<16x128xf32>
    %116 = arith.truncf %115 : vector<16x128xf32> to vector<16x128xbf16>
    %c2_125 = arith.constant 2 : index
    %c1_126 = arith.constant 1 : index
    %c0_127 = arith.constant 0 : index
    %c0_128 = arith.constant 0 : index
    %117 = vector.load %arg2[%c2_125, %c1_126, %c0_127, %c0_128] : memref<4x5x128x128xbf16, #tpu.memory_space<vmem>>, vector<1x1x128x128xbf16>
    %118 = vector.shape_cast %117 : vector<1x1x128x128xbf16> to vector<128x128xbf16>
    %cst_129 = arith.constant dense<0.000000e+00> : vector<16x128xf32>
    %119 = tpu.matmul %116, %118, %cst_129 {dimension_numbers = #tpu.dot_dimension_numbers<[1], [0], [0], [1], [0, 0, 1, 1], [], []>} : vector<16x128xbf16>, vector<128x128xbf16>, vector<16x128xf32> -> vector<16x128xf32>
    %120 = arith.addf %113, %119 : vector<16x128xf32>
    %c0_130 = arith.constant 0 : index
    %c2_131 = arith.constant 2 : index
    %c0_132 = arith.constant 0 : index
    %121 = vector.load %arg9[%c0_130, %c2_131, %c0_132] : memref<1x20x128xf32, #tpu.memory_space<vmem>>, vector<1x16x128xf32>
    %122 = vector.shape_cast %121 : vector<1x16x128xf32> to vector<16x128xf32>
    %123 = arith.truncf %122 : vector<16x128xf32> to vector<16x128xbf16>
    %c2_133 = arith.constant 2 : index
    %c2_134 = arith.constant 2 : index
    %c0_135 = arith.constant 0 : index
    %c0_136 = arith.constant 0 : index
    %124 = vector.load %arg2[%c2_133, %c2_134, %c0_135, %c0_136] : memref<4x5x128x128xbf16, #tpu.memory_space<vmem>>, vector<1x1x128x128xbf16>
    %125 = vector.shape_cast %124 : vector<1x1x128x128xbf16> to vector<128x128xbf16>
    %cst_137 = arith.constant dense<0.000000e+00> : vector<16x128xf32>
    %126 = tpu.matmul %123, %125, %cst_137 {dimension_numbers = #tpu.dot_dimension_numbers<[1], [0], [0], [1], [0, 0, 1, 1], [], []>} : vector<16x128xbf16>, vector<128x128xbf16>, vector<16x128xf32> -> vector<16x128xf32>
    %127 = arith.addf %120, %126 : vector<16x128xf32>
    %c0_138 = arith.constant 0 : index
    %c3_139 = arith.constant 3 : index
    %c0_140 = arith.constant 0 : index
    %128 = vector.load %arg9[%c0_138, %c3_139, %c0_140] : memref<1x20x128xf32, #tpu.memory_space<vmem>>, vector<1x16x128xf32>
    %129 = vector.shape_cast %128 : vector<1x16x128xf32> to vector<16x128xf32>
    %130 = arith.truncf %129 : vector<16x128xf32> to vector<16x128xbf16>
    %c2_141 = arith.constant 2 : index
    %c3_142 = arith.constant 3 : index
    %c0_143 = arith.constant 0 : index
    %c0_144 = arith.constant 0 : index
    %131 = vector.load %arg2[%c2_141, %c3_142, %c0_143, %c0_144] : memref<4x5x128x128xbf16, #tpu.memory_space<vmem>>, vector<1x1x128x128xbf16>
    %132 = vector.shape_cast %131 : vector<1x1x128x128xbf16> to vector<128x128xbf16>
    %cst_145 = arith.constant dense<0.000000e+00> : vector<16x128xf32>
    %133 = tpu.matmul %130, %132, %cst_145 {dimension_numbers = #tpu.dot_dimension_numbers<[1], [0], [0], [1], [0, 0, 1, 1], [], []>} : vector<16x128xbf16>, vector<128x128xbf16>, vector<16x128xf32> -> vector<16x128xf32>
    %134 = arith.addf %127, %133 : vector<16x128xf32>
    %c0_146 = arith.constant 0 : index
    %c4_147 = arith.constant 4 : index
    %c0_148 = arith.constant 0 : index
    %135 = vector.load %arg9[%c0_146, %c4_147, %c0_148] : memref<1x20x128xf32, #tpu.memory_space<vmem>>, vector<1x16x128xf32>
    %136 = vector.shape_cast %135 : vector<1x16x128xf32> to vector<16x128xf32>
    %137 = arith.truncf %136 : vector<16x128xf32> to vector<16x128xbf16>
    %c2_149 = arith.constant 2 : index
    %c4_150 = arith.constant 4 : index
    %c0_151 = arith.constant 0 : index
    %c0_152 = arith.constant 0 : index
    %138 = vector.load %arg2[%c2_149, %c4_150, %c0_151, %c0_152] : memref<4x5x128x128xbf16, #tpu.memory_space<vmem>>, vector<1x1x128x128xbf16>
    %139 = vector.shape_cast %138 : vector<1x1x128x128xbf16> to vector<128x128xbf16>
    %cst_153 = arith.constant dense<0.000000e+00> : vector<16x128xf32>
    %140 = tpu.matmul %137, %139, %cst_153 {dimension_numbers = #tpu.dot_dimension_numbers<[1], [0], [0], [1], [0, 0, 1, 1], [], []>} : vector<16x128xbf16>, vector<128x128xbf16>, vector<16x128xf32> -> vector<16x128xf32>
    %141 = arith.addf %134, %140 : vector<16x128xf32>
    %c2_154 = arith.constant 2 : index
    %c0_155 = arith.constant 0 : index
    %c0_156 = arith.constant 0 : index
    %142 = vector.load %arg3[%c2_154, %c0_155, %c0_156] : memref<4x1x128xf32, #tpu.memory_space<vmem>>, vector<1x1x128xf32>
    %143 = vector.shape_cast %142 : vector<1x1x128xf32> to vector<1x128xf32>
    %144 = vector.broadcast %143 : vector<1x128xf32> to vector<16x128xf32>
    %145 = arith.addf %141, %144 : vector<16x128xf32>
    %cst_157 = arith.constant 0.000000e+00 : f32
    %146 = vector.broadcast %cst_157 : f32 to vector<16x128xf32>
    %147 = arith.maximumf %145, %146 : vector<16x128xf32>
    %c2_158 = arith.constant 2 : index
    %c0_159 = arith.constant 0 : index
    %c0_160 = arith.constant 0 : index
    %148 = vector.load %arg4[%c2_158, %c0_159, %c0_160] : memref<4x1x128xf32, #tpu.memory_space<vmem>>, vector<1x1x128xf32>
    %149 = vector.shape_cast %148 : vector<1x1x128xf32> to vector<1x128xf32>
    %150 = vector.broadcast %149 : vector<1x128xf32> to vector<16x128xf32>
    %151 = arith.mulf %147, %150 : vector<16x128xf32>
    %c2_161 = arith.constant 2 : index
    %c0_162 = arith.constant 0 : index
    %c0_163 = arith.constant 0 : index
    %152 = vector.load %arg5[%c2_161, %c0_162, %c0_163] : memref<4x1x128xf32, #tpu.memory_space<vmem>>, vector<1x1x128xf32>
    %153 = vector.shape_cast %152 : vector<1x1x128xf32> to vector<1x128xf32>
    %154 = vector.broadcast %153 : vector<1x128xf32> to vector<16x128xf32>
    %155 = arith.addf %151, %154 : vector<16x128xf32>
    %156 = vector.shape_cast %155 : vector<16x128xf32> to vector<1x16x128xf32>
    %c0_164 = arith.constant 0 : index
    %c2_165 = arith.constant 2 : index
    %c0_166 = arith.constant 0 : index
    %157 = vector.load %arg9[%c0_164, %c2_165, %c0_166] : memref<1x20x128xf32, #tpu.memory_space<vmem>>, vector<1x16x128xf32>
    tpu.vector_store %arg9[%c0_164, %c2_165, %c0_166], %156 {strides = array<i32>} : memref<1x20x128xf32, #tpu.memory_space<vmem>>, vector<1x16x128xf32>,
    %c0_167 = arith.constant 0 : index
    %c0_168 = arith.constant 0 : index
    %c0_169 = arith.constant 0 : index
    %158 = vector.load %arg9[%c0_167, %c0_168, %c0_169] : memref<1x20x128xf32, #tpu.memory_space<vmem>>, vector<1x16x128xf32>
    %159 = vector.shape_cast %158 : vector<1x16x128xf32> to vector<16x128xf32>
    %160 = arith.truncf %159 : vector<16x128xf32> to vector<16x128xbf16>
    %c3_170 = arith.constant 3 : index
    %c0_171 = arith.constant 0 : index
    %c0_172 = arith.constant 0 : index
    %c0_173 = arith.constant 0 : index
    %161 = vector.load %arg2[%c3_170, %c0_171, %c0_172, %c0_173] : memref<4x5x128x128xbf16, #tpu.memory_space<vmem>>, vector<1x1x128x128xbf16>
    %162 = vector.shape_cast %161 : vector<1x1x128x128xbf16> to vector<128x128xbf16>
    %cst_174 = arith.constant dense<0.000000e+00> : vector<16x128xf32>
    %163 = tpu.matmul %160, %162, %cst_174 {dimension_numbers = #tpu.dot_dimension_numbers<[1], [0], [0], [1], [0, 0, 1, 1], [], []>} : vector<16x128xbf16>, vector<128x128xbf16>, vector<16x128xf32> -> vector<16x128xf32>
    %c0_175 = arith.constant 0 : index
    %c1_176 = arith.constant 1 : index
    %c0_177 = arith.constant 0 : index
    %164 = vector.load %arg9[%c0_175, %c1_176, %c0_177] : memref<1x20x128xf32, #tpu.memory_space<vmem>>, vector<1x16x128xf32>
    %165 = vector.shape_cast %164 : vector<1x16x128xf32> to vector<16x128xf32>
    %166 = arith.truncf %165 : vector<16x128xf32> to vector<16x128xbf16>
    %c3_178 = arith.constant 3 : index
    %c1_179 = arith.constant 1 : index
    %c0_180 = arith.constant 0 : index
    %c0_181 = arith.constant 0 : index
    %167 = vector.load %arg2[%c3_178, %c1_179, %c0_180, %c0_181] : memref<4x5x128x128xbf16, #tpu.memory_space<vmem>>, vector<1x1x128x128xbf16>
    %168 = vector.shape_cast %167 : vector<1x1x128x128xbf16> to vector<128x128xbf16>
    %cst_182 = arith.constant dense<0.000000e+00> : vector<16x128xf32>
    %169 = tpu.matmul %166, %168, %cst_182 {dimension_numbers = #tpu.dot_dimension_numbers<[1], [0], [0], [1], [0, 0, 1, 1], [], []>} : vector<16x128xbf16>, vector<128x128xbf16>, vector<16x128xf32> -> vector<16x128xf32>
    %170 = arith.addf %163, %169 : vector<16x128xf32>
    %c0_183 = arith.constant 0 : index
    %c2_184 = arith.constant 2 : index
    %c0_185 = arith.constant 0 : index
    %171 = vector.load %arg9[%c0_183, %c2_184, %c0_185] : memref<1x20x128xf32, #tpu.memory_space<vmem>>, vector<1x16x128xf32>
    %172 = vector.shape_cast %171 : vector<1x16x128xf32> to vector<16x128xf32>
    %173 = arith.truncf %172 : vector<16x128xf32> to vector<16x128xbf16>
    %c3_186 = arith.constant 3 : index
    %c2_187 = arith.constant 2 : index
    %c0_188 = arith.constant 0 : index
    %c0_189 = arith.constant 0 : index
    %174 = vector.load %arg2[%c3_186, %c2_187, %c0_188, %c0_189] : memref<4x5x128x128xbf16, #tpu.memory_space<vmem>>, vector<1x1x128x128xbf16>
    %175 = vector.shape_cast %174 : vector<1x1x128x128xbf16> to vector<128x128xbf16>
    %cst_190 = arith.constant dense<0.000000e+00> : vector<16x128xf32>
    %176 = tpu.matmul %173, %175, %cst_190 {dimension_numbers = #tpu.dot_dimension_numbers<[1], [0], [0], [1], [0, 0, 1, 1], [], []>} : vector<16x128xbf16>, vector<128x128xbf16>, vector<16x128xf32> -> vector<16x128xf32>
    %177 = arith.addf %170, %176 : vector<16x128xf32>
    %c0_191 = arith.constant 0 : index
    %c3_192 = arith.constant 3 : index
    %c0_193 = arith.constant 0 : index
    %178 = vector.load %arg9[%c0_191, %c3_192, %c0_193] : memref<1x20x128xf32, #tpu.memory_space<vmem>>, vector<1x16x128xf32>
    %179 = vector.shape_cast %178 : vector<1x16x128xf32> to vector<16x128xf32>
    %180 = arith.truncf %179 : vector<16x128xf32> to vector<16x128xbf16>
    %c3_194 = arith.constant 3 : index
    %c3_195 = arith.constant 3 : index
    %c0_196 = arith.constant 0 : index
    %c0_197 = arith.constant 0 : index
    %181 = vector.load %arg2[%c3_194, %c3_195, %c0_196, %c0_197] : memref<4x5x128x128xbf16, #tpu.memory_space<vmem>>, vector<1x1x128x128xbf16>
    %182 = vector.shape_cast %181 : vector<1x1x128x128xbf16> to vector<128x128xbf16>
    %cst_198 = arith.constant dense<0.000000e+00> : vector<16x128xf32>
    %183 = tpu.matmul %180, %182, %cst_198 {dimension_numbers = #tpu.dot_dimension_numbers<[1], [0], [0], [1], [0, 0, 1, 1], [], []>} : vector<16x128xbf16>, vector<128x128xbf16>, vector<16x128xf32> -> vector<16x128xf32>
    %184 = arith.addf %177, %183 : vector<16x128xf32>
    %c0_199 = arith.constant 0 : index
    %c4_200 = arith.constant 4 : index
    %c0_201 = arith.constant 0 : index
    %185 = vector.load %arg9[%c0_199, %c4_200, %c0_201] : memref<1x20x128xf32, #tpu.memory_space<vmem>>, vector<1x16x128xf32>
    %186 = vector.shape_cast %185 : vector<1x16x128xf32> to vector<16x128xf32>
    %187 = arith.truncf %186 : vector<16x128xf32> to vector<16x128xbf16>
    %c3_202 = arith.constant 3 : index
    %c4_203 = arith.constant 4 : index
    %c0_204 = arith.constant 0 : index
    %c0_205 = arith.constant 0 : index
    %188 = vector.load %arg2[%c3_202, %c4_203, %c0_204, %c0_205] : memref<4x5x128x128xbf16, #tpu.memory_space<vmem>>, vector<1x1x128x128xbf16>
    %189 = vector.shape_cast %188 : vector<1x1x128x128xbf16> to vector<128x128xbf16>
    %cst_206 = arith.constant dense<0.000000e+00> : vector<16x128xf32>
    %190 = tpu.matmul %187, %189, %cst_206 {dimension_numbers = #tpu.dot_dimension_numbers<[1], [0], [0], [1], [0, 0, 1, 1], [], []>} : vector<16x128xbf16>, vector<128x128xbf16>, vector<16x128xf32> -> vector<16x128xf32>
    %191 = arith.addf %184, %190 : vector<16x128xf32>
    %c3_207 = arith.constant 3 : index
    %c0_208 = arith.constant 0 : index
    %c0_209 = arith.constant 0 : index
    %192 = vector.load %arg3[%c3_207, %c0_208, %c0_209] : memref<4x1x128xf32, #tpu.memory_space<vmem>>, vector<1x1x128xf32>
    %193 = vector.shape_cast %192 : vector<1x1x128xf32> to vector<1x128xf32>
    %194 = vector.broadcast %193 : vector<1x128xf32> to vector<16x128xf32>
    %195 = arith.addf %191, %194 : vector<16x128xf32>
    %cst_210 = arith.constant 0.000000e+00 : f32
    %196 = vector.broadcast %cst_210 : f32 to vector<16x128xf32>
    %197 = arith.maximumf %195, %196 : vector<16x128xf32>
    %c3_211 = arith.constant 3 : index
    %c0_212 = arith.constant 0 : index
    %c0_213 = arith.constant 0 : index
    %198 = vector.load %arg4[%c3_211, %c0_212, %c0_213] : memref<4x1x128xf32, #tpu.memory_space<vmem>>, vector<1x1x128xf32>
    %199 = vector.shape_cast %198 : vector<1x1x128xf32> to vector<1x128xf32>
    %200 = vector.broadcast %199 : vector<1x128xf32> to vector<16x128xf32>
    %201 = arith.mulf %197, %200 : vector<16x128xf32>
    %c3_214 = arith.constant 3 : index
    %c0_215 = arith.constant 0 : index
    %c0_216 = arith.constant 0 : index
    %202 = vector.load %arg5[%c3_214, %c0_215, %c0_216] : memref<4x1x128xf32, #tpu.memory_space<vmem>>, vector<1x1x128xf32>
    %203 = vector.shape_cast %202 : vector<1x1x128xf32> to vector<1x128xf32>
    %204 = vector.broadcast %203 : vector<1x128xf32> to vector<16x128xf32>
    %205 = arith.addf %201, %204 : vector<16x128xf32>
    %206 = vector.shape_cast %205 : vector<16x128xf32> to vector<1x16x128xf32>
    %cst_217 = arith.constant dense<0.000000e+00> : vector<1x128xf32>
    %207 = vector.multi_reduction <add>, %206, %cst_217 [1] : vector<1x16x128xf32> to vector<1x128xf32>
    %cst_218 = arith.constant 6.250000e-02 : f32
    %208 = vector.broadcast %cst_218 : f32 to vector<1x128xf32>
    %209 = arith.mulf %207, %208 : vector<1x128xf32>
    %c0_219 = arith.constant 0 : index
    %c0_220 = arith.constant 0 : index
    %210 = vector.load %arg6[%c0_219, %c0_220] : memref<128x48xf32, #tpu.memory_space<vmem>>, vector<128x48xf32>
    %cst_221 = arith.constant dense<0.000000e+00> : vector<1x48xf32>
    %211 = tpu.matmul %209, %210, %cst_221 {dimension_numbers = #tpu.dot_dimension_numbers<[1], [0], [0], [1], [0, 0, 1, 1], [], []>} : vector<1x128xf32>, vector<128x48xf32>, vector<1x48xf32> -> vector<1x48xf32>
    %c0_222 = arith.constant 0 : index
    %c0_223 = arith.constant 0 : index
    %212 = vector.load %arg7[%c0_222, %c0_223] : memref<1x48xf32, #tpu.memory_space<vmem>>, vector<1x48xf32>
    %213 = arith.addf %211, %212 : vector<1x48xf32>
    %214 = vector.shape_cast %213 : vector<1x48xf32> to vector<1x1x48xf32>
    %c0_224 = arith.constant 0 : index
    %c0_225 = arith.constant 0 : index
    %c0_226 = arith.constant 0 : index
    %215 = vector.load %arg8[%c0_224, %c0_225, %c0_226] : memref<1x1x48xf32, #tpu.memory_space<vmem>>, vector<1x1x48xf32>
    tpu.vector_store %arg8[%c0_224, %c0_225, %c0_226], %214 {strides = array<i32>} : memref<1x1x48xf32, #tpu.memory_space<vmem>>, vector<1x1x48xf32>,
    return
  }
  func.func @transform_0(%arg0: i32) -> (i32, i32, i32) {
    %c0_i32 = arith.constant 0 : i32
    %c0_i32_0 = arith.constant 0 : i32
    %c0_i32_1 = arith.constant 0 : i32
    return %arg0, %c0_i32, %c0_i32_0 : i32, i32, i32
  }
  func.func @transform_1(%arg0: i32) -> (i32, i32, i32, i32) {
    %c0_i32 = arith.constant 0 : i32
    %c0_i32_0 = arith.constant 0 : i32
    %c0_i32_1 = arith.constant 0 : i32
    %c0_i32_2 = arith.constant 0 : i32
    %c0_i32_3 = arith.constant 0 : i32
    return %c0_i32, %c0_i32_0, %c0_i32_1, %c0_i32_2 : i32, i32, i32, i32
  }
  func.func @transform_2(%arg0: i32) -> (i32, i32, i32) {
    %c0_i32 = arith.constant 0 : i32
    %c0_i32_0 = arith.constant 0 : i32
    %c0_i32_1 = arith.constant 0 : i32
    %c0_i32_2 = arith.constant 0 : i32
    return %c0_i32, %c0_i32_0, %c0_i32_1 : i32, i32, i32
  }
  func.func @transform_3(%arg0: i32) -> (i32, i32, i32) {
    %c0_i32 = arith.constant 0 : i32
    %c0_i32_0 = arith.constant 0 : i32
    %c0_i32_1 = arith.constant 0 : i32
    %c0_i32_2 = arith.constant 0 : i32
    return %c0_i32, %c0_i32_0, %c0_i32_1 : i32, i32, i32
  }
  func.func @transform_4(%arg0: i32) -> (i32, i32, i32) {
    %c0_i32 = arith.constant 0 : i32
    %c0_i32_0 = arith.constant 0 : i32
    %c0_i32_1 = arith.constant 0 : i32
    %c0_i32_2 = arith.constant 0 : i32
    return %c0_i32, %c0_i32_0, %c0_i32_1 : i32, i32, i32
  }
  func.func @transform_5(%arg0: i32) -> (i32, i32) {
    %c0_i32 = arith.constant 0 : i32
    %c0_i32_0 = arith.constant 0 : i32
    %c0_i32_1 = arith.constant 0 : i32
    return %c0_i32, %c0_i32_0 : i32, i32
  }
  func.func @transform_6(%arg0: i32) -> (i32, i32) {
    %c0_i32 = arith.constant 0 : i32
    %c0_i32_0 = arith.constant 0 : i32
    %c0_i32_1 = arith.constant 0 : i32
    return %c0_i32, %c0_i32_0 : i32, i32
  }
  func.func @transform_7(%arg0: i32) -> (i32, i32, i32) {
    %c0_i32 = arith.constant 0 : i32
    %c0_i32_0 = arith.constant 0 : i32
    %c0_i32_1 = arith.constant 0 : i32
    return %arg0, %c0_i32, %c0_i32_0 : i32, i32, i32
  }
}

</mosaic_0001>

<llo_original>
// kernel: tpu_custom_call.1
$region0: #{tpu_custom_call.1}
  #allocation0 [shape = 'u32[]', space=smem, size = 0x4, offset = 0x4, fixed_abs, tag = 'smem constant byte address 0x4 - core index']
  #allocation1 [shape = 'u32[144,128]{1,0:T(1,128)}', space=vmem, size = 0x12000, scoped, tag = 'internal scratch']
  #allocation2 [shape = 'f32[1,20,128]{2,1,0:T(8,128)}', space=vmem, size = 0x3000, scoped, tag = 'scratch operand']
  %s0 = inlined_call_operand.vmem [shape: f32[2,16,80], index: 0, kind: input, shape index: {}]
  %s1 = inlined_call_operand.hbm [shape: bf16[4,5,128,128], index: 1, kind: input, shape index: {}]
  %s2 = inlined_call_operand.vmem [shape: f32[4,1,128], index: 2, kind: input, shape index: {}]
  %s3 = inlined_call_operand.vmem [shape: f32[4,1,128], index: 3, kind: input, shape index: {}]
  %s4 = inlined_call_operand.vmem [shape: f32[4,1,128], index: 4, kind: input, shape index: {}]
  %s5 = inlined_call_operand.vmem [shape: f32[128,48], index: 5, kind: input, shape index: {}]
  %s6 = inlined_call_operand.vmem [shape: f32[1,48], index: 6, kind: input, shape index: {}]
  %s7 = inlined_call_operand.hbm [shape: f32[2,1,48], index: 7, kind: output, shape index: {}]
  %s8 = sld [smem:[#allocation0]]
  $region65: #{tpu_custom_call.1} parent=0
    _
  %s10 = ssub.s32 1, %s8
  %s11 = scalar_select 0, %s10, %s8
  $region1: #{tpu_custom_call.1} parent=0
    #allocation3 [shape = 'u8[655360]{0}', space=vmem, size = 0xa0000, scoped, tag = 'input window, operand 1, single buffered']
    #allocation4 [shape = 's32[2]{0}', space=sflag, size = 0x8, scoped, tag = 'scoped memory for tpu_custom_call.1']
    #allocation5 [shape = 's32[2]{0}', space=sflag, size = 0x8, scoped, tag = 'scoped memory for tpu_custom_call.1']
    #allocation6 [shape = 'u8[1024]{0}', space=vmem, size = 0x400, scoped, tag = 'output window, operand 0']
    %12 = vsyncpa [#allocation4], 0
    %13 = vsyncpa [#allocation5], 0
    %s14 = scalar_lea.sflag [#allocation5], 1
    %15 = vsyncpa %s14, 0
    loop: start=0, step=1, limit=4
    $region2: #{tpu_custom_call.1} parent=1 // loop_pre_header
      _
    $region3: #{tpu_custom_call.1} parent=1 // loop_header
      %s17 = sphi 0, %s21
      %p18 = scmp.ge.s32.totalorder %s17, 4
      %s27 = sphi 0, %s29
      %s30 = sphi 0, %s27
      %s31 = sphi 0, %s30
      %s47 = sphi 0, %s31
      %s51 = sphi 0, %s51
      %s53 = sphi 0, %s51
      %s54 = sphi 0, %s53
      %s68 = sphi 0, %s54
      %s72 = sphi 0, %s72
      %s74 = sphi 0, %s72
      %s75 = sphi 0, %s74
      %s89 = sphi 0, %s75
      %s93 = sphi 0, %s93
      %s95 = sphi 0, %s93
      %s96 = sphi 0, %s95
      %s110 = sphi 0, %s96
      %s114 = sphi 0, %s114
      %s116 = sphi 0, %s114
      %s117 = sphi 0, %s116
      %s131 = sphi 0, %s117
      %s135 = sphi 0, %s135
      %s137 = sphi 0, %s135
      %s138 = sphi 0, %s137
      %s152 = sphi 0, %s138
      %s156 = sphi 0, %s156
      %s158 = sphi 0, %s156
      %s159 = sphi 0, %s158
      %s173 = sphi 0, %s159
      %s179 = sphi 0, %s181
      %s182 = sphi 0, %s179
      %s183 = sphi 0, %s182
      %s199 = sphi 0, %s183
    $region4: #{tpu_custom_call.1} parent=1 // loop_header_branch
      %20 = sbr.rel (%p18) target = $region8
    $region5: #{tpu_custom_call.1} parent=1 // loop_body
      %s22 = ssub.s32 %s17, 1
      %s23 = ssub.s32 %s17, 2
      %s24 = sadd.s32 %s17, 1
      %s25 = ssub.s32 %s17, %s24
      %p26 = scmp.eq.s32.totalorder %s25, 0
      %s28 = sadd.s32 %s27, 1
      %s29 = scalar_select %p26, %s27, %s28
      %p32 = pneg %p26
      %p33 = scmp.eq.s32.totalorder %s17, 1
      %p34 = por %p32, %p33
      %p35 = scmp.ne.s32.totalorder %s27, %s30
      %p36 = scmp.eq.s32.totalorder %s17, 0
      %p37 = por %p35, %p36
      %p38 = scmp.ne.s32.totalorder %s27, %s30
      %p39 = scmp.eq.s32.totalorder %s22, 1
      %p40 = por %p38, %p39
      %p41 = scmp.ne.s32.totalorder %s30, %s31
      %p42 = scmp.eq.s32.totalorder %s22, 0
      %p43 = por %p41, %p42
      %p44 = scmp.ne.s32.totalorder %s30, %s31
      %p45 = scmp.eq.s32.totalorder %s23, 1
      %p46 = por %p44, %p45
      %p48 = scmp.ne.s32.totalorder %s31, %s47
      %p49 = scmp.eq.s32.totalorder %s23, 0
      %p50 = por %p48, %p49
      %s52 = sadd.s32 %s51, 1
      %p55 = scmp.eq.s32.totalorder %s17, 1
      %p56 = scmp.ne.s32.totalorder %s51, %s53
      %p57 = scmp.eq.s32.totalorder %s17, 0
      %p58 = por %p56, %p57
      %p59 = scmp.ne.s32.totalorder %s51, %s53
      %p60 = scmp.eq.s32.totalorder %s22, 1
      %p61 = por %p59, %p60
      %p62 = scmp.ne.s32.totalorder %s53, %s54
      %p63 = scmp.eq.s32.totalorder %s22, 0
      %p64 = por %p62, %p63
      %p65 = scmp.ne.s32.totalorder %s53, %s54
      %p66 = scmp.eq.s32.totalorder %s23, 1
      %p67 = por %p65, %p66
      %p69 = scmp.ne.s32.totalorder %s54, %s68
      %p70 = scmp.eq.s32.totalorder %s23, 0
      %p71 = por %p69, %p70
      %s73 = sadd.s32 %s72, 1
      %p76 = scmp.eq.s32.totalorder %s17, 1
      %p77 = scmp.ne.s32.totalorder %s72, %s74
      %p78 = scmp.eq.s32.totalorder %s17, 0
      %p79 = por %p77, %p78
      %p80 = scmp.ne.s32.totalorder %s72, %s74
      %p81 = scmp.eq.s32.totalorder %s22, 1
      %p82 = por %p80, %p81
      %p83 = scmp.ne.s32.totalorder %s74, %s75
      %p84 = scmp.eq.s32.totalorder %s22, 0
      %p85 = por %p83, %p84
      %p86 = scmp.ne.s32.totalorder %s74, %s75
      %p87 = scmp.eq.s32.totalorder %s23, 1
      %p88 = por %p86, %p87
      %p90 = scmp.ne.s32.totalorder %s75, %s89
      %p91 = scmp.eq.s32.totalorder %s23, 0
      %p92 = por %p90, %p91
      %s94 = sadd.s32 %s93, 1
      %p97 = scmp.eq.s32.totalorder %s17, 1
      %p98 = scmp.ne.s32.totalorder %s93, %s95
      %p99 = scmp.eq.s32.totalorder %s17, 0
      %p100 = por %p98, %p99
      %p101 = scmp.ne.s32.totalorder %s93, %s95
      %p102 = scmp.eq.s32.totalorder %s22, 1
      %p103 = por %p101, %p102
      %p104 = scmp.ne.s32.totalorder %s95, %s96
      %p105 = scmp.eq.s32.totalorder %s22, 0
      %p106 = por %p104, %p105
      %p107 = scmp.ne.s32.totalorder %s95, %s96
      %p108 = scmp.eq.s32.totalorder %s23, 1
      %p109 = por %p107, %p108
      %p111 = scmp.ne.s32.totalorder %s96, %s110
      %p112 = scmp.eq.s32.totalorder %s23, 0
      %p113 = por %p111, %p112
      %s115 = sadd.s32 %s114, 1
      %p118 = scmp.eq.s32.totalorder %s17, 1
      %p119 = scmp.ne.s32.totalorder %s114, %s116
      %p120 = scmp.eq.s32.totalorder %s17, 0
      %p121 = por %p119, %p120
      %p122 = scmp.ne.s32.totalorder %s114, %s116
      %p123 = scmp.eq.s32.totalorder %s22, 1
      %p124 = por %p122, %p123
      %p125 = scmp.ne.s32.totalorder %s116, %s117
      %p126 = scmp.eq.s32.totalorder %s22, 0
      %p127 = por %p125, %p126
      %p128 = scmp.ne.s32.totalorder %s116, %s117
      %p129 = scmp.eq.s32.totalorder %s23, 1
      %p130 = por %p128, %p129
      %p132 = scmp.ne.s32.totalorder %s117, %s131
      %p133 = scmp.eq.s32.totalorder %s23, 0
      %p134 = por %p132, %p133
      %s136 = sadd.s32 %s135, 1
      %p139 = scmp.eq.s32.totalorder %s17, 1
      %p140 = scmp.ne.s32.totalorder %s135, %s137
      %p141 = scmp.eq.s32.totalorder %s17, 0
      %p142 = por %p140, %p141
      %p143 = scmp.ne.s32.totalorder %s135, %s137
      %p144 = scmp.eq.s32.totalorder %s22, 1
      %p145 = por %p143, %p144
      %p146 = scmp.ne.s32.totalorder %s137, %s138
      %p147 = scmp.eq.s32.totalorder %s22, 0
      %p148 = por %p146, %p147
      %p149 = scmp.ne.s32.totalorder %s137, %s138
      %p150 = scmp.eq.s32.totalorder %s23, 1
      %p151 = por %p149, %p150
      %p153 = scmp.ne.s32.totalorder %s138, %s152
      %p154 = scmp.eq.s32.totalorder %s23, 0
      %p155 = por %p153, %p154
      %s157 = sadd.s32 %s156, 1
      %p160 = scmp.eq.s32.totalorder %s17, 1
      %p161 = scmp.ne.s32.totalorder %s156, %s158
      %p162 = scmp.eq.s32.totalorder %s17, 0
      %p163 = por %p161, %p162
      %p164 = scmp.ne.s32.totalorder %s156, %s158
      %p165 = scmp.eq.s32.totalorder %s22, 1
      %p166 = por %p164, %p165
      %p167 = scmp.ne.s32.totalorder %s158, %s159
      %p168 = scmp.eq.s32.totalorder %s22, 0
      %p169 = por %p167, %p168
      %p170 = scmp.ne.s32.totalorder %s158, %s159
      %p171 = scmp.eq.s32.totalorder %s23, 1
      %p172 = por %p170, %p171
      %p174 = scmp.ne.s32.totalorder %s159, %s173
      %p175 = scmp.eq.s32.totalorder %s23, 0
      %p176 = por %p174, %p175
      %s177 = ssub.s32 %s17, %s24
      %p178 = scmp.eq.s32.totalorder %s177, 0
      %s180 = sadd.s32 %s179, 1
      %s181 = scalar_select %p178, %s179, %s180
      %p184 = pneg %p178
      %p185 = scmp.eq.s32.totalorder %s17, 1
      %p186 = por %p184, %p185
      %p187 = scmp.ne.s32.totalorder %s179, %s182
      %p188 = scmp.eq.s32.totalorder %s17, 0
      %p189 = por %p187, %p188
      %p190 = scmp.ne.s32.totalorder %s179, %s182
      %p191 = scmp.eq.s32.totalorder %s22, 1
      %p192 = por %p190, %p191
      %p193 = scmp.ne.s32.totalorder %s182, %s183
      %p194 = scmp.eq.s32.totalorder %s22, 0
      %p195 = por %p193, %p194
      %p196 = scmp.ne.s32.totalorder %s182, %s183
      %p197 = scmp.eq.s32.totalorder %s23, 1
      %p198 = por %p196, %p197
      %p200 = scmp.ne.s32.totalorder %s183, %s199
      %p201 = scmp.eq.s32.totalorder %s23, 0
      %p202 = por %p200, %p201
      %p203 = scmp.le.s32.totalorder 1, %s17
      %p204 = scmp.lt.s32.totalorder %s17, 3
      %p205 = pnand %p203, %p204
      %p206 = pneg %p205
      // Predicated region
      $region9: #{tpu_custom_call.1} parent=5 // pred_check
        _
      $region10: #{tpu_custom_call.1} parent=5 // pred_check_branch
        %208 = sbr.rel (%p205) target = $region12
      $region11: #{tpu_custom_call.1} parent=5 // pred_region
        %s209 = ssub.s32 %s17, 1
        // Predicated region
        $region13: #{tpu_custom_call.1} parent=11 // pred_check
          %p210 = pneg %p64
        $region14: #{tpu_custom_call.1} parent=11 // pred_check_branch
          %212 = sbr.rel (%p210) target = $region16
        $region15: #{tpu_custom_call.1} parent=11 // pred_region
          %s214 = ssub.s32 20480, 20480
          %215 = vsyncadd [#allocation4], %s214
          %s216 = sshll.u32 [#allocation3], 4
          %s217 = int_to_ptr.vmem [resolvable:$true] %s216
          %222 = dma.hbm_to_vmem [thread:$0]  %s1, 20480, %s217, [#allocation4], 64, 64, 4
        $region16: #{tpu_custom_call.1} parent=11 // pred_fallthru
          _
        // Predicated region
        $region17: #{tpu_custom_call.1} parent=11 // pred_check
          %p223 = pneg %p85
        $region18: #{tpu_custom_call.1} parent=11 // pred_check_branch
          %225 = sbr.rel (%p223) target = $region20
        $region19: #{tpu_custom_call.1} parent=11 // pred_region
          _
        $region20: #{tpu_custom_call.1} parent=11 // pred_fallthru
          _
        // Predicated region
        $region21: #{tpu_custom_call.1} parent=11 // pred_check
          %p226 = pneg %p106
        $region22: #{tpu_custom_call.1} parent=11 // pred_check_branch
          %228 = sbr.rel (%p226) target = $region24
        $region23: #{tpu_custom_call.1} parent=11 // pred_region
          _
        $region24: #{tpu_custom_call.1} parent=11 // pred_fallthru
          _
        // Predicated region
        $region25: #{tpu_custom_call.1} parent=11 // pred_check
          %p229 = pneg %p127
        $region26: #{tpu_custom_call.1} parent=11 // pred_check_branch
          %231 = sbr.rel (%p229) target = $region28
        $region27: #{tpu_custom_call.1} parent=11 // pred_region
          _
        $region28: #{tpu_custom_call.1} parent=11 // pred_fallthru
          _
        // Predicated region
        $region29: #{tpu_custom_call.1} parent=11 // pred_check
          %p232 = pneg %p148
        $region30: #{tpu_custom_call.1} parent=11 // pred_check_branch
          %234 = sbr.rel (%p232) target = $region32
        $region31: #{tpu_custom_call.1} parent=11 // pred_region
          _
        $region32: #{tpu_custom_call.1} parent=11 // pred_fallthru
          _
        // Predicated region
        $region33: #{tpu_custom_call.1} parent=11 // pred_check
          %p235 = pneg %p169
        $region34: #{tpu_custom_call.1} parent=11 // pred_check_branch
          %237 = sbr.rel (%p235) target = $region36
        $region35: #{tpu_custom_call.1} parent=11 // pred_region
          _
        $region36: #{tpu_custom_call.1} parent=11 // pred_fallthru
          _
      $region12: #{tpu_custom_call.1} parent=5 // pred_fallthru
        _
      %p238 = scmp.lt.s32.totalorder %s17, 2
      // Predicated region
      $region37: #{tpu_custom_call.1} parent=5 // pred_check
        %p239 = pneg %p238
      $region38: #{tpu_custom_call.1} parent=5 // pred_check_branch
        %241 = sbr.rel (%p239) target = $region40
      $region39: #{tpu_custom_call.1} parent=5 // pred_region
        // Predicated region
        $region41: #{tpu_custom_call.1} parent=39 // pred_check
          %p242 = pneg %p37
        $region42: #{tpu_custom_call.1} parent=39 // pred_check_branch
          %244 = sbr.rel (%p242) target = $region44
        $region43: #{tpu_custom_call.1} parent=39 // pred_region
          %p245 = scmp.lt.s32.totalorder %s17, 1
          %s246 = scalar_select %p245, %s17, 1
          %s247 = smul.addr %s246, 2
          %s248 = smul.addr %s247, 8
          %s249 = scalar_lea.vmem %s0, %s248
        $region44: #{tpu_custom_call.1} parent=39 // pred_fallthru
          _
      $region40: #{tpu_custom_call.1} parent=5 // pred_fallthru
        _
      %p250 = scmp.le.s32.totalorder 1, %s17
      %p251 = scmp.lt.s32.totalorder %s17, 3
      %p252 = pnand %p250, %p251
      %p253 = pneg %p252
      // Predicated region
      $region45: #{tpu_custom_call.1} parent=5 // pred_check
        _
      $region46: #{tpu_custom_call.1} parent=5 // pred_check_branch
        %255 = sbr.rel (%p252) target = $region48
      $region47: #{tpu_custom_call.1} parent=5 // pred_region
        %s256 = ssub.s32 %s17, 1
        // Predicated region
        $region49: #{tpu_custom_call.1} parent=47 // pred_check
          %p257 = pneg %p64
        $region50: #{tpu_custom_call.1} parent=47 // pred_check_branch
          %259 = sbr.rel (%p257) target = $region52
        $region51: #{tpu_custom_call.1} parent=47 // pred_region
          %260 = dma.done [#allocation4], 20480
        $region52: #{tpu_custom_call.1} parent=47 // pred_fallthru
          _
        %p261 = scmp.lt.s32.totalorder %s22, 1
        %s262 = scalar_select %p261, %s22, 1
        %s263 = smul.addr %s262, 2
        %s264 = smul.addr %s263, 8
        %s265 = scalar_lea.vmem %s0, %s264
        %p266 = pneg %p43
        %p267 = pneg %p40
        %p268 = pneg %p64
        %p269 = pneg %p61
        %p270 = pneg %p85
        %p271 = pneg %p82
        %p272 = pneg %p106
        %p273 = pneg %p103
        %p274 = pneg %p127
        %p275 = pneg %p124
        %p276 = pneg %p148
        %p277 = pneg %p145
        %p278 = pneg %p169
        %p279 = pneg %p166
        %p280 = pneg %p195
        %p281 = pneg %p192
        %s282 = sand.u32 %s182, 1
        %s283 = scalar_lea.sflag [#allocation5], %s282
        %s284 = sand.u32 %s182, 1
        %s285 = scalar_lea.vmem [#allocation6], %s284
        %p286 = scmp.lt.s32.totalorder %s22, 1
        %s287 = scalar_select %p286, %s22, 1
        %s288 = smul.addr %s287, 2
        %s289 = smul.addr %s288, 8
        %s290 = scalar_lea.vmem %s0, %s289
        %292 = vst [vmem:[#allocation2] sm:$0x3] 0.0
        %293 = vst [vmem:[#allocation2 + $0x12] sm:$0x3] 0.0
        %v294 = vld [vmem:[%s290] sm:$0xff]
        %v295 = vld [vmem:[%s290 + $0x8] sm:$0xff]
        %vm296 = vcmask 654336
        %v297 = vsel %vm296, %v294, 0.0
        %v298 = vsel %vm296, %v295, 0.0
        %299 = vst [vmem:[#allocation2 + $0x2] sm:$0xff] %v297
        %300 = vst [vmem:[#allocation2 + $0xa] sm:$0xff] %v298
        %v301 = vld [vmem:[#allocation2] sm:$0xff]
        %v302 = vld [vmem:[#allocation2 + $0x8] sm:$0xff]
        %v303 = vpack.c.bf16 %v302, %v301
        %v304 = vld [vmem:[#allocation3] sm:$0xf]
        %v305 = vld [vmem:[#allocation3 + $0x4] sm:$0xf]
        %v306 = vld [vmem:[#allocation3 + $0x8] sm:$0xf]
        %v307 = vld [vmem:[#allocation3 + $0xc] sm:$0xf]
        %v308 = vld [vmem:[#allocation3 + $0x10] sm:$0xf]
        %v309 = vld [vmem:[#allocation3 + $0x14] sm:$0xf]
        %v310 = vld [vmem:[#allocation3 + $0x18] sm:$0xf]
        %v311 = vld [vmem:[#allocation3 + $0x1c] sm:$0xf]
        %v312 = vld [vmem:[#allocation3 + $0x20] sm:$0xf]
        %v313 = vld [vmem:[#allocation3 + $0x24] sm:$0xf]
        %v314 = vld [vmem:[#allocation3 + $0x28] sm:$0xf]
        %v315 = vld [vmem:[#allocation3 + $0x2c] sm:$0xf]
        %v316 = vld [vmem:[#allocation3 + $0x30] sm:$0xf]
        %v317 = vld [vmem:[#allocation3 + $0x34] sm:$0xf]
        %v318 = vld [vmem:[#allocation3 + $0x38] sm:$0xf]
        %v319 = vld [vmem:[#allocation3 + $0x3c] sm:$0xf]
        %v320 = vld [vmem:[#allocation2 + $0x1] sm:$0xff]
        %v321 = vld [vmem:[#allocation2 + $0x9] sm:$0xff]
        %v322 = vpack.c.bf16 %v321, %v320
        %s323 = scalar_lea.vmem [#allocation3], 64
        %v324 = vld [vmem:[%s323] sm:$0xf]
        %v325 = vld [vmem:[%s323 + $0x4] sm:$0xf]
        %v326 = vld [vmem:[%s323 + $0x8] sm:$0xf]
        %v327 = vld [vmem:[%s323 + $0xc] sm:$0xf]
        %v328 = vld [vmem:[%s323 + $0x10] sm:$0xf]
        %v329 = vld [vmem:[%s323 + $0x14] sm:$0xf]
        %v330 = vld [vmem:[%s323 + $0x18] sm:$0xf]
        %v331 = vld [vmem:[%s323 + $0x1c] sm:$0xf]
        %v332 = vld [vmem:[%s323 + $0x20] sm:$0xf]
        %v333 = vld [vmem:[%s323 + $0x24] sm:$0xf]
        %v334 = vld [vmem:[%s323 + $0x28] sm:$0xf]
        %v335 = vld [vmem:[%s323 + $0x2c] sm:$0xf]
        %v336 = vld [vmem:[%s323 + $0x30] sm:$0xf]
        %v337 = vld [vmem:[%s323 + $0x34] sm:$0xf]
        %v338 = vld [vmem:[%s323 + $0x38] sm:$0xf]
        %v339 = vld [vmem:[%s323 + $0x3c] sm:$0xf]
        %v356 = vunpack.c.l.b16 %v324
        %v357 = vunpack.c.l.b16 %v325
        %v358 = vunpack.c.l.b16 %v326
        %v359 = vunpack.c.l.b16 %v327
        %v360 = vunpack.c.l.b16 %v328
        %v361 = vunpack.c.l.b16 %v329
        %v362 = vunpack.c.l.b16 %v330
        %v363 = vunpack.c.l.b16 %v331
        %v364 = vunpack.c.l.b16 %v332
        %v365 = vunpack.c.l.b16 %v333
        %v366 = vunpack.c.l.b16 %v334
        %v367 = vunpack.c.l.b16 %v335
        %v368 = vunpack.c.l.b16 %v336
        %v369 = vunpack.c.l.b16 %v337
        %v370 = vunpack.c.l.b16 %v338
        %v371 = vunpack.c.l.b16 %v339
        %v372 = vpack.c.b16 %v357, %v356
        %v373 = vpack.c.b16 %v359, %v358
        %v374 = vpack.c.b16 %v361, %v360
        %v375 = vpack.c.b16 %v363, %v362
        %v376 = vpack.c.b16 %v365, %v364
        %v377 = vpack.c.b16 %v367, %v366
        %v378 = vpack.c.b16 %v369, %v368
        %v379 = vpack.c.b16 %v371, %v370
        %388 = vmatprep.subr.bf16.mxu0 0
        %389 = vmatpush1.bf16.msra.mxu0 %v379
        %390 = vmatprep.subr.bf16.mxu0 0
        %391 = vmatpush1.bf16.msra.mxu0 %v378
        %392 = vmatprep.subr.bf16.mxu0 0
        %393 = vmatpush1.bf16.msra.mxu0 %v377
        %394 = vmatprep.subr.bf16.mxu0 0
        %395 = vmatpush1.bf16.msra.mxu0 %v376
        %396 = vmatprep.subr.bf16.mxu0 0
        %397 = vmatpush1.bf16.msra.mxu0 %v375
        %398 = vmatprep.subr.bf16.mxu0 0
        %399 = vmatpush1.bf16.msra.mxu0 %v374
        %400 = vmatprep.subr.bf16.mxu0 0
        %401 = vmatpush1.bf16.msra.mxu0 %v373
        %402 = vmatprep.subr.bf16.mxu0 0
        %403 = vmatpush1.bf16.msra.mxu0 %v372
        %404 = vmatprep.subr.bf16.mxu0 0
        %405 = vmatpush2.bf16.msra.mxu0 0
        %406 = vmatprep.subr.bf16.mxu0 0
        %407 = vmatpush2.bf16.msra.mxu0 0
        %408 = vmatprep.subr.bf16.mxu0 0
        %409 = vmatpush2.bf16.msra.mxu0 0
        %410 = vmatprep.subr.bf16.mxu0 0
        %411 = vmatpush2.bf16.msra.mxu0 0
        %412 = vmatprep.subr.bf16.mxu0 0
        %413 = vmatpush2.bf16.msra.mxu0 0
        %414 = vmatprep.subr.bf16.mxu0 0
        %415 = vmatpush2.bf16.msra.mxu0 0
        %416 = vmatprep.subr.bf16.mxu0 0
        %417 = vmatpush2.bf16.msra.mxu0 0
        %418 = vmatprep.subr.bf16.mxu0 0
        %419 = vmatpush2.bf16.msra.mxu0 0
        %420 = vmatprep.mubr.bf16.mxu0 0
        %421 = vmatmul.mubr.bf16.gmra.mxu0 %v322
        %v422 = vpop.f32.mrf.mxu0
        %v423 = vadd.f32 0.0, %v422
        %v424 = vpop.f32.mrf.mxu0
        %v425 = vpop.f32.mrf.mxu0
        %v426 = vadd.f32 0.0, %v425
        %v427 = vpop.f32.mrf.mxu0
        %428 = vdwg.mxu0
        %v445 = vunpack.c.l.b16 %v304
        %v446 = vunpack.c.l.b16 %v305
        %v447 = vunpack.c.l.b16 %v306
        %v448 = vunpack.c.l.b16 %v307
        %v449 = vunpack.c.l.b16 %v308
        %v450 = vunpack.c.l.b16 %v309
        %v451 = vunpack.c.l.b16 %v310
        %v452 = vunpack.c.l.b16 %v311
        %v453 = vunpack.c.l.b16 %v312
        %v454 = vunpack.c.l.b16 %v313
        %v455 = vunpack.c.l.b16 %v314
        %v456 = vunpack.c.l.b16 %v315
        %v457 = vunpack.c.l.b16 %v316
        %v458 = vunpack.c.l.b16 %v317
        %v459 = vunpack.c.l.b16 %v318
        %v460 = vunpack.c.l.b16 %v319
        %v461 = vpack.c.b16 %v446, %v445
        %v462 = vpack.c.b16 %v448, %v447
        %v463 = vpack.c.b16 %v450, %v449
        %v464 = vpack.c.b16 %v452, %v451
        %v465 = vpack.c.b16 %v454, %v453
        %v466 = vpack.c.b16 %v456, %v455
        %v467 = vpack.c.b16 %v458, %v457
        %v468 = vpack.c.b16 %v460, %v459
        %477 = vmatprep.subr.bf16.mxu0 0
        %478 = vmatpush1.bf16.msra.mxu0 %v468
        %479 = vmatprep.subr.bf16.mxu0 0
        %480 = vmatpush1.bf16.msra.mxu0 %v467
        %481 = vmatprep.subr.bf16.mxu0 0
        %482 = vmatpush1.bf16.msra.mxu0 %v466
        %483 = vmatprep.subr.bf16.mxu0 0
        %484 = vmatpush1.bf16.msra.mxu0 %v465
        %485 = vmatprep.subr.bf16.mxu0 0
        %486 = vmatpush1.bf16.msra.mxu0 %v464
        %487 = vmatprep.subr.bf16.mxu0 0
        %488 = vmatpush1.bf16.msra.mxu0 %v463
        %489 = vmatprep.subr.bf16.mxu0 0
        %490 = vmatpush1.bf16.msra.mxu0 %v462
        %491 = vmatprep.subr.bf16.mxu0 0
        %492 = vmatpush1.bf16.msra.mxu0 %v461
        %493 = vmatprep.subr.bf16.mxu0 0
        %494 = vmatpush2.bf16.msra.mxu0 0
        %495 = vmatprep.subr.bf16.mxu0 0
        %496 = vmatpush2.bf16.msra.mxu0 0
        %497 = vmatprep.subr.bf16.mxu0 0
        %498 = vmatpush2.bf16.msra.mxu0 0
        %499 = vmatprep.subr.bf16.mxu0 0
        %500 = vmatpush2.bf16.msra.mxu0 0
        %501 = vmatprep.subr.bf16.mxu0 0
        %502 = vmatpush2.bf16.msra.mxu0 0
        %503 = vmatprep.subr.bf16.mxu0 0
        %504 = vmatpush2.bf16.msra.mxu0 0
        %505 = vmatprep.subr.bf16.mxu0 0
        %506 = vmatpush2.bf16.msra.mxu0 0
        %507 = vmatprep.subr.bf16.mxu0 0
        %508 = vmatpush2.bf16.msra.mxu0 0
        %509 = vmatprep.mubr.bf16.mxu0 0
        %510 = vmatmul.mubr.bf16.gmra.mxu0 %v303
        %v511 = vpop.f32.mrf.mxu0
        %v512 = vadd.f32 %v423, %v511
        %v513 = vpop.f32.mrf.mxu0
        %v514 = vpop.f32.mrf.mxu0
        %v515 = vadd.f32 %v426, %v514
        %v516 = vpop.f32.mrf.mxu0
        %517 = vdwg.mxu0
        %v518 = vld [vmem:[#allocation2 + $0x2] sm:$0xff]
        %v519 = vld [vmem:[#allocation2 + $0xa] sm:$0xff]
        %v520 = vpack.c.bf16 %v519, %v518
        %s521 = scalar_lea.vmem [#allocation3], 128
        %v522 = vld [vmem:[%s521] sm:$0xf]
        %v523 = vld [vmem:[%s521 + $0x4] sm:$0xf]
        %v524 = vld [vmem:[%s521 + $0x8] sm:$0xf]
        %v525 = vld [vmem:[%s521 + $0xc] sm:$0xf]
        %v526 = vld [vmem:[%s521 + $0x10] sm:$0xf]
        %v527 = vld [vmem:[%s521 + $0x14] sm:$0xf]
        %v528 = vld [vmem:[%s521 + $0x18] sm:$0xf]
        %v529 = vld [vmem:[%s521 + $0x1c] sm:$0xf]
        %v530 = vld [vmem:[%s521 + $0x20] sm:$0xf]
        %v531 = vld [vmem:[%s521 + $0x24] sm:$0xf]
        %v532 = vld [vmem:[%s521 + $0x28] sm:$0xf]
        %v533 = vld [vmem:[%s521 + $0x2c] sm:$0xf]
        %v534 = vld [vmem:[%s521 + $0x30] sm:$0xf]
        %v535 = vld [vmem:[%s521 + $0x34] sm:$0xf]
        %v536 = vld [vmem:[%s521 + $0x38] sm:$0xf]
        %v537 = vld [vmem:[%s521 + $0x3c] sm:$0xf]
        %v554 = vunpack.c.l.b16 %v522
        %v555 = vunpack.c.l.b16 %v523
        %v556 = vunpack.c.l.b16 %v524
        %v557 = vunpack.c.l.b16 %v525
        %v558 = vunpack.c.l.b16 %v526
        %v559 = vunpack.c.l.b16 %v527
        %v560 = vunpack.c.l.b16 %v528
        %v561 = vunpack.c.l.b16 %v529
        %v562 = vunpack.c.l.b16 %v530
        %v563 = vunpack.c.l.b16 %v531
        %v564 = vunpack.c.l.b16 %v532
        %v565 = vunpack.c.l.b16 %v533
        %v566 = vunpack.c.l.b16 %v534
        %v567 = vunpack.c.l.b16 %v535
        %v568 = vunpack.c.l.b16 %v536
        %v569 = vunpack.c.l.b16 %v537
        %v570 = vpack.c.b16 %v555, %v554
        %v571 = vpack.c.b16 %v557, %v556
        %v572 = vpack.c.b16 %v559, %v558
        %v573 = vpack.c.b16 %v561, %v560
        %v574 = vpack.c.b16 %v563, %v562
        %v575 = vpack.c.b16 %v565, %v564
        %v576 = vpack.c.b16 %v567, %v566
        %v577 = vpack.c.b16 %v569, %v568
        %586 = vmatprep.subr.bf16.mxu0 0
        %587 = vmatpush1.bf16.msra.mxu0 %v577
        %588 = vmatprep.subr.bf16.mxu0 0
        %589 = vmatpush1.bf16.msra.mxu0 %v576
        %590 = vmatprep.subr.bf16.mxu0 0
        %591 = vmatpush1.bf16.msra.mxu0 %v575
        %592 = vmatprep.subr.bf16.mxu0 0
        %593 = vmatpush1.bf16.msra.mxu0 %v574
        %594 = vmatprep.subr.bf16.mxu0 0
        %595 = vmatpush1.bf16.msra.mxu0 %v573
        %596 = vmatprep.subr.bf16.mxu0 0
        %597 = vmatpush1.bf16.msra.mxu0 %v572
        %598 = vmatprep.subr.bf16.mxu0 0
        %599 = vmatpush1.bf16.msra.mxu0 %v571
        %600 = vmatprep.subr.bf16.mxu0 0
        %601 = vmatpush1.bf16.msra.mxu0 %v570
        %602 = vmatprep.subr.bf16.mxu0 0
        %603 = vmatpush2.bf16.msra.mxu0 0
        %604 = vmatprep.subr.bf16.mxu0 0
        %605 = vmatpush2.bf16.msra.mxu0 0
        %606 = vmatprep.subr.bf16.mxu0 0
        %607 = vmatpush2.bf16.msra.mxu0 0
        %608 = vmatprep.subr.bf16.mxu0 0
        %609 = vmatpush2.bf16.msra.mxu0 0
        %610 = vmatprep.subr.bf16.mxu0 0
        %611 = vmatpush2.bf16.msra.mxu0 0
        %612 = vmatprep.subr.bf16.mxu0 0
        %613 = vmatpush2.bf16.msra.mxu0 0
        %614 = vmatprep.subr.bf16.mxu0 0
        %615 = vmatpush2.bf16.msra.mxu0 0
        %616 = vmatprep.subr.bf16.mxu0 0
        %617 = vmatpush2.bf16.msra.mxu0 0
        %618 = vmatprep.mubr.bf16.mxu0 0
        %619 = vmatmul.mubr.bf16.gmra.mxu0 %v520
        %v620 = vpop.f32.mrf.mxu0
        %v621 = vadd.f32 0.0, %v620
        %v622 = vpop.f32.mrf.mxu0
        %v623 = vpop.f32.mrf.mxu0
        %v624 = vadd.f32 0.0, %v623
        %v625 = vpop.f32.mrf.mxu0
        %626 = vdwg.mxu0
        %v627 = vadd.f32 %v512, %v621
        %v628 = vadd.f32 %v515, %v624
        %v629 = vld [vmem:[#allocation2 + $0x3] sm:$0xff]
        %v630 = vld [vmem:[#allocation2 + $0xb] sm:$0xff]
        %v631 = vpack.c.bf16 %v630, %v629
        %s632 = scalar_lea.vmem [#allocation3], 192
        %v633 = vld [vmem:[%s632] sm:$0xf]
        %v634 = vld [vmem:[%s632 + $0x4] sm:$0xf]
        %v635 = vld [vmem:[%s632 + $0x8] sm:$0xf]
        %v636 = vld [vmem:[%s632 + $0xc] sm:$0xf]
        %v637 = vld [vmem:[%s632 + $0x10] sm:$0xf]
        %v638 = vld [vmem:[%s632 + $0x14] sm:$0xf]
        %v639 = vld [vmem:[%s632 + $0x18] sm:$0xf]
        %v640 = vld [vmem:[%s632 + $0x1c] sm:$0xf]
        %v641 = vld [vmem:[%s632 + $0x20] sm:$0xf]
        %v642 = vld [vmem:[%s632 + $0x24] sm:$0xf]
        %v643 = vld [vmem:[%s632 + $0x28] sm:$0xf]
        %v644 = vld [vmem:[%s632 + $0x2c] sm:$0xf]
        %v645 = vld [vmem:[%s632 + $0x30] sm:$0xf]
        %v646 = vld [vmem:[%s632 + $0x34] sm:$0xf]
        %v647 = vld [vmem:[%s632 + $0x38] sm:$0xf]
        %v648 = vld [vmem:[%s632 + $0x3c] sm:$0xf]
        %v665 = vunpack.c.l.b16 %v633
        %v666 = vunpack.c.l.b16 %v634
        %v667 = vunpack.c.l.b16 %v635
        %v668 = vunpack.c.l.b16 %v636
        %v669 = vunpack.c.l.b16 %v637
        %v670 = vunpack.c.l.b16 %v638
        %v671 = vunpack.c.l.b16 %v639
        %v672 = vunpack.c.l.b16 %v640
        %v673 = vunpack.c.l.b16 %v641
        %v674 = vunpack.c.l.b16 %v642
        %v675 = vunpack.c.l.b16 %v643
        %v676 = vunpack.c.l.b16 %v644
        %v677 = vunpack.c.l.b16 %v645
        %v678 = vunpack.c.l.b16 %v646
        %v679 = vunpack.c.l.b16 %v647
        %v680 = vunpack.c.l.b16 %v648
        %v681 = vpack.c.b16 %v666, %v665
        %v682 = vpack.c.b16 %v668, %v667
        %v683 = vpack.c.b16 %v670, %v669
        %v684 = vpack.c.b16 %v672, %v671
        %v685 = vpack.c.b16 %v674, %v673
        %v686 = vpack.c.b16 %v676, %v675
        %v687 = vpack.c.b16 %v678, %v677
        %v688 = vpack.c.b16 %v680, %v679
        %697 = vmatprep.subr.bf16.mxu0 0
        %698 = vmatpush1.bf16.msra.mxu0 %v688
        %699 = vmatprep.subr.bf16.mxu0 0
        %700 = vmatpush1.bf16.msra.mxu0 %v687
        %701 = vmatprep.subr.bf16.mxu0 0
        %702 = vmatpush1.bf16.msra.mxu0 %v686
        %703 = vmatprep.subr.bf16.mxu0 0
        %704 = vmatpush1.bf16.msra.mxu0 %v685
        %705 = vmatprep.subr.bf16.mxu0 0
        %706 = vmatpush1.bf16.msra.mxu0 %v684
        %707 = vmatprep.subr.bf16.mxu0 0
        %708 = vmatpush1.bf16.msra.mxu0 %v683
        %709 = vmatprep.subr.bf16.mxu0 0
        %710 = vmatpush1.bf16.msra.mxu0 %v682
        %711 = vmatprep.subr.bf16.mxu0 0
        %712 = vmatpush1.bf16.msra.mxu0 %v681
        %713 = vmatprep.subr.bf16.mxu0 0
        %714 = vmatpush2.bf16.msra.mxu0 0
        %715 = vmatprep.subr.bf16.mxu0 0
        %716 = vmatpush2.bf16.msra.mxu0 0
        %717 = vmatprep.subr.bf16.mxu0 0
        %718 = vmatpush2.bf16.msra.mxu0 0
        %719 = vmatprep.subr.bf16.mxu0 0
        %720 = vmatpush2.bf16.msra.mxu0 0
        %721 = vmatprep.subr.bf16.mxu0 0
        %722 = vmatpush2.bf16.msra.mxu0 0
        %723 = vmatprep.subr.bf16.mxu0 0
        %724 = vmatpush2.bf16.msra.mxu0 0
        %725 = vmatprep.subr.bf16.mxu0 0
        %726 = vmatpush2.bf16.msra.mxu0 0
        %727 = vmatprep.subr.bf16.mxu0 0
        %728 = vmatpush2.bf16.msra.mxu0 0
        %729 = vmatprep.mubr.bf16.mxu0 0
        %730 = vmatmul.mubr.bf16.gmra.mxu0 %v631
        %v731 = vpop.f32.mrf.mxu0
        %v732 = vadd.f32 0.0, %v731
        %v733 = vpop.f32.mrf.mxu0
        %v734 = vpop.f32.mrf.mxu0
        %v735 = vadd.f32 0.0, %v734
        %v736 = vpop.f32.mrf.mxu0
        %737 = vdwg.mxu0
        %v738 = vadd.f32 %v627, %v732
        %v739 = vadd.f32 %v628, %v735
        %v740 = vld [vmem:[#allocation2 + $0x4] sm:$0xff]
        %v741 = vld [vmem:[#allocation2 + $0xc] sm:$0xff]
        %v742 = vpack.c.bf16 %v741, %v740
        %s743 = scalar_lea.vmem [#allocation3], 256
        %v744 = vld [vmem:[%s743] sm:$0xf]
        %v745 = vld [vmem:[%s743 + $0x4] sm:$0xf]
        %v746 = vld [vmem:[%s743 + $0x8] sm:$0xf]
        %v747 = vld [vmem:[%s743 + $0xc] sm:$0xf]
        %v748 = vld [vmem:[%s743 + $0x10] sm:$0xf]
        %v749 = vld [vmem:[%s743 + $0x14] sm:$0xf]
        %v750 = vld [vmem:[%s743 + $0x18] sm:$0xf]
        %v751 = vld [vmem:[%s743 + $0x1c] sm:$0xf]
        %v752 = vld [vmem:[%s743 + $0x20] sm:$0xf]
        %v753 = vld [vmem:[%s743 + $0x24] sm:$0xf]
        %v754 = vld [vmem:[%s743 + $0x28] sm:$0xf]
        %v755 = vld [vmem:[%s743 + $0x2c] sm:$0xf]
        %v756 = vld [vmem:[%s743 + $0x30] sm:$0xf]
        %v757 = vld [vmem:[%s743 + $0x34] sm:$0xf]
        %v758 = vld [vmem:[%s743 + $0x38] sm:$0xf]
        %v759 = vld [vmem:[%s743 + $0x3c] sm:$0xf]
        %v776 = vunpack.c.l.b16 %v744
        %v777 = vunpack.c.l.b16 %v745
        %v778 = vunpack.c.l.b16 %v746
        %v779 = vunpack.c.l.b16 %v747
        %v780 = vunpack.c.l.b16 %v748
        %v781 = vunpack.c.l.b16 %v749
        %v782 = vunpack.c.l.b16 %v750
        %v783 = vunpack.c.l.b16 %v751
        %v784 = vunpack.c.l.b16 %v752
        %v785 = vunpack.c.l.b16 %v753
        %v786 = vunpack.c.l.b16 %v754
        %v787 = vunpack.c.l.b16 %v755
        %v788 = vunpack.c.l.b16 %v756
        %v789 = vunpack.c.l.b16 %v757
        %v790 = vunpack.c.l.b16 %v758
        %v791 = vunpack.c.l.b16 %v759
        %v792 = vpack.c.b16 %v777, %v776
        %v793 = vpack.c.b16 %v779, %v778
        %v794 = vpack.c.b16 %v781, %v780
        %v795 = vpack.c.b16 %v783, %v782
        %v796 = vpack.c.b16 %v785, %v784
        %v797 = vpack.c.b16 %v787, %v786
        %v798 = vpack.c.b16 %v789, %v788
        %v799 = vpack.c.b16 %v791, %v790
        %808 = vmatprep.subr.bf16.mxu0 0
        %809 = vmatpush1.bf16.msra.mxu0 %v799
        %810 = vmatprep.subr.bf16.mxu0 0
        %811 = vmatpush1.bf16.msra.mxu0 %v798
        %812 = vmatprep.subr.bf16.mxu0 0
        %813 = vmatpush1.bf16.msra.mxu0 %v797
        %814 = vmatprep.subr.bf16.mxu0 0
        %815 = vmatpush1.bf16.msra.mxu0 %v796
        %816 = vmatprep.subr.bf16.mxu0 0
        %817 = vmatpush1.bf16.msra.mxu0 %v795
        %818 = vmatprep.subr.bf16.mxu0 0
        %819 = vmatpush1.bf16.msra.mxu0 %v794
        %820 = vmatprep.subr.bf16.mxu0 0
        %821 = vmatpush1.bf16.msra.mxu0 %v793
        %822 = vmatprep.subr.bf16.mxu0 0
        %823 = vmatpush1.bf16.msra.mxu0 %v792
        %824 = vmatprep.subr.bf16.mxu0 0
        %825 = vmatpush2.bf16.msra.mxu0 0
        %826 = vmatprep.subr.bf16.mxu0 0
        %827 = vmatpush2.bf16.msra.mxu0 0
        %828 = vmatprep.subr.bf16.mxu0 0
        %829 = vmatpush2.bf16.msra.mxu0 0
        %830 = vmatprep.subr.bf16.mxu0 0
        %831 = vmatpush2.bf16.msra.mxu0 0
        %832 = vmatprep.subr.bf16.mxu0 0
        %833 = vmatpush2.bf16.msra.mxu0 0
        %834 = vmatprep.subr.bf16.mxu0 0
        %835 = vmatpush2.bf16.msra.mxu0 0
        %836 = vmatprep.subr.bf16.mxu0 0
        %837 = vmatpush2.bf16.msra.mxu0 0
        %838 = vmatprep.subr.bf16.mxu0 0
        %839 = vmatpush2.bf16.msra.mxu0 0
        %840 = vmatprep.mubr.bf16.mxu0 0
        %841 = vmatmul.mubr.bf16.gmra.mxu0 %v742
        %v842 = vpop.f32.mrf.mxu0
        %v843 = vadd.f32 0.0, %v842
        %v844 = vpop.f32.mrf.mxu0
        %v845 = vpop.f32.mrf.mxu0
        %v846 = vadd.f32 0.0, %v845
        %v847 = vpop.f32.mrf.mxu0
        %848 = vdwg.mxu0
        %v849 = vadd.f32 %v738, %v843
        %v850 = vadd.f32 %v739, %v846
        %v851 = vld [vmem:[%s2] sm:$0x1]
        %v853 = vlaneseq
        %v854 = vshrl.u32 %v853, 7
        %v855 = vsub.s32 0, %v854
        %v856 = vrot.slane %v851, %v855
        %v858 = vadd.f32 %v849, %v856
        %v859 = vadd.f32 %v850, %v856
        %v860 = vmax.f32 %v858, 0.0
        %v861 = vmax.f32 %v859, 0.0
        %v862 = vld [vmem:[%s3] sm:$0x1]
        %v864 = vlaneseq
        %v865 = vshrl.u32 %v864, 7
        %v866 = vsub.s32 0, %v865
        %v867 = vrot.slane %v862, %v866
        %v869 = vmul.f32 %v860, %v867
        %v870 = vmul.f32 %v861, %v867
        %v871 = vld [vmem:[%s4] sm:$0x1]
        %v873 = vlaneseq
        %v874 = vshrl.u32 %v873, 7
        %v875 = vsub.s32 0, %v874
        %v876 = vrot.slane %v871, %v875
        %v878 = vadd.f32 %v869, %v876
        %v879 = vadd.f32 %v870, %v876
        %880 = vst [vmem:[#allocation2 + $0x2] sm:$0xff] %v878
        %881 = vst [vmem:[#allocation2 + $0xa] sm:$0xff] %v879
        %v882 = vld [vmem:[#allocation2] sm:$0xff]
        %v883 = vld [vmem:[#allocation2 + $0x8] sm:$0xff]
        %v884 = vpack.c.bf16 %v883, %v882
        %s885 = scalar_lea.vmem [#allocation3], 320
        %v886 = vld [vmem:[%s885] sm:$0xf]
        %v887 = vld [vmem:[%s885 + $0x4] sm:$0xf]
        %v888 = vld [vmem:[%s885 + $0x8] sm:$0xf]
        %v889 = vld [vmem:[%s885 + $0xc] sm:$0xf]
        %v890 = vld [vmem:[%s885 + $0x10] sm:$0xf]
        %v891 = vld [vmem:[%s885 + $0x14] sm:$0xf]
        %v892 = vld [vmem:[%s885 + $0x18] sm:$0xf]
        %v893 = vld [vmem:[%s885 + $0x1c] sm:$0xf]
        %v894 = vld [vmem:[%s885 + $0x20] sm:$0xf]
        %v895 = vld [vmem:[%s885 + $0x24] sm:$0xf]
        %v896 = vld [vmem:[%s885 + $0x28] sm:$0xf]
        %v897 = vld [vmem:[%s885 + $0x2c] sm:$0xf]
        %v898 = vld [vmem:[%s885 + $0x30] sm:$0xf]
        %v899 = vld [vmem:[%s885 + $0x34] sm:$0xf]
        %v900 = vld [vmem:[%s885 + $0x38] sm:$0xf]
        %v901 = vld [vmem:[%s885 + $0x3c] sm:$0xf]
        %v902 = vld [vmem:[#allocation2 + $0x1] sm:$0xff]
        %v903 = vld [vmem:[#allocation2 + $0x9] sm:$0xff]
        %v904 = vpack.c.bf16 %v903, %v902
        %s905 = scalar_lea.vmem [#allocation3], 384
        %v906 = vld [vmem:[%s905] sm:$0xf]
        %v907 = vld [vmem:[%s905 + $0x4] sm:$0xf]
        %v908 = vld [vmem:[%s905 + $0x8] sm:$0xf]
        %v909 = vld [vmem:[%s905 + $0xc] sm:$0xf]
        %v910 = vld [vmem:[%s905 + $0x10] sm:$0xf]
        %v911 = vld [vmem:[%s905 + $0x14] sm:$0xf]
        %v912 = vld [vmem:[%s905 + $0x18] sm:$0xf]
        %v913 = vld [vmem:[%s905 + $0x1c] sm:$0xf]
        %v914 = vld [vmem:[%s905 + $0x20] sm:$0xf]
        %v915 = vld [vmem:[%s905 + $0x24] sm:$0xf]
        %v916 = vld [vmem:[%s905 + $0x28] sm:$0xf]
        %v917 = vld [vmem:[%s905 + $0x2c] sm:$0xf]
        %v918 = vld [vmem:[%s905 + $0x30] sm:$0xf]
        %v919 = vld [vmem:[%s905 + $0x34] sm:$0xf]
        %v920 = vld [vmem:[%s905 + $0x38] sm:$0xf]
        %v921 = vld [vmem:[%s905 + $0x3c] sm:$0xf]
        %v938 = vunpack.c.l.b16 %v906
        %v939 = vunpack.c.l.b16 %v907
        %v940 = vunpack.c.l.b16 %v908
        %v941 = vunpack.c.l.b16 %v909
        %v942 = vunpack.c.l.b16 %v910
        %v943 = vunpack.c.l.b16 %v911
        %v944 = vunpack.c.l.b16 %v912
        %v945 = vunpack.c.l.b16 %v913
        %v946 = vunpack.c.l.b16 %v914
        %v947 = vunpack.c.l.b16 %v915
        %v948 = vunpack.c.l.b16 %v916
        %v949 = vunpack.c.l.b16 %v917
        %v950 = vunpack.c.l.b16 %v918
        %v951 = vunpack.c.l.b16 %v919
        %v952 = vunpack.c.l.b16 %v920
        %v953 = vunpack.c.l.b16 %v921
        %v954 = vpack.c.b16 %v939, %v938
        %v955 = vpack.c.b16 %v941, %v940
        %v956 = vpack.c.b16 %v943, %v942
        %v957 = vpack.c.b16 %v945, %v944
        %v958 = vpack.c.b16 %v947, %v946
        %v959 = vpack.c.b16 %v949, %v948
        %v960 = vpack.c.b16 %v951, %v950
        %v961 = vpack.c.b16 %v953, %v952
        %970 = vmatprep.subr.bf16.mxu0 0
        %971 = vmatpush1.bf16.msra.mxu0 %v961
        %972 = vmatprep.subr.bf16.mxu0 0
        %973 = vmatpush1.bf16.msra.mxu0 %v960
        %974 = vmatprep.subr.bf16.mxu0 0
        %975 = vmatpush1.bf16.msra.mxu0 %v959
        %976 = vmatprep.subr.bf16.mxu0 0
        %977 = vmatpush1.bf16.msra.mxu0 %v958
        %978 = vmatprep.subr.bf16.mxu0 0
        %979 = vmatpush1.bf16.msra.mxu0 %v957
        %980 = vmatprep.subr.bf16.mxu0 0
        %981 = vmatpush1.bf16.msra.mxu0 %v956
        %982 = vmatprep.subr.bf16.mxu0 0
        %983 = vmatpush1.bf16.msra.mxu0 %v955
        %984 = vmatprep.subr.bf16.mxu0 0
        %985 = vmatpush1.bf16.msra.mxu0 %v954
        %986 = vmatprep.subr.bf16.mxu0 0
        %987 = vmatpush2.bf16.msra.mxu0 0
        %988 = vmatprep.subr.bf16.mxu0 0
        %989 = vmatpush2.bf16.msra.mxu0 0
        %990 = vmatprep.subr.bf16.mxu0 0
        %991 = vmatpush2.bf16.msra.mxu0 0
        %992 = vmatprep.subr.bf16.mxu0 0
        %993 = vmatpush2.bf16.msra.mxu0 0
        %994 = vmatprep.subr.bf16.mxu0 0
        %995 = vmatpush2.bf16.msra.mxu0 0
        %996 = vmatprep.subr.bf16.mxu0 0
        %997 = vmatpush2.bf16.msra.mxu0 0
        %998 = vmatprep.subr.bf16.mxu0 0
        %999 = vmatpush2.bf16.msra.mxu0 0
        %1000 = vmatprep.subr.bf16.mxu0 0
        %1001 = vmatpush2.bf16.msra.mxu0 0
        %1002 = vmatprep.mubr.bf16.mxu0 0
        %1003 = vmatmul.mubr.bf16.gmra.mxu0 %v904
        %v1004 = vpop.f32.mrf.mxu0
        %v1005 = vadd.f32 0.0, %v1004
        %v1006 = vpop.f32.mrf.mxu0
        %v1007 = vpop.f32.mrf.mxu0
        %v1008 = vadd.f32 0.0, %v1007
        %v1009 = vpop.f32.mrf.mxu0
        %1010 = vdwg.mxu0
        %v1027 = vunpack.c.l.b16 %v886
        %v1028 = vunpack.c.l.b16 %v887
        %v1029 = vunpack.c.l.b16 %v888
        %v1030 = vunpack.c.l.b16 %v889
        %v1031 = vunpack.c.l.b16 %v890
        %v1032 = vunpack.c.l.b16 %v891
        %v1033 = vunpack.c.l.b16 %v892
        %v1034 = vunpack.c.l.b16 %v893
        %v1035 = vunpack.c.l.b16 %v894
        %v1036 = vunpack.c.l.b16 %v895
        %v1037 = vunpack.c.l.b16 %v896
        %v1038 = vunpack.c.l.b16 %v897
        %v1039 = vunpack.c.l.b16 %v898
        %v1040 = vunpack.c.l.b16 %v899
        %v1041 = vunpack.c.l.b16 %v900
        %v1042 = vunpack.c.l.b16 %v901
        %v1043 = vpack.c.b16 %v1028, %v1027
        %v1044 = vpack.c.b16 %v1030, %v1029
        %v1045 = vpack.c.b16 %v1032, %v1031
        %v1046 = vpack.c.b16 %v1034, %v1033
        %v1047 = vpack.c.b16 %v1036, %v1035
        %v1048 = vpack.c.b16 %v1038, %v1037
        %v1049 = vpack.c.b16 %v1040, %v1039
        %v1050 = vpack.c.b16 %v1042, %v1041
        %1059 = vmatprep.subr.bf16.mxu0 0
        %1060 = vmatpush1.bf16.msra.mxu0 %v1050
        %1061 = vmatprep.subr.bf16.mxu0 0
        %1062 = vmatpush1.bf16.msra.mxu0 %v1049
        %1063 = vmatprep.subr.bf16.mxu0 0
        %1064 = vmatpush1.bf16.msra.mxu0 %v1048
        %1065 = vmatprep.subr.bf16.mxu0 0
        %1066 = vmatpush1.bf16.msra.mxu0 %v1047
        %1067 = vmatprep.subr.bf16.mxu0 0
        %1068 = vmatpush1.bf16.msra.mxu0 %v1046
        %1069 = vmatprep.subr.bf16.mxu0 0
        %1070 = vmatpush1.bf16.msra.mxu0 %v1045
        %1071 = vmatprep.subr.bf16.mxu0 0
        %1072 = vmatpush1.bf16.msra.mxu0 %v1044
        %1073 = vmatprep.subr.bf16.mxu0 0
        %1074 = vmatpush1.bf16.msra.mxu0 %v1043
        %1075 = vmatprep.subr.bf16.mxu0 0
        %1076 = vmatpush2.bf16.msra.mxu0 0
        %1077 = vmatprep.subr.bf16.mxu0 0
        %1078 = vmatpush2.bf16.msra.mxu0 0
        %1079 = vmatprep.subr.bf16.mxu0 0
        %1080 = vmatpush2.bf16.msra.mxu0 0
        %1081 = vmatprep.subr.bf16.mxu0 0
        %1082 = vmatpush2.bf16.msra.mxu0 0
        %1083 = vmatprep.subr.bf16.mxu0 0
        %1084 = vmatpush2.bf16.msra.mxu0 0
        %1085 = vmatprep.subr.bf16.mxu0 0
        %1086 = vmatpush2.bf16.msra.mxu0 0
        %1087 = vmatprep.subr.bf16.mxu0 0
        %1088 = vmatpush2.bf16.msra.mxu0 0
        %1089 = vmatprep.subr.bf16.mxu0 0
        %1090 = vmatpush2.bf16.msra.mxu0 0
        %1091 = vmatprep.mubr.bf16.mxu0 0
        %1092 = vmatmul.mubr.bf16.gmra.mxu0 %v884
        %v1093 = vpop.f32.mrf.mxu0
        %v1094 = vadd.f32 %v1005, %v1093
        %v1095 = vpop.f32.mrf.mxu0
        %v1096 = vpop.f32.mrf.mxu0
        %v1097 = vadd.f32 %v1008, %v1096
        %v1098 = vpop.f32.mrf.mxu0
        %1099 = vdwg.mxu0
        %v1100 = vld [vmem:[#allocation2 + $0x2] sm:$0xff]
        %v1101 = vld [vmem:[#allocation2 + $0xa] sm:$0xff]
        %v1102 = vpack.c.bf16 %v1101, %v1100
        %s1103 = scalar_lea.vmem [#allocation3], 448
        %v1104 = vld [vmem:[%s1103] sm:$0xf]
        %v1105 = vld [vmem:[%s1103 + $0x4] sm:$0xf]
        %v1106 = vld [vmem:[%s1103 + $0x8] sm:$0xf]
        %v1107 = vld [vmem:[%s1103 + $0xc] sm:$0xf]
        %v1108 = vld [vmem:[%s1103 + $0x10] sm:$0xf]
        %v1109 = vld [vmem:[%s1103 + $0x14] sm:$0xf]
        %v1110 = vld [vmem:[%s1103 + $0x18] sm:$0xf]
        %v1111 = vld [vmem:[%s1103 + $0x1c] sm:$0xf]
        %v1112 = vld [vmem:[%s1103 + $0x20] sm:$0xf]
        %v1113 = vld [vmem:[%s1103 + $0x24] sm:$0xf]
        %v1114 = vld [vmem:[%s1103 + $0x28] sm:$0xf]
        %v1115 = vld [vmem:[%s1103 + $0x2c] sm:$0xf]
        %v1116 = vld [vmem:[%s1103 + $0x30] sm:$0xf]
        %v1117 = vld [vmem:[%s1103 + $0x34] sm:$0xf]
        %v1118 = vld [vmem:[%s1103 + $0x38] sm:$0xf]
        %v1119 = vld [vmem:[%s1103 + $0x3c] sm:$0xf]
        %v1136 = vunpack.c.l.b16 %v1104
        %v1137 = vunpack.c.l.b16 %v1105
        %v1138 = vunpack.c.l.b16 %v1106
        %v1139 = vunpack.c.l.b16 %v1107
        %v1140 = vunpack.c.l.b16 %v1108
        %v1141 = vunpack.c.l.b16 %v1109
        %v1142 = vunpack.c.l.b16 %v1110
        %v1143 = vunpack.c.l.b16 %v1111
        %v1144 = vunpack.c.l.b16 %v1112
        %v1145 = vunpack.c.l.b16 %v1113
        %v1146 = vunpack.c.l.b16 %v1114
        %v1147 = vunpack.c.l.b16 %v1115
        %v1148 = vunpack.c.l.b16 %v1116
        %v1149 = vunpack.c.l.b16 %v1117
        %v1150 = vunpack.c.l.b16 %v1118
        %v1151 = vunpack.c.l.b16 %v1119
        %v1152 = vpack.c.b16 %v1137, %v1136
        %v1153 = vpack.c.b16 %v1139, %v1138
        %v1154 = vpack.c.b16 %v1141, %v1140
        %v1155 = vpack.c.b16 %v1143, %v1142
        %v1156 = vpack.c.b16 %v1145, %v1144
        %v1157 = vpack.c.b16 %v1147, %v1146
        %v1158 = vpack.c.b16 %v1149, %v1148
        %v1159 = vpack.c.b16 %v1151, %v1150
        %1168 = vmatprep.subr.bf16.mxu0 0
        %1169 = vmatpush1.bf16.msra.mxu0 %v1159
        %1170 = vmatprep.subr.bf16.mxu0 0
        %1171 = vmatpush1.bf16.msra.mxu0 %v1158
        %1172 = vmatprep.subr.bf16.mxu0 0
        %1173 = vmatpush1.bf16.msra.mxu0 %v1157
        %1174 = vmatprep.subr.bf16.mxu0 0
        %1175 = vmatpush1.bf16.msra.mxu0 %v1156
        %1176 = vmatprep.subr.bf16.mxu0 0
        %1177 = vmatpush1.bf16.msra.mxu0 %v1155
        %1178 = vmatprep.subr.bf16.mxu0 0
        %1179 = vmatpush1.bf16.msra.mxu0 %v1154
        %1180 = vmatprep.subr.bf16.mxu0 0
        %1181 = vmatpush1.bf16.msra.mxu0 %v1153
        %1182 = vmatprep.subr.bf16.mxu0 0
        %1183 = vmatpush1.bf16.msra.mxu0 %v1152
        %1184 = vmatprep.subr.bf16.mxu0 0
        %1185 = vmatpush2.bf16.msra.mxu0 0
        %1186 = vmatprep.subr.bf16.mxu0 0
        %1187 = vmatpush2.bf16.msra.mxu0 0
        %1188 = vmatprep.subr.bf16.mxu0 0
        %1189 = vmatpush2.bf16.msra.mxu0 0
        %1190 = vmatprep.subr.bf16.mxu0 0
        %1191 = vmatpush2.bf16.msra.mxu0 0
        %1192 = vmatprep.subr.bf16.mxu0 0
        %1193 = vmatpush2.bf16.msra.mxu0 0
        %1194 = vmatprep.subr.bf16.mxu0 0
        %1195 = vmatpush2.bf16.msra.mxu0 0
        %1196 = vmatprep.subr.bf16.mxu0 0
        %1197 = vmatpush2.bf16.msra.mxu0 0
        %1198 = vmatprep.subr.bf16.mxu0 0
        %1199 = vmatpush2.bf16.msra.mxu0 0
        %1200 = vmatprep.mubr.bf16.mxu0 0
        %1201 = vmatmul.mubr.bf16.gmra.mxu0 %v1102
        %v1202 = vpop.f32.mrf.mxu0
        %v1203 = vadd.f32 0.0, %v1202
        %v1204 = vpop.f32.mrf.mxu0
        %v1205 = vpop.f32.mrf.mxu0
        %v1206 = vadd.f32 0.0, %v1205
        %v1207 = vpop.f32.mrf.mxu0
        %1208 = vdwg.mxu0
        %v1209 = vadd.f32 %v1094, %v1203
        %v1210 = vadd.f32 %v1097, %v1206
        %v1211 = vld [vmem:[#allocation2 + $0x3] sm:$0xff]
        %v1212 = vld [vmem:[#allocation2 + $0xb] sm:$0xff]
        %v1213 = vpack.c.bf16 %v1212, %v1211
        %s1214 = scalar_lea.vmem [#allocation3], 512
        %v1215 = vld [vmem:[%s1214] sm:$0xf]
        %v1216 = vld [vmem:[%s1214 + $0x4] sm:$0xf]
        %v1217 = vld [vmem:[%s1214 + $0x8] sm:$0xf]
        %v1218 = vld [vmem:[%s1214 + $0xc] sm:$0xf]
        %v1219 = vld [vmem:[%s1214 + $0x10] sm:$0xf]
        %v1220 = vld [vmem:[%s1214 + $0x14] sm:$0xf]
        %v1221 = vld [vmem:[%s1214 + $0x18] sm:$0xf]
        %v1222 = vld [vmem:[%s1214 + $0x1c] sm:$0xf]
        %v1223 = vld [vmem:[%s1214 + $0x20] sm:$0xf]
        %v1224 = vld [vmem:[%s1214 + $0x24] sm:$0xf]
        %v1225 = vld [vmem:[%s1214 + $0x28] sm:$0xf]
        %v1226 = vld [vmem:[%s1214 + $0x2c] sm:$0xf]
        %v1227 = vld [vmem:[%s1214 + $0x30] sm:$0xf]
        %v1228 = vld [vmem:[%s1214 + $0x34] sm:$0xf]
        %v1229 = vld [vmem:[%s1214 + $0x38] sm:$0xf]
        %v1230 = vld [vmem:[%s1214 + $0x3c] sm:$0xf]
        %v1247 = vunpack.c.l.b16 %v1215
        %v1248 = vunpack.c.l.b16 %v1216
        %v1249 = vunpack.c.l.b16 %v1217
        %v1250 = vunpack.c.l.b16 %v1218
        %v1251 = vunpack.c.l.b16 %v1219
        %v1252 = vunpack.c.l.b16 %v1220
        %v1253 = vunpack.c.l.b16 %v1221
        %v1254 = vunpack.c.l.b16 %v1222
        %v1255 = vunpack.c.l.b16 %v1223
        %v1256 = vunpack.c.l.b16 %v1224
        %v1257 = vunpack.c.l.b16 %v1225
        %v1258 = vunpack.c.l.b16 %v1226
        %v1259 = vunpack.c.l.b16 %v1227
        %v1260 = vunpack.c.l.b16 %v1228
        %v1261 = vunpack.c.l.b16 %v1229
        %v1262 = vunpack.c.l.b16 %v1230
        %v1263 = vpack.c.b16 %v1248, %v1247
        %v1264 = vpack.c.b16 %v1250, %v1249
        %v1265 = vpack.c.b16 %v1252, %v1251
        %v1266 = vpack.c.b16 %v1254, %v1253
        %v1267 = vpack.c.b16 %v1256, %v1255
        %v1268 = vpack.c.b16 %v1258, %v1257
        %v1269 = vpack.c.b16 %v1260, %v1259
        %v1270 = vpack.c.b16 %v1262, %v1261
        %1279 = vmatprep.subr.bf16.mxu0 0
        %1280 = vmatpush1.bf16.msra.mxu0 %v1270
        %1281 = vmatprep.subr.bf16.mxu0 0
        %1282 = vmatpush1.bf16.msra.mxu0 %v1269
        %1283 = vmatprep.subr.bf16.mxu0 0
        %1284 = vmatpush1.bf16.msra.mxu0 %v1268
        %1285 = vmatprep.subr.bf16.mxu0 0
        %1286 = vmatpush1.bf16.msra.mxu0 %v1267
        %1287 = vmatprep.subr.bf16.mxu0 0
        %1288 = vmatpush1.bf16.msra.mxu0 %v1266
        %1289 = vmatprep.subr.bf16.mxu0 0
        %1290 = vmatpush1.bf16.msra.mxu0 %v1265
        %1291 = vmatprep.subr.bf16.mxu0 0
        %1292 = vmatpush1.bf16.msra.mxu0 %v1264
        %1293 = vmatprep.subr.bf16.mxu0 0
        %1294 = vmatpush1.bf16.msra.mxu0 %v1263
        %1295 = vmatprep.subr.bf16.mxu0 0
        %1296 = vmatpush2.bf16.msra.mxu0 0
        %1297 = vmatprep.subr.bf16.mxu0 0
        %1298 = vmatpush2.bf16.msra.mxu0 0
        %1299 = vmatprep.subr.bf16.mxu0 0
        %1300 = vmatpush2.bf16.msra.mxu0 0
        %1301 = vmatprep.subr.bf16.mxu0 0
        %1302 = vmatpush2.bf16.msra.mxu0 0
        %1303 = vmatprep.subr.bf16.mxu0 0
        %1304 = vmatpush2.bf16.msra.mxu0 0
        %1305 = vmatprep.subr.bf16.mxu0 0
        %1306 = vmatpush2.bf16.msra.mxu0 0
        %1307 = vmatprep.subr.bf16.mxu0 0
        %1308 = vmatpush2.bf16.msra.mxu0 0
        %1309 = vmatprep.subr.bf16.mxu0 0
        %1310 = vmatpush2.bf16.msra.mxu0 0
        %1311 = vmatprep.mubr.bf16.mxu0 0
        %1312 = vmatmul.mubr.bf16.gmra.mxu0 %v1213
        %v1313 = vpop.f32.mrf.mxu0
        %v1314 = vadd.f32 0.0, %v1313
        %v1315 = vpop.f32.mrf.mxu0
        %v1316 = vpop.f32.mrf.mxu0
        %v1317 = vadd.f32 0.0, %v1316
        %v1318 = vpop.f32.mrf.mxu0
        %1319 = vdwg.mxu0
        %v1320 = vadd.f32 %v1209, %v1314
        %v1321 = vadd.f32 %v1210, %v1317
        %v1322 = vld [vmem:[#allocation2 + $0x4] sm:$0xff]
        %v1323 = vld [vmem:[#allocation2 + $0xc] sm:$0xff]
        %v1324 = vpack.c.bf16 %v1323, %v1322
        %s1325 = scalar_lea.vmem [#allocation3], 576
        %v1326 = vld [vmem:[%s1325] sm:$0xf]
        %v1327 = vld [vmem:[%s1325 + $0x4] sm:$0xf]
        %v1328 = vld [vmem:[%s1325 + $0x8] sm:$0xf]
        %v1329 = vld [vmem:[%s1325 + $0xc] sm:$0xf]
        %v1330 = vld [vmem:[%s1325 + $0x10] sm:$0xf]
        %v1331 = vld [vmem:[%s1325 + $0x14] sm:$0xf]
        %v1332 = vld [vmem:[%s1325 + $0x18] sm:$0xf]
        %v1333 = vld [vmem:[%s1325 + $0x1c] sm:$0xf]
        %v1334 = vld [vmem:[%s1325 + $0x20] sm:$0xf]
        %v1335 = vld [vmem:[%s1325 + $0x24] sm:$0xf]
        %v1336 = vld [vmem:[%s1325 + $0x28] sm:$0xf]
        %v1337 = vld [vmem:[%s1325 + $0x2c] sm:$0xf]
        %v1338 = vld [vmem:[%s1325 + $0x30] sm:$0xf]
        %v1339 = vld [vmem:[%s1325 + $0x34] sm:$0xf]
        %v1340 = vld [vmem:[%s1325 + $0x38] sm:$0xf]
        %v1341 = vld [vmem:[%s1325 + $0x3c] sm:$0xf]
        %v1358 = vunpack.c.l.b16 %v1326
        %v1359 = vunpack.c.l.b16 %v1327
        %v1360 = vunpack.c.l.b16 %v1328
        %v1361 = vunpack.c.l.b16 %v1329
        %v1362 = vunpack.c.l.b16 %v1330
        %v1363 = vunpack.c.l.b16 %v1331
        %v1364 = vunpack.c.l.b16 %v1332
        %v1365 = vunpack.c.l.b16 %v1333
        %v1366 = vunpack.c.l.b16 %v1334
        %v1367 = vunpack.c.l.b16 %v1335
        %v1368 = vunpack.c.l.b16 %v1336
        %v1369 = vunpack.c.l.b16 %v1337
        %v1370 = vunpack.c.l.b16 %v1338
        %v1371 = vunpack.c.l.b16 %v1339
        %v1372 = vunpack.c.l.b16 %v1340
        %v1373 = vunpack.c.l.b16 %v1341
        %v1374 = vpack.c.b16 %v1359, %v1358
        %v1375 = vpack.c.b16 %v1361, %v1360
        %v1376 = vpack.c.b16 %v1363, %v1362
        %v1377 = vpack.c.b16 %v1365, %v1364
        %v1378 = vpack.c.b16 %v1367, %v1366
        %v1379 = vpack.c.b16 %v1369, %v1368
        %v1380 = vpack.c.b16 %v1371, %v1370
        %v1381 = vpack.c.b16 %v1373, %v1372
        %1390 = vmatprep.subr.bf16.mxu0 0
        %1391 = vmatpush1.bf16.msra.mxu0 %v1381
        %1392 = vmatprep.subr.bf16.mxu0 0
        %1393 = vmatpush1.bf16.msra.mxu0 %v1380
        %1394 = vmatprep.subr.bf16.mxu0 0
        %1395 = vmatpush1.bf16.msra.mxu0 %v1379
        %1396 = vmatprep.subr.bf16.mxu0 0
        %1397 = vmatpush1.bf16.msra.mxu0 %v1378
        %1398 = vmatprep.subr.bf16.mxu0 0
        %1399 = vmatpush1.bf16.msra.mxu0 %v1377
        %1400 = vmatprep.subr.bf16.mxu0 0
        %1401 = vmatpush1.bf16.msra.mxu0 %v1376
        %1402 = vmatprep.subr.bf16.mxu0 0
        %1403 = vmatpush1.bf16.msra.mxu0 %v1375
        %1404 = vmatprep.subr.bf16.mxu0 0
        %1405 = vmatpush1.bf16.msra.mxu0 %v1374
        %1406 = vmatprep.subr.bf16.mxu0 0
        %1407 = vmatpush2.bf16.msra.mxu0 0
        %1408 = vmatprep.subr.bf16.mxu0 0
        %1409 = vmatpush2.bf16.msra.mxu0 0
        %1410 = vmatprep.subr.bf16.mxu0 0
        %1411 = vmatpush2.bf16.msra.mxu0 0
        %1412 = vmatprep.subr.bf16.mxu0 0
        %1413 = vmatpush2.bf16.msra.mxu0 0
        %1414 = vmatprep.subr.bf16.mxu0 0
        %1415 = vmatpush2.bf16.msra.mxu0 0
        %1416 = vmatprep.subr.bf16.mxu0 0
        %1417 = vmatpush2.bf16.msra.mxu0 0
        %1418 = vmatprep.subr.bf16.mxu0 0
        %1419 = vmatpush2.bf16.msra.mxu0 0
        %1420 = vmatprep.subr.bf16.mxu0 0
        %1421 = vmatpush2.bf16.msra.mxu0 0
        %1422 = vmatprep.mubr.bf16.mxu0 0
        %1423 = vmatmul.mubr.bf16.gmra.mxu0 %v1324
        %v1424 = vpop.f32.mrf.mxu0
        %v1425 = vadd.f32 0.0, %v1424
        %v1426 = vpop.f32.mrf.mxu0
        %v1427 = vpop.f32.mrf.mxu0
        %v1428 = vadd.f32 0.0, %v1427
        %v1429 = vpop.f32.mrf.mxu0
        %1430 = vdwg.mxu0
        %v1431 = vadd.f32 %v1320, %v1425
        %v1432 = vadd.f32 %v1321, %v1428
        %s1433 = scalar_lea.vmem %s2, 1
        %v1434 = vld [vmem:[%s1433] sm:$0x1]
        %v1436 = vlaneseq
        %v1437 = vshrl.u32 %v1436, 7
        %v1438 = vsub.s32 0, %v1437
        %v1439 = vrot.slane %v1434, %v1438
        %v1441 = vadd.f32 %v1431, %v1439
        %v1442 = vadd.f32 %v1432, %v1439
        %v1443 = vmax.f32 %v1441, 0.0
        %v1444 = vmax.f32 %v1442, 0.0
        %s1445 = scalar_lea.vmem %s3, 1
        %v1446 = vld [vmem:[%s1445] sm:$0x1]
        %v1448 = vlaneseq
        %v1449 = vshrl.u32 %v1448, 7
        %v1450 = vsub.s32 0, %v1449
        %v1451 = vrot.slane %v1446, %v1450
        %v1453 = vmul.f32 %v1443, %v1451
        %v1454 = vmul.f32 %v1444, %v1451
        %s1455 = scalar_lea.vmem %s4, 1
        %v1456 = vld [vmem:[%s1455] sm:$0x1]
        %v1458 = vlaneseq
        %v1459 = vshrl.u32 %v1458, 7
        %v1460 = vsub.s32 0, %v1459
        %v1461 = vrot.slane %v1456, %v1460
        %v1463 = vadd.f32 %v1453, %v1461
        %v1464 = vadd.f32 %v1454, %v1461
        %1465 = vst [vmem:[#allocation2 + $0x2] sm:$0xff] %v1463
        %1466 = vst [vmem:[#allocation2 + $0xa] sm:$0xff] %v1464
        %v1467 = vld [vmem:[#allocation2] sm:$0xff]
        %v1468 = vld [vmem:[#allocation2 + $0x8] sm:$0xff]
        %v1469 = vpack.c.bf16 %v1468, %v1467
        %s1470 = scalar_lea.vmem [#allocation3], 640
        %v1471 = vld [vmem:[%s1470] sm:$0xf]
        %v1472 = vld [vmem:[%s1470 + $0x4] sm:$0xf]
        %v1473 = vld [vmem:[%s1470 + $0x8] sm:$0xf]
        %v1474 = vld [vmem:[%s1470 + $0xc] sm:$0xf]
        %v1475 = vld [vmem:[%s1470 + $0x10] sm:$0xf]
        %v1476 = vld [vmem:[%s1470 + $0x14] sm:$0xf]
        %v1477 = vld [vmem:[%s1470 + $0x18] sm:$0xf]
        %v1478 = vld [vmem:[%s1470 + $0x1c] sm:$0xf]
        %v1479 = vld [vmem:[%s1470 + $0x20] sm:$0xf]
        %v1480 = vld [vmem:[%s1470 + $0x24] sm:$0xf]
        %v1481 = vld [vmem:[%s1470 + $0x28] sm:$0xf]
        %v1482 = vld [vmem:[%s1470 + $0x2c] sm:$0xf]
        %v1483 = vld [vmem:[%s1470 + $0x30] sm:$0xf]
        %v1484 = vld [vmem:[%s1470 + $0x34] sm:$0xf]
        %v1485 = vld [vmem:[%s1470 + $0x38] sm:$0xf]
        %v1486 = vld [vmem:[%s1470 + $0x3c] sm:$0xf]
        %v1487 = vld [vmem:[#allocation2 + $0x1] sm:$0xff]
        %v1488 = vld [vmem:[#allocation2 + $0x9] sm:$0xff]
        %v1489 = vpack.c.bf16 %v1488, %v1487
        %s1490 = scalar_lea.vmem [#allocation3], 704
        %v1491 = vld [vmem:[%s1490] sm:$0xf]
        %v1492 = vld [vmem:[%s1490 + $0x4] sm:$0xf]
        %v1493 = vld [vmem:[%s1490 + $0x8] sm:$0xf]
        %v1494 = vld [vmem:[%s1490 + $0xc] sm:$0xf]
        %v1495 = vld [vmem:[%s1490 + $0x10] sm:$0xf]
        %v1496 = vld [vmem:[%s1490 + $0x14] sm:$0xf]
        %v1497 = vld [vmem:[%s1490 + $0x18] sm:$0xf]
        %v1498 = vld [vmem:[%s1490 + $0x1c] sm:$0xf]
        %v1499 = vld [vmem:[%s1490 + $0x20] sm:$0xf]
        %v1500 = vld [vmem:[%s1490 + $0x24] sm:$0xf]
        %v1501 = vld [vmem:[%s1490 + $0x28] sm:$0xf]
        %v1502 = vld [vmem:[%s1490 + $0x2c] sm:$0xf]
        %v1503 = vld [vmem:[%s1490 + $0x30] sm:$0xf]
        %v1504 = vld [vmem:[%s1490 + $0x34] sm:$0xf]
        %v1505 = vld [vmem:[%s1490 + $0x38] sm:$0xf]
        %v1506 = vld [vmem:[%s1490 + $0x3c] sm:$0xf]
        %v1523 = vunpack.c.l.b16 %v1491
        %v1524 = vunpack.c.l.b16 %v1492
        %v1525 = vunpack.c.l.b16 %v1493
        %v1526 = vunpack.c.l.b16 %v1494
        %v1527 = vunpack.c.l.b16 %v1495
        %v1528 = vunpack.c.l.b16 %v1496
        %v1529 = vunpack.c.l.b16 %v1497
        %v1530 = vunpack.c.l.b16 %v1498
        %v1531 = vunpack.c.l.b16 %v1499
        %v1532 = vunpack.c.l.b16 %v1500
        %v1533 = vunpack.c.l.b16 %v1501
        %v1534 = vunpack.c.l.b16 %v1502
        %v1535 = vunpack.c.l.b16 %v1503
        %v1536 = vunpack.c.l.b16 %v1504
        %v1537 = vunpack.c.l.b16 %v1505
        %v1538 = vunpack.c.l.b16 %v1506
        %v1539 = vpack.c.b16 %v1524, %v1523
        %v1540 = vpack.c.b16 %v1526, %v1525
        %v1541 = vpack.c.b16 %v1528, %v1527
        %v1542 = vpack.c.b16 %v1530, %v1529
        %v1543 = vpack.c.b16 %v1532, %v1531
        %v1544 = vpack.c.b16 %v1534, %v1533
        %v1545 = vpack.c.b16 %v1536, %v1535
        %v1546 = vpack.c.b16 %v1538, %v1537
        %1555 = vmatprep.subr.bf16.mxu0 0
        %1556 = vmatpush1.bf16.msra.mxu0 %v1546
        %1557 = vmatprep.subr.bf16.mxu0 0
        %1558 = vmatpush1.bf16.msra.mxu0 %v1545
        %1559 = vmatprep.subr.bf16.mxu0 0
        %1560 = vmatpush1.bf16.msra.mxu0 %v1544
        %1561 = vmatprep.subr.bf16.mxu0 0
        %1562 = vmatpush1.bf16.msra.mxu0 %v1543
        %1563 = vmatprep.subr.bf16.mxu0 0
        %1564 = vmatpush1.bf16.msra.mxu0 %v1542
        %1565 = vmatprep.subr.bf16.mxu0 0
        %1566 = vmatpush1.bf16.msra.mxu0 %v1541
        %1567 = vmatprep.subr.bf16.mxu0 0
        %1568 = vmatpush1.bf16.msra.mxu0 %v1540
        %1569 = vmatprep.subr.bf16.mxu0 0
        %1570 = vmatpush1.bf16.msra.mxu0 %v1539
        %1571 = vmatprep.subr.bf16.mxu0 0
        %1572 = vmatpush2.bf16.msra.mxu0 0
        %1573 = vmatprep.subr.bf16.mxu0 0
        %1574 = vmatpush2.bf16.msra.mxu0 0
        %1575 = vmatprep.subr.bf16.mxu0 0
        %1576 = vmatpush2.bf16.msra.mxu0 0
        %1577 = vmatprep.subr.bf16.mxu0 0
        %1578 = vmatpush2.bf16.msra.mxu0 0
        %1579 = vmatprep.subr.bf16.mxu0 0
        %1580 = vmatpush2.bf16.msra.mxu0 0
        %1581 = vmatprep.subr.bf16.mxu0 0
        %1582 = vmatpush2.bf16.msra.mxu0 0
        %1583 = vmatprep.subr.bf16.mxu0 0
        %1584 = vmatpush2.bf16.msra.mxu0 0
        %1585 = vmatprep.subr.bf16.mxu0 0
        %1586 = vmatpush2.bf16.msra.mxu0 0
        %1587 = vmatprep.mubr.bf16.mxu0 0
        %1588 = vmatmul.mubr.bf16.gmra.mxu0 %v1489
        %v1589 = vpop.f32.mrf.mxu0
        %v1590 = vadd.f32 0.0, %v1589
        %v1591 = vpop.f32.mrf.mxu0
        %v1592 = vpop.f32.mrf.mxu0
        %v1593 = vadd.f32 0.0, %v1592
        %v1594 = vpop.f32.mrf.mxu0
        %1595 = vdwg.mxu0
        %v1612 = vunpack.c.l.b16 %v1471
        %v1613 = vunpack.c.l.b16 %v1472
        %v1614 = vunpack.c.l.b16 %v1473
        %v1615 = vunpack.c.l.b16 %v1474
        %v1616 = vunpack.c.l.b16 %v1475
        %v1617 = vunpack.c.l.b16 %v1476
        %v1618 = vunpack.c.l.b16 %v1477
        %v1619 = vunpack.c.l.b16 %v1478
        %v1620 = vunpack.c.l.b16 %v1479
        %v1621 = vunpack.c.l.b16 %v1480
        %v1622 = vunpack.c.l.b16 %v1481
        %v1623 = vunpack.c.l.b16 %v1482
        %v1624 = vunpack.c.l.b16 %v1483
        %v1625 = vunpack.c.l.b16 %v1484
        %v1626 = vunpack.c.l.b16 %v1485
        %v1627 = vunpack.c.l.b16 %v1486
        %v1628 = vpack.c.b16 %v1613, %v1612
        %v1629 = vpack.c.b16 %v1615, %v1614
        %v1630 = vpack.c.b16 %v1617, %v1616
        %v1631 = vpack.c.b16 %v1619, %v1618
        %v1632 = vpack.c.b16 %v1621, %v1620
        %v1633 = vpack.c.b16 %v1623, %v1622
        %v1634 = vpack.c.b16 %v1625, %v1624
        %v1635 = vpack.c.b16 %v1627, %v1626
        %1644 = vmatprep.subr.bf16.mxu0 0
        %1645 = vmatpush1.bf16.msra.mxu0 %v1635
        %1646 = vmatprep.subr.bf16.mxu0 0
        %1647 = vmatpush1.bf16.msra.mxu0 %v1634
        %1648 = vmatprep.subr.bf16.mxu0 0
        %1649 = vmatpush1.bf16.msra.mxu0 %v1633
        %1650 = vmatprep.subr.bf16.mxu0 0
        %1651 = vmatpush1.bf16.msra.mxu0 %v1632
        %1652 = vmatprep.subr.bf16.mxu0 0
        %1653 = vmatpush1.bf16.msra.mxu0 %v1631
        %1654 = vmatprep.subr.bf16.mxu0 0
        %1655 = vmatpush1.bf16.msra.mxu0 %v1630
        %1656 = vmatprep.subr.bf16.mxu0 0
        %1657 = vmatpush1.bf16.msra.mxu0 %v1629
        %1658 = vmatprep.subr.bf16.mxu0 0
        %1659 = vmatpush1.bf16.msra.mxu0 %v1628
        %1660 = vmatprep.subr.bf16.mxu0 0
        %1661 = vmatpush2.bf16.msra.mxu0 0
        %1662 = vmatprep.subr.bf16.mxu0 0
        %1663 = vmatpush2.bf16.msra.mxu0 0
        %1664 = vmatprep.subr.bf16.mxu0 0
        %1665 = vmatpush2.bf16.msra.mxu0 0
        %1666 = vmatprep.subr.bf16.mxu0 0
        %1667 = vmatpush2.bf16.msra.mxu0 0
        %1668 = vmatprep.subr.bf16.mxu0 0
        %1669 = vmatpush2.bf16.msra.mxu0 0
        %1670 = vmatprep.subr.bf16.mxu0 0
        %1671 = vmatpush2.bf16.msra.mxu0 0
        %1672 = vmatprep.subr.bf16.mxu0 0
        %1673 = vmatpush2.bf16.msra.mxu0 0
        %1674 = vmatprep.subr.bf16.mxu0 0
        %1675 = vmatpush2.bf16.msra.mxu0 0
        %1676 = vmatprep.mubr.bf16.mxu0 0
        %1677 = vmatmul.mubr.bf16.gmra.mxu0 %v1469
        %v1678 = vpop.f32.mrf.mxu0
        %v1679 = vadd.f32 %v1590, %v1678
        %v1680 = vpop.f32.mrf.mxu0
        %v1681 = vpop.f32.mrf.mxu0
        %v1682 = vadd.f32 %v1593, %v1681
        %v1683 = vpop.f32.mrf.mxu0
        %1684 = vdwg.mxu0
        %v1685 = vld [vmem:[#allocation2 + $0x2] sm:$0xff]
        %v1686 = vld [vmem:[#allocation2 + $0xa] sm:$0xff]
        %v1687 = vpack.c.bf16 %v1686, %v1685
        %s1688 = scalar_lea.vmem [#allocation3], 768
        %v1689 = vld [vmem:[%s1688] sm:$0xf]
        %v1690 = vld [vmem:[%s1688 + $0x4] sm:$0xf]
        %v1691 = vld [vmem:[%s1688 + $0x8] sm:$0xf]
        %v1692 = vld [vmem:[%s1688 + $0xc] sm:$0xf]
        %v1693 = vld [vmem:[%s1688 + $0x10] sm:$0xf]
        %v1694 = vld [vmem:[%s1688 + $0x14] sm:$0xf]
        %v1695 = vld [vmem:[%s1688 + $0x18] sm:$0xf]
        %v1696 = vld [vmem:[%s1688 + $0x1c] sm:$0xf]
        %v1697 = vld [vmem:[%s1688 + $0x20] sm:$0xf]
        %v1698 = vld [vmem:[%s1688 + $0x24] sm:$0xf]
        %v1699 = vld [vmem:[%s1688 + $0x28] sm:$0xf]
        %v1700 = vld [vmem:[%s1688 + $0x2c] sm:$0xf]
        %v1701 = vld [vmem:[%s1688 + $0x30] sm:$0xf]
        %v1702 = vld [vmem:[%s1688 + $0x34] sm:$0xf]
        %v1703 = vld [vmem:[%s1688 + $0x38] sm:$0xf]
        %v1704 = vld [vmem:[%s1688 + $0x3c] sm:$0xf]
        %v1721 = vunpack.c.l.b16 %v1689
        %v1722 = vunpack.c.l.b16 %v1690
        %v1723 = vunpack.c.l.b16 %v1691
        %v1724 = vunpack.c.l.b16 %v1692
        %v1725 = vunpack.c.l.b16 %v1693
        %v1726 = vunpack.c.l.b16 %v1694
        %v1727 = vunpack.c.l.b16 %v1695
        %v1728 = vunpack.c.l.b16 %v1696
        %v1729 = vunpack.c.l.b16 %v1697
        %v1730 = vunpack.c.l.b16 %v1698
        %v1731 = vunpack.c.l.b16 %v1699
        %v1732 = vunpack.c.l.b16 %v1700
        %v1733 = vunpack.c.l.b16 %v1701
        %v1734 = vunpack.c.l.b16 %v1702
        %v1735 = vunpack.c.l.b16 %v1703
        %v1736 = vunpack.c.l.b16 %v1704
        %v1737 = vpack.c.b16 %v1722, %v1721
        %v1738 = vpack.c.b16 %v1724, %v1723
        %v1739 = vpack.c.b16 %v1726, %v1725
        %v1740 = vpack.c.b16 %v1728, %v1727
        %v1741 = vpack.c.b16 %v1730, %v1729
        %v1742 = vpack.c.b16 %v1732, %v1731
        %v1743 = vpack.c.b16 %v1734, %v1733
        %v1744 = vpack.c.b16 %v1736, %v1735
        %1753 = vmatprep.subr.bf16.mxu0 0
        %1754 = vmatpush1.bf16.msra.mxu0 %v1744
        %1755 = vmatprep.subr.bf16.mxu0 0
        %1756 = vmatpush1.bf16.msra.mxu0 %v1743
        %1757 = vmatprep.subr.bf16.mxu0 0
        %1758 = vmatpush1.bf16.msra.mxu0 %v1742
        %1759 = vmatprep.subr.bf16.mxu0 0
        %1760 = vmatpush1.bf16.msra.mxu0 %v1741
        %1761 = vmatprep.subr.bf16.mxu0 0
        %1762 = vmatpush1.bf16.msra.mxu0 %v1740
        %1763 = vmatprep.subr.bf16.mxu0 0
        %1764 = vmatpush1.bf16.msra.mxu0 %v1739
        %1765 = vmatprep.subr.bf16.mxu0 0
        %1766 = vmatpush1.bf16.msra.mxu0 %v1738
        %1767 = vmatprep.subr.bf16.mxu0 0
        %1768 = vmatpush1.bf16.msra.mxu0 %v1737
        %1769 = vmatprep.subr.bf16.mxu0 0
        %1770 = vmatpush2.bf16.msra.mxu0 0
        %1771 = vmatprep.subr.bf16.mxu0 0
        %1772 = vmatpush2.bf16.msra.mxu0 0
        %1773 = vmatprep.subr.bf16.mxu0 0
        %1774 = vmatpush2.bf16.msra.mxu0 0
        %1775 = vmatprep.subr.bf16.mxu0 0
        %1776 = vmatpush2.bf16.msra.mxu0 0
        %1777 = vmatprep.subr.bf16.mxu0 0
        %1778 = vmatpush2.bf16.msra.mxu0 0
        %1779 = vmatprep.subr.bf16.mxu0 0
        %1780 = vmatpush2.bf16.msra.mxu0 0
        %1781 = vmatprep.subr.bf16.mxu0 0
        %1782 = vmatpush2.bf16.msra.mxu0 0
        %1783 = vmatprep.subr.bf16.mxu0 0
        %1784 = vmatpush2.bf16.msra.mxu0 0
        %1785 = vmatprep.mubr.bf16.mxu0 0
        %1786 = vmatmul.mubr.bf16.gmra.mxu0 %v1687
        %v1787 = vpop.f32.mrf.mxu0
        %v1788 = vadd.f32 0.0, %v1787
        %v1789 = vpop.f32.mrf.mxu0
        %v1790 = vpop.f32.mrf.mxu0
        %v1791 = vadd.f32 0.0, %v1790
        %v1792 = vpop.f32.mrf.mxu0
        %1793 = vdwg.mxu0
        %v1794 = vadd.f32 %v1679, %v1788
        %v1795 = vadd.f32 %v1682, %v1791
        %v1796 = vld [vmem:[#allocation2 + $0x3] sm:$0xff]
        %v1797 = vld [vmem:[#allocation2 + $0xb] sm:$0xff]
        %v1798 = vpack.c.bf16 %v1797, %v1796
        %s1799 = scalar_lea.vmem [#allocation3], 832
        %v1800 = vld [vmem:[%s1799] sm:$0xf]
        %v1801 = vld [vmem:[%s1799 + $0x4] sm:$0xf]
        %v1802 = vld [vmem:[%s1799 + $0x8] sm:$0xf]
        %v1803 = vld [vmem:[%s1799 + $0xc] sm:$0xf]
        %v1804 = vld [vmem:[%s1799 + $0x10] sm:$0xf]
        %v1805 = vld [vmem:[%s1799 + $0x14] sm:$0xf]
        %v1806 = vld [vmem:[%s1799 + $0x18] sm:$0xf]
        %v1807 = vld [vmem:[%s1799 + $0x1c] sm:$0xf]
        %v1808 = vld [vmem:[%s1799 + $0x20] sm:$0xf]
        %v1809 = vld [vmem:[%s1799 + $0x24] sm:$0xf]
        %v1810 = vld [vmem:[%s1799 + $0x28] sm:$0xf]
        %v1811 = vld [vmem:[%s1799 + $0x2c] sm:$0xf]
        %v1812 = vld [vmem:[%s1799 + $0x30] sm:$0xf]
        %v1813 = vld [vmem:[%s1799 + $0x34] sm:$0xf]
        %v1814 = vld [vmem:[%s1799 + $0x38] sm:$0xf]
        %v1815 = vld [vmem:[%s1799 + $0x3c] sm:$0xf]
        %v1832 = vunpack.c.l.b16 %v1800
        %v1833 = vunpack.c.l.b16 %v1801
        %v1834 = vunpack.c.l.b16 %v1802
        %v1835 = vunpack.c.l.b16 %v1803
        %v1836 = vunpack.c.l.b16 %v1804
        %v1837 = vunpack.c.l.b16 %v1805
        %v1838 = vunpack.c.l.b16 %v1806
        %v1839 = vunpack.c.l.b16 %v1807
        %v1840 = vunpack.c.l.b16 %v1808
        %v1841 = vunpack.c.l.b16 %v1809
        %v1842 = vunpack.c.l.b16 %v1810
        %v1843 = vunpack.c.l.b16 %v1811
        %v1844 = vunpack.c.l.b16 %v1812
        %v1845 = vunpack.c.l.b16 %v1813
        %v1846 = vunpack.c.l.b16 %v1814
        %v1847 = vunpack.c.l.b16 %v1815
        %v1848 = vpack.c.b16 %v1833, %v1832
        %v1849 = vpack.c.b16 %v1835, %v1834
        %v1850 = vpack.c.b16 %v1837, %v1836
        %v1851 = vpack.c.b16 %v1839, %v1838
        %v1852 = vpack.c.b16 %v1841, %v1840
        %v1853 = vpack.c.b16 %v1843, %v1842
        %v1854 = vpack.c.b16 %v1845, %v1844
        %v1855 = vpack.c.b16 %v1847, %v1846
        %1864 = vmatprep.subr.bf16.mxu0 0
        %1865 = vmatpush1.bf16.msra.mxu0 %v1855
        %1866 = vmatprep.subr.bf16.mxu0 0
        %1867 = vmatpush1.bf16.msra.mxu0 %v1854
        %1868 = vmatprep.subr.bf16.mxu0 0
        %1869 = vmatpush1.bf16.msra.mxu0 %v1853
        %1870 = vmatprep.subr.bf16.mxu0 0
        %1871 = vmatpush1.bf16.msra.mxu0 %v1852
        %1872 = vmatprep.subr.bf16.mxu0 0
        %1873 = vmatpush1.bf16.msra.mxu0 %v1851
        %1874 = vmatprep.subr.bf16.mxu0 0
        %1875 = vmatpush1.bf16.msra.mxu0 %v1850
        %1876 = vmatprep.subr.bf16.mxu0 0
        %1877 = vmatpush1.bf16.msra.mxu0 %v1849
        %1878 = vmatprep.subr.bf16.mxu0 0
        %1879 = vmatpush1.bf16.msra.mxu0 %v1848
        %1880 = vmatprep.subr.bf16.mxu0 0
        %1881 = vmatpush2.bf16.msra.mxu0 0
        %1882 = vmatprep.subr.bf16.mxu0 0
        %1883 = vmatpush2.bf16.msra.mxu0 0
        %1884 = vmatprep.subr.bf16.mxu0 0
        %1885 = vmatpush2.bf16.msra.mxu0 0
        %1886 = vmatprep.subr.bf16.mxu0 0
        %1887 = vmatpush2.bf16.msra.mxu0 0
        %1888 = vmatprep.subr.bf16.mxu0 0
        %1889 = vmatpush2.bf16.msra.mxu0 0
        %1890 = vmatprep.subr.bf16.mxu0 0
        %1891 = vmatpush2.bf16.msra.mxu0 0
        %1892 = vmatprep.subr.bf16.mxu0 0
        %1893 = vmatpush2.bf16.msra.mxu0 0
        %1894 = vmatprep.subr.bf16.mxu0 0
        %1895 = vmatpush2.bf16.msra.mxu0 0
        %1896 = vmatprep.mubr.bf16.mxu0 0
        %1897 = vmatmul.mubr.bf16.gmra.mxu0 %v1798
        %v1898 = vpop.f32.mrf.mxu0
        %v1899 = vadd.f32 0.0, %v1898
        %v1900 = vpop.f32.mrf.mxu0
        %v1901 = vpop.f32.mrf.mxu0
        %v1902 = vadd.f32 0.0, %v1901
        %v1903 = vpop.f32.mrf.mxu0
        %1904 = vdwg.mxu0
        %v1905 = vadd.f32 %v1794, %v1899
        %v1906 = vadd.f32 %v1795, %v1902
        %v1907 = vld [vmem:[#allocation2 + $0x4] sm:$0xff]
        %v1908 = vld [vmem:[#allocation2 + $0xc] sm:$0xff]
        %v1909 = vpack.c.bf16 %v1908, %v1907
        %s1910 = scalar_lea.vmem [#allocation3], 896
        %v1911 = vld [vmem:[%s1910] sm:$0xf]
        %v1912 = vld [vmem:[%s1910 + $0x4] sm:$0xf]
        %v1913 = vld [vmem:[%s1910 + $0x8] sm:$0xf]
        %v1914 = vld [vmem:[%s1910 + $0xc] sm:$0xf]
        %v1915 = vld [vmem:[%s1910 + $0x10] sm:$0xf]
        %v1916 = vld [vmem:[%s1910 + $0x14] sm:$0xf]
        %v1917 = vld [vmem:[%s1910 + $0x18] sm:$0xf]
        %v1918 = vld [vmem:[%s1910 + $0x1c] sm:$0xf]
        %v1919 = vld [vmem:[%s1910 + $0x20] sm:$0xf]
        %v1920 = vld [vmem:[%s1910 + $0x24] sm:$0xf]
        %v1921 = vld [vmem:[%s1910 + $0x28] sm:$0xf]
        %v1922 = vld [vmem:[%s1910 + $0x2c] sm:$0xf]
        %v1923 = vld [vmem:[%s1910 + $0x30] sm:$0xf]
        %v1924 = vld [vmem:[%s1910 + $0x34] sm:$0xf]
        %v1925 = vld [vmem:[%s1910 + $0x38] sm:$0xf]
        %v1926 = vld [vmem:[%s1910 + $0x3c] sm:$0xf]
        %v1943 = vunpack.c.l.b16 %v1911
        %v1944 = vunpack.c.l.b16 %v1912
        %v1945 = vunpack.c.l.b16 %v1913
        %v1946 = vunpack.c.l.b16 %v1914
        %v1947 = vunpack.c.l.b16 %v1915
        %v1948 = vunpack.c.l.b16 %v1916
        %v1949 = vunpack.c.l.b16 %v1917
        %v1950 = vunpack.c.l.b16 %v1918
        %v1951 = vunpack.c.l.b16 %v1919
        %v1952 = vunpack.c.l.b16 %v1920
        %v1953 = vunpack.c.l.b16 %v1921
        %v1954 = vunpack.c.l.b16 %v1922
        %v1955 = vunpack.c.l.b16 %v1923
        %v1956 = vunpack.c.l.b16 %v1924
        %v1957 = vunpack.c.l.b16 %v1925
        %v1958 = vunpack.c.l.b16 %v1926
        %v1959 = vpack.c.b16 %v1944, %v1943
        %v1960 = vpack.c.b16 %v1946, %v1945
        %v1961 = vpack.c.b16 %v1948, %v1947
        %v1962 = vpack.c.b16 %v1950, %v1949
        %v1963 = vpack.c.b16 %v1952, %v1951
        %v1964 = vpack.c.b16 %v1954, %v1953
        %v1965 = vpack.c.b16 %v1956, %v1955
        %v1966 = vpack.c.b16 %v1958, %v1957
        %1975 = vmatprep.subr.bf16.mxu0 0
        %1976 = vmatpush1.bf16.msra.mxu0 %v1966
        %1977 = vmatprep.subr.bf16.mxu0 0
        %1978 = vmatpush1.bf16.msra.mxu0 %v1965
        %1979 = vmatprep.subr.bf16.mxu0 0
        %1980 = vmatpush1.bf16.msra.mxu0 %v1964
        %1981 = vmatprep.subr.bf16.mxu0 0
        %1982 = vmatpush1.bf16.msra.mxu0 %v1963
        %1983 = vmatprep.subr.bf16.mxu0 0
        %1984 = vmatpush1.bf16.msra.mxu0 %v1962
        %1985 = vmatprep.subr.bf16.mxu0 0
        %1986 = vmatpush1.bf16.msra.mxu0 %v1961
        %1987 = vmatprep.subr.bf16.mxu0 0
        %1988 = vmatpush1.bf16.msra.mxu0 %v1960
        %1989 = vmatprep.subr.bf16.mxu0 0
        %1990 = vmatpush1.bf16.msra.mxu0 %v1959
        %1991 = vmatprep.subr.bf16.mxu0 0
        %1992 = vmatpush2.bf16.msra.mxu0 0
        %1993 = vmatprep.subr.bf16.mxu0 0
        %1994 = vmatpush2.bf16.msra.mxu0 0
        %1995 = vmatprep.subr.bf16.mxu0 0
        %1996 = vmatpush2.bf16.msra.mxu0 0
        %1997 = vmatprep.subr.bf16.mxu0 0
        %1998 = vmatpush2.bf16.msra.mxu0 0
        %1999 = vmatprep.subr.bf16.mxu0 0
        %2000 = vmatpush2.bf16.msra.mxu0 0
        %2001 = vmatprep.subr.bf16.mxu0 0
        %2002 = vmatpush2.bf16.msra.mxu0 0
        %2003 = vmatprep.subr.bf16.mxu0 0
        %2004 = vmatpush2.bf16.msra.mxu0 0
        %2005 = vmatprep.subr.bf16.mxu0 0
        %2006 = vmatpush2.bf16.msra.mxu0 0
        %2007 = vmatprep.mubr.bf16.mxu0 0
        %2008 = vmatmul.mubr.bf16.gmra.mxu0 %v1909
        %v2009 = vpop.f32.mrf.mxu0
        %v2010 = vadd.f32 0.0, %v2009
        %v2011 = vpop.f32.mrf.mxu0
        %v2012 = vpop.f32.mrf.mxu0
        %v2013 = vadd.f32 0.0, %v2012
        %v2014 = vpop.f32.mrf.mxu0
        %2015 = vdwg.mxu0
        %v2016 = vadd.f32 %v1905, %v2010
        %v2017 = vadd.f32 %v1906, %v2013
        %s2018 = scalar_lea.vmem %s2, 2
        %v2019 = vld [vmem:[%s2018] sm:$0x1]
        %v2021 = vlaneseq
        %v2022 = vshrl.u32 %v2021, 7
        %v2023 = vsub.s32 0, %v2022
        %v2024 = vrot.slane %v2019, %v2023
        %v2026 = vadd.f32 %v2016, %v2024
        %v2027 = vadd.f32 %v2017, %v2024
        %v2028 = vmax.f32 %v2026, 0.0
        %v2029 = vmax.f32 %v2027, 0.0
        %s2030 = scalar_lea.vmem %s3, 2
        %v2031 = vld [vmem:[%s2030] sm:$0x1]
        %v2033 = vlaneseq
        %v2034 = vshrl.u32 %v2033, 7
        %v2035 = vsub.s32 0, %v2034
        %v2036 = vrot.slane %v2031, %v2035
        %v2038 = vmul.f32 %v2028, %v2036
        %v2039 = vmul.f32 %v2029, %v2036
        %s2040 = scalar_lea.vmem %s4, 2
        %v2041 = vld [vmem:[%s2040] sm:$0x1]
        %v2043 = vlaneseq
        %v2044 = vshrl.u32 %v2043, 7
        %v2045 = vsub.s32 0, %v2044
        %v2046 = vrot.slane %v2041, %v2045
        %v2048 = vadd.f32 %v2038, %v2046
        %v2049 = vadd.f32 %v2039, %v2046
        %2050 = vst [vmem:[#allocation2 + $0x2] sm:$0xff] %v2048
        %2051 = vst [vmem:[#allocation2 + $0xa] sm:$0xff] %v2049
        %v2052 = vld [vmem:[#allocation2] sm:$0xff]
        %v2053 = vld [vmem:[#allocation2 + $0x8] sm:$0xff]
        %v2054 = vpack.c.bf16 %v2053, %v2052
        %s2055 = scalar_lea.vmem [#allocation3], 960
        %v2056 = vld [vmem:[%s2055] sm:$0xf]
        %v2057 = vld [vmem:[%s2055 + $0x4] sm:$0xf]
        %v2058 = vld [vmem:[%s2055 + $0x8] sm:$0xf]
        %v2059 = vld [vmem:[%s2055 + $0xc] sm:$0xf]
        %v2060 = vld [vmem:[%s2055 + $0x10] sm:$0xf]
        %v2061 = vld [vmem:[%s2055 + $0x14] sm:$0xf]
        %v2062 = vld [vmem:[%s2055 + $0x18] sm:$0xf]
        %v2063 = vld [vmem:[%s2055 + $0x1c] sm:$0xf]
        %v2064 = vld [vmem:[%s2055 + $0x20] sm:$0xf]
        %v2065 = vld [vmem:[%s2055 + $0x24] sm:$0xf]
        %v2066 = vld [vmem:[%s2055 + $0x28] sm:$0xf]
        %v2067 = vld [vmem:[%s2055 + $0x2c] sm:$0xf]
        %v2068 = vld [vmem:[%s2055 + $0x30] sm:$0xf]
        %v2069 = vld [vmem:[%s2055 + $0x34] sm:$0xf]
        %v2070 = vld [vmem:[%s2055 + $0x38] sm:$0xf]
        %v2071 = vld [vmem:[%s2055 + $0x3c] sm:$0xf]
        %v2072 = vld [vmem:[#allocation2 + $0x1] sm:$0xff]
        %v2073 = vld [vmem:[#allocation2 + $0x9] sm:$0xff]
        %v2074 = vpack.c.bf16 %v2073, %v2072
        %s2075 = scalar_lea.vmem [#allocation3], 1024
        %v2076 = vld [vmem:[%s2075] sm:$0xf]
        %v2077 = vld [vmem:[%s2075 + $0x4] sm:$0xf]
        %v2078 = vld [vmem:[%s2075 + $0x8] sm:$0xf]
        %v2079 = vld [vmem:[%s2075 + $0xc] sm:$0xf]
        %v2080 = vld [vmem:[%s2075 + $0x10] sm:$0xf]
        %v2081 = vld [vmem:[%s2075 + $0x14] sm:$0xf]
        %v2082 = vld [vmem:[%s2075 + $0x18] sm:$0xf]
        %v2083 = vld [vmem:[%s2075 + $0x1c] sm:$0xf]
        %v2084 = vld [vmem:[%s2075 + $0x20] sm:$0xf]
        %v2085 = vld [vmem:[%s2075 + $0x24] sm:$0xf]
        %v2086 = vld [vmem:[%s2075 + $0x28] sm:$0xf]
        %v2087 = vld [vmem:[%s2075 + $0x2c] sm:$0xf]
        %v2088 = vld [vmem:[%s2075 + $0x30] sm:$0xf]
        %v2089 = vld [vmem:[%s2075 + $0x34] sm:$0xf]
        %v2090 = vld [vmem:[%s2075 + $0x38] sm:$0xf]
        %v2091 = vld [vmem:[%s2075 + $0x3c] sm:$0xf]
        %v2108 = vunpack.c.l.b16 %v2076
        %v2109 = vunpack.c.l.b16 %v2077
        %v2110 = vunpack.c.l.b16 %v2078
        %v2111 = vunpack.c.l.b16 %v2079
        %v2112 = vunpack.c.l.b16 %v2080
        %v2113 = vunpack.c.l.b16 %v2081
        %v2114 = vunpack.c.l.b16 %v2082
        %v2115 = vunpack.c.l.b16 %v2083
        %v2116 = vunpack.c.l.b16 %v2084
        %v2117 = vunpack.c.l.b16 %v2085
        %v2118 = vunpack.c.l.b16 %v2086
        %v2119 = vunpack.c.l.b16 %v2087
        %v2120 = vunpack.c.l.b16 %v2088
        %v2121 = vunpack.c.l.b16 %v2089
        %v2122 = vunpack.c.l.b16 %v2090
        %v2123 = vunpack.c.l.b16 %v2091
        %v2124 = vpack.c.b16 %v2109, %v2108
        %v2125 = vpack.c.b16 %v2111, %v2110
        %v2126 = vpack.c.b16 %v2113, %v2112
        %v2127 = vpack.c.b16 %v2115, %v2114
        %v2128 = vpack.c.b16 %v2117, %v2116
        %v2129 = vpack.c.b16 %v2119, %v2118
        %v2130 = vpack.c.b16 %v2121, %v2120
        %v2131 = vpack.c.b16 %v2123, %v2122
        %2140 = vmatprep.subr.bf16.mxu0 0
        %2141 = vmatpush1.bf16.msra.mxu0 %v2131
        %2142 = vmatprep.subr.bf16.mxu0 0
        %2143 = vmatpush1.bf16.msra.mxu0 %v2130
        %2144 = vmatprep.subr.bf16.mxu0 0
        %2145 = vmatpush1.bf16.msra.mxu0 %v2129
        %2146 = vmatprep.subr.bf16.mxu0 0
        %2147 = vmatpush1.bf16.msra.mxu0 %v2128
        %2148 = vmatprep.subr.bf16.mxu0 0
        %2149 = vmatpush1.bf16.msra.mxu0 %v2127
        %2150 = vmatprep.subr.bf16.mxu0 0
        %2151 = vmatpush1.bf16.msra.mxu0 %v2126
        %2152 = vmatprep.subr.bf16.mxu0 0
        %2153 = vmatpush1.bf16.msra.mxu0 %v2125
        %2154 = vmatprep.subr.bf16.mxu0 0
        %2155 = vmatpush1.bf16.msra.mxu0 %v2124
        %2156 = vmatprep.subr.bf16.mxu0 0
        %2157 = vmatpush2.bf16.msra.mxu0 0
        %2158 = vmatprep.subr.bf16.mxu0 0
        %2159 = vmatpush2.bf16.msra.mxu0 0
        %2160 = vmatprep.subr.bf16.mxu0 0
        %2161 = vmatpush2.bf16.msra.mxu0 0
        %2162 = vmatprep.subr.bf16.mxu0 0
        %2163 = vmatpush2.bf16.msra.mxu0 0
        %2164 = vmatprep.subr.bf16.mxu0 0
        %2165 = vmatpush2.bf16.msra.mxu0 0
        %2166 = vmatprep.subr.bf16.mxu0 0
        %2167 = vmatpush2.bf16.msra.mxu0 0
        %2168 = vmatprep.subr.bf16.mxu0 0
        %2169 = vmatpush2.bf16.msra.mxu0 0
        %2170 = vmatprep.subr.bf16.mxu0 0
        %2171 = vmatpush2.bf16.msra.mxu0 0
        %2172 = vmatprep.mubr.bf16.mxu0 0
        %2173 = vmatmul.mubr.bf16.gmra.mxu0 %v2074
        %v2174 = vpop.f32.mrf.mxu0
        %v2175 = vadd.f32 0.0, %v2174
        %v2176 = vpop.f32.mrf.mxu0
        %v2177 = vpop.f32.mrf.mxu0
        %v2178 = vadd.f32 0.0, %v2177
        %v2179 = vpop.f32.mrf.mxu0
        %2180 = vdwg.mxu0
        %v2197 = vunpack.c.l.b16 %v2056
        %v2198 = vunpack.c.l.b16 %v2057
        %v2199 = vunpack.c.l.b16 %v2058
        %v2200 = vunpack.c.l.b16 %v2059
        %v2201 = vunpack.c.l.b16 %v2060
        %v2202 = vunpack.c.l.b16 %v2061
        %v2203 = vunpack.c.l.b16 %v2062
        %v2204 = vunpack.c.l.b16 %v2063
        %v2205 = vunpack.c.l.b16 %v2064
        %v2206 = vunpack.c.l.b16 %v2065
        %v2207 = vunpack.c.l.b16 %v2066
        %v2208 = vunpack.c.l.b16 %v2067
        %v2209 = vunpack.c.l.b16 %v2068
        %v2210 = vunpack.c.l.b16 %v2069
        %v2211 = vunpack.c.l.b16 %v2070
        %v2212 = vunpack.c.l.b16 %v2071
        %v2213 = vpack.c.b16 %v2198, %v2197
        %v2214 = vpack.c.b16 %v2200, %v2199
        %v2215 = vpack.c.b16 %v2202, %v2201
        %v2216 = vpack.c.b16 %v2204, %v2203
        %v2217 = vpack.c.b16 %v2206, %v2205
        %v2218 = vpack.c.b16 %v2208, %v2207
        %v2219 = vpack.c.b16 %v2210, %v2209
        %v2220 = vpack.c.b16 %v2212, %v2211
        %2229 = vmatprep.subr.bf16.mxu0 0
        %2230 = vmatpush1.bf16.msra.mxu0 %v2220
        %2231 = vmatprep.subr.bf16.mxu0 0
        %2232 = vmatpush1.bf16.msra.mxu0 %v2219
        %2233 = vmatprep.subr.bf16.mxu0 0
        %2234 = vmatpush1.bf16.msra.mxu0 %v2218
        %2235 = vmatprep.subr.bf16.mxu0 0
        %2236 = vmatpush1.bf16.msra.mxu0 %v2217
        %2237 = vmatprep.subr.bf16.mxu0 0
        %2238 = vmatpush1.bf16.msra.mxu0 %v2216
        %2239 = vmatprep.subr.bf16.mxu0 0
        %2240 = vmatpush1.bf16.msra.mxu0 %v2215
        %2241 = vmatprep.subr.bf16.mxu0 0
        %2242 = vmatpush1.bf16.msra.mxu0 %v2214
        %2243 = vmatprep.subr.bf16.mxu0 0
        %2244 = vmatpush1.bf16.msra.mxu0 %v2213
        %2245 = vmatprep.subr.bf16.mxu0 0
        %2246 = vmatpush2.bf16.msra.mxu0 0
        %2247 = vmatprep.subr.bf16.mxu0 0
        %2248 = vmatpush2.bf16.msra.mxu0 0
        %2249 = vmatprep.subr.bf16.mxu0 0
        %2250 = vmatpush2.bf16.msra.mxu0 0
        %2251 = vmatprep.subr.bf16.mxu0 0
        %2252 = vmatpush2.bf16.msra.mxu0 0
        %2253 = vmatprep.subr.bf16.mxu0 0
        %2254 = vmatpush2.bf16.msra.mxu0 0
        %2255 = vmatprep.subr.bf16.mxu0 0
        %2256 = vmatpush2.bf16.msra.mxu0 0
        %2257 = vmatprep.subr.bf16.mxu0 0
        %2258 = vmatpush2.bf16.msra.mxu0 0
        %2259 = vmatprep.subr.bf16.mxu0 0
        %2260 = vmatpush2.bf16.msra.mxu0 0
        %2261 = vmatprep.mubr.bf16.mxu0 0
        %2262 = vmatmul.mubr.bf16.gmra.mxu0 %v2054
        %v2263 = vpop.f32.mrf.mxu0
        %v2264 = vadd.f32 %v2175, %v2263
        %v2265 = vpop.f32.mrf.mxu0
        %v2266 = vpop.f32.mrf.mxu0
        %v2267 = vadd.f32 %v2178, %v2266
        %v2268 = vpop.f32.mrf.mxu0
        %2269 = vdwg.mxu0
        %v2270 = vld [vmem:[#allocation2 + $0x2] sm:$0xff]
        %v2271 = vld [vmem:[#allocation2 + $0xa] sm:$0xff]
        %v2272 = vpack.c.bf16 %v2271, %v2270
        %s2273 = scalar_lea.vmem [#allocation3], 1088
        %v2274 = vld [vmem:[%s2273] sm:$0xf]
        %v2275 = vld [vmem:[%s2273 + $0x4] sm:$0xf]
        %v2276 = vld [vmem:[%s2273 + $0x8] sm:$0xf]
        %v2277 = vld [vmem:[%s2273 + $0xc] sm:$0xf]
        %v2278 = vld [vmem:[%s2273 + $0x10] sm:$0xf]
        %v2279 = vld [vmem:[%s2273 + $0x14] sm:$0xf]
        %v2280 = vld [vmem:[%s2273 + $0x18] sm:$0xf]
        %v2281 = vld [vmem:[%s2273 + $0x1c] sm:$0xf]
        %v2282 = vld [vmem:[%s2273 + $0x20] sm:$0xf]
        %v2283 = vld [vmem:[%s2273 + $0x24] sm:$0xf]
        %v2284 = vld [vmem:[%s2273 + $0x28] sm:$0xf]
        %v2285 = vld [vmem:[%s2273 + $0x2c] sm:$0xf]
        %v2286 = vld [vmem:[%s2273 + $0x30] sm:$0xf]
        %v2287 = vld [vmem:[%s2273 + $0x34] sm:$0xf]
        %v2288 = vld [vmem:[%s2273 + $0x38] sm:$0xf]
        %v2289 = vld [vmem:[%s2273 + $0x3c] sm:$0xf]
        %v2306 = vunpack.c.l.b16 %v2274
        %v2307 = vunpack.c.l.b16 %v2275
        %v2308 = vunpack.c.l.b16 %v2276
        %v2309 = vunpack.c.l.b16 %v2277
        %v2310 = vunpack.c.l.b16 %v2278
        %v2311 = vunpack.c.l.b16 %v2279
        %v2312 = vunpack.c.l.b16 %v2280
        %v2313 = vunpack.c.l.b16 %v2281
        %v2314 = vunpack.c.l.b16 %v2282
        %v2315 = vunpack.c.l.b16 %v2283
        %v2316 = vunpack.c.l.b16 %v2284
        %v2317 = vunpack.c.l.b16 %v2285
        %v2318 = vunpack.c.l.b16 %v2286
        %v2319 = vunpack.c.l.b16 %v2287
        %v2320 = vunpack.c.l.b16 %v2288
        %v2321 = vunpack.c.l.b16 %v2289
        %v2322 = vpack.c.b16 %v2307, %v2306
        %v2323 = vpack.c.b16 %v2309, %v2308
        %v2324 = vpack.c.b16 %v2311, %v2310
        %v2325 = vpack.c.b16 %v2313, %v2312
        %v2326 = vpack.c.b16 %v2315, %v2314
        %v2327 = vpack.c.b16 %v2317, %v2316
        %v2328 = vpack.c.b16 %v2319, %v2318
        %v2329 = vpack.c.b16 %v2321, %v2320
        %2338 = vmatprep.subr.bf16.mxu0 0
        %2339 = vmatpush1.bf16.msra.mxu0 %v2329
        %2340 = vmatprep.subr.bf16.mxu0 0
        %2341 = vmatpush1.bf16.msra.mxu0 %v2328
        %2342 = vmatprep.subr.bf16.mxu0 0
        %2343 = vmatpush1.bf16.msra.mxu0 %v2327
        %2344 = vmatprep.subr.bf16.mxu0 0
        %2345 = vmatpush1.bf16.msra.mxu0 %v2326
        %2346 = vmatprep.subr.bf16.mxu0 0
        %2347 = vmatpush1.bf16.msra.mxu0 %v2325
        %2348 = vmatprep.subr.bf16.mxu0 0
        %2349 = vmatpush1.bf16.msra.mxu0 %v2324
        %2350 = vmatprep.subr.bf16.mxu0 0
        %2351 = vmatpush1.bf16.msra.mxu0 %v2323
        %2352 = vmatprep.subr.bf16.mxu0 0
        %2353 = vmatpush1.bf16.msra.mxu0 %v2322
        %2354 = vmatprep.subr.bf16.mxu0 0
        %2355 = vmatpush2.bf16.msra.mxu0 0
        %2356 = vmatprep.subr.bf16.mxu0 0
        %2357 = vmatpush2.bf16.msra.mxu0 0
        %2358 = vmatprep.subr.bf16.mxu0 0
        %2359 = vmatpush2.bf16.msra.mxu0 0
        %2360 = vmatprep.subr.bf16.mxu0 0
        %2361 = vmatpush2.bf16.msra.mxu0 0
        %2362 = vmatprep.subr.bf16.mxu0 0
        %2363 = vmatpush2.bf16.msra.mxu0 0
        %2364 = vmatprep.subr.bf16.mxu0 0
        %2365 = vmatpush2.bf16.msra.mxu0 0
        %2366 = vmatprep.subr.bf16.mxu0 0
        %2367 = vmatpush2.bf16.msra.mxu0 0
        %2368 = vmatprep.subr.bf16.mxu0 0
        %2369 = vmatpush2.bf16.msra.mxu0 0
        %2370 = vmatprep.mubr.bf16.mxu0 0
        %2371 = vmatmul.mubr.bf16.gmra.mxu0 %v2272
        %v2372 = vpop.f32.mrf.mxu0
        %v2373 = vadd.f32 0.0, %v2372
        %v2374 = vpop.f32.mrf.mxu0
        %v2375 = vpop.f32.mrf.mxu0
        %v2376 = vadd.f32 0.0, %v2375
        %v2377 = vpop.f32.mrf.mxu0
        %2378 = vdwg.mxu0
        %v2379 = vadd.f32 %v2264, %v2373
        %v2380 = vadd.f32 %v2267, %v2376
        %v2381 = vld [vmem:[#allocation2 + $0x3] sm:$0xff]
        %v2382 = vld [vmem:[#allocation2 + $0xb] sm:$0xff]
        %v2383 = vpack.c.bf16 %v2382, %v2381
        %s2384 = scalar_lea.vmem [#allocation3], 1152
        %v2385 = vld [vmem:[%s2384] sm:$0xf]
        %v2386 = vld [vmem:[%s2384 + $0x4] sm:$0xf]
        %v2387 = vld [vmem:[%s2384 + $0x8] sm:$0xf]
        %v2388 = vld [vmem:[%s2384 + $0xc] sm:$0xf]
        %v2389 = vld [vmem:[%s2384 + $0x10] sm:$0xf]
        %v2390 = vld [vmem:[%s2384 + $0x14] sm:$0xf]
        %v2391 = vld [vmem:[%s2384 + $0x18] sm:$0xf]
        %v2392 = vld [vmem:[%s2384 + $0x1c] sm:$0xf]
        %v2393 = vld [vmem:[%s2384 + $0x20] sm:$0xf]
        %v2394 = vld [vmem:[%s2384 + $0x24] sm:$0xf]
        %v2395 = vld [vmem:[%s2384 + $0x28] sm:$0xf]
        %v2396 = vld [vmem:[%s2384 + $0x2c] sm:$0xf]
        %v2397 = vld [vmem:[%s2384 + $0x30] sm:$0xf]
        %v2398 = vld [vmem:[%s2384 + $0x34] sm:$0xf]
        %v2399 = vld [vmem:[%s2384 + $0x38] sm:$0xf]
        %v2400 = vld [vmem:[%s2384 + $0x3c] sm:$0xf]
        %v2417 = vunpack.c.l.b16 %v2385
        %v2418 = vunpack.c.l.b16 %v2386
        %v2419 = vunpack.c.l.b16 %v2387
        %v2420 = vunpack.c.l.b16 %v2388
        %v2421 = vunpack.c.l.b16 %v2389
        %v2422 = vunpack.c.l.b16 %v2390
        %v2423 = vunpack.c.l.b16 %v2391
        %v2424 = vunpack.c.l.b16 %v2392
        %v2425 = vunpack.c.l.b16 %v2393
        %v2426 = vunpack.c.l.b16 %v2394
        %v2427 = vunpack.c.l.b16 %v2395
        %v2428 = vunpack.c.l.b16 %v2396
        %v2429 = vunpack.c.l.b16 %v2397
        %v2430 = vunpack.c.l.b16 %v2398
        %v2431 = vunpack.c.l.b16 %v2399
        %v2432 = vunpack.c.l.b16 %v2400
        %v2433 = vpack.c.b16 %v2418, %v2417
        %v2434 = vpack.c.b16 %v2420, %v2419
        %v2435 = vpack.c.b16 %v2422, %v2421
        %v2436 = vpack.c.b16 %v2424, %v2423
        %v2437 = vpack.c.b16 %v2426, %v2425
        %v2438 = vpack.c.b16 %v2428, %v2427
        %v2439 = vpack.c.b16 %v2430, %v2429
        %v2440 = vpack.c.b16 %v2432, %v2431
        %2449 = vmatprep.subr.bf16.mxu0 0
        %2450 = vmatpush1.bf16.msra.mxu0 %v2440
        %2451 = vmatprep.subr.bf16.mxu0 0
        %2452 = vmatpush1.bf16.msra.mxu0 %v2439
        %2453 = vmatprep.subr.bf16.mxu0 0
        %2454 = vmatpush1.bf16.msra.mxu0 %v2438
        %2455 = vmatprep.subr.bf16.mxu0 0
        %2456 = vmatpush1.bf16.msra.mxu0 %v2437
        %2457 = vmatprep.subr.bf16.mxu0 0
        %2458 = vmatpush1.bf16.msra.mxu0 %v2436
        %2459 = vmatprep.subr.bf16.mxu0 0
        %2460 = vmatpush1.bf16.msra.mxu0 %v2435
        %2461 = vmatprep.subr.bf16.mxu0 0
        %2462 = vmatpush1.bf16.msra.mxu0 %v2434
        %2463 = vmatprep.subr.bf16.mxu0 0
        %2464 = vmatpush1.bf16.msra.mxu0 %v2433
        %2465 = vmatprep.subr.bf16.mxu0 0
        %2466 = vmatpush2.bf16.msra.mxu0 0
        %2467 = vmatprep.subr.bf16.mxu0 0
        %2468 = vmatpush2.bf16.msra.mxu0 0
        %2469 = vmatprep.subr.bf16.mxu0 0
        %2470 = vmatpush2.bf16.msra.mxu0 0
        %2471 = vmatprep.subr.bf16.mxu0 0
        %2472 = vmatpush2.bf16.msra.mxu0 0
        %2473 = vmatprep.subr.bf16.mxu0 0
        %2474 = vmatpush2.bf16.msra.mxu0 0
        %2475 = vmatprep.subr.bf16.mxu0 0
        %2476 = vmatpush2.bf16.msra.mxu0 0
        %2477 = vmatprep.subr.bf16.mxu0 0
        %2478 = vmatpush2.bf16.msra.mxu0 0
        %2479 = vmatprep.subr.bf16.mxu0 0
        %2480 = vmatpush2.bf16.msra.mxu0 0
        %2481 = vmatprep.mubr.bf16.mxu0 0
        %2482 = vmatmul.mubr.bf16.gmra.mxu0 %v2383
        %v2483 = vpop.f32.mrf.mxu0
        %v2484 = vadd.f32 0.0, %v2483
        %v2485 = vpop.f32.mrf.mxu0
        %v2486 = vpop.f32.mrf.mxu0
        %v2487 = vadd.f32 0.0, %v2486
        %v2488 = vpop.f32.mrf.mxu0
        %2489 = vdwg.mxu0
        %v2490 = vadd.f32 %v2379, %v2484
        %v2491 = vadd.f32 %v2380, %v2487
        %v2492 = vld [vmem:[#allocation2 + $0x4] sm:$0xff]
        %v2493 = vld [vmem:[#allocation2 + $0xc] sm:$0xff]
        %v2494 = vpack.c.bf16 %v2493, %v2492
        %s2495 = scalar_lea.vmem [#allocation3], 1216
        %v2496 = vld [vmem:[%s2495] sm:$0xf]
        %v2497 = vld [vmem:[%s2495 + $0x4] sm:$0xf]
        %v2498 = vld [vmem:[%s2495 + $0x8] sm:$0xf]
        %v2499 = vld [vmem:[%s2495 + $0xc] sm:$0xf]
        %v2500 = vld [vmem:[%s2495 + $0x10] sm:$0xf]
        %v2501 = vld [vmem:[%s2495 + $0x14] sm:$0xf]
        %v2502 = vld [vmem:[%s2495 + $0x18] sm:$0xf]
        %v2503 = vld [vmem:[%s2495 + $0x1c] sm:$0xf]
        %v2504 = vld [vmem:[%s2495 + $0x20] sm:$0xf]
        %v2505 = vld [vmem:[%s2495 + $0x24] sm:$0xf]
        %v2506 = vld [vmem:[%s2495 + $0x28] sm:$0xf]
        %v2507 = vld [vmem:[%s2495 + $0x2c] sm:$0xf]
        %v2508 = vld [vmem:[%s2495 + $0x30] sm:$0xf]
        %v2509 = vld [vmem:[%s2495 + $0x34] sm:$0xf]
        %v2510 = vld [vmem:[%s2495 + $0x38] sm:$0xf]
        %v2511 = vld [vmem:[%s2495 + $0x3c] sm:$0xf]
        %v2528 = vunpack.c.l.b16 %v2496
        %v2529 = vunpack.c.l.b16 %v2497
        %v2530 = vunpack.c.l.b16 %v2498
        %v2531 = vunpack.c.l.b16 %v2499
        %v2532 = vunpack.c.l.b16 %v2500
        %v2533 = vunpack.c.l.b16 %v2501
        %v2534 = vunpack.c.l.b16 %v2502
        %v2535 = vunpack.c.l.b16 %v2503
        %v2536 = vunpack.c.l.b16 %v2504
        %v2537 = vunpack.c.l.b16 %v2505
        %v2538 = vunpack.c.l.b16 %v2506
        %v2539 = vunpack.c.l.b16 %v2507
        %v2540 = vunpack.c.l.b16 %v2508
        %v2541 = vunpack.c.l.b16 %v2509
        %v2542 = vunpack.c.l.b16 %v2510
        %v2543 = vunpack.c.l.b16 %v2511
        %v2544 = vpack.c.b16 %v2529, %v2528
        %v2545 = vpack.c.b16 %v2531, %v2530
        %v2546 = vpack.c.b16 %v2533, %v2532
        %v2547 = vpack.c.b16 %v2535, %v2534
        %v2548 = vpack.c.b16 %v2537, %v2536
        %v2549 = vpack.c.b16 %v2539, %v2538
        %v2550 = vpack.c.b16 %v2541, %v2540
        %v2551 = vpack.c.b16 %v2543, %v2542
        %2560 = vmatprep.subr.bf16.mxu0 0
        %2561 = vmatpush1.bf16.msra.mxu0 %v2551
        %2562 = vmatprep.subr.bf16.mxu0 0
        %2563 = vmatpush1.bf16.msra.mxu0 %v2550
        %2564 = vmatprep.subr.bf16.mxu0 0
        %2565 = vmatpush1.bf16.msra.mxu0 %v2549
        %2566 = vmatprep.subr.bf16.mxu0 0
        %2567 = vmatpush1.bf16.msra.mxu0 %v2548
        %2568 = vmatprep.subr.bf16.mxu0 0
        %2569 = vmatpush1.bf16.msra.mxu0 %v2547
        %2570 = vmatprep.subr.bf16.mxu0 0
        %2571 = vmatpush1.bf16.msra.mxu0 %v2546
        %2572 = vmatprep.subr.bf16.mxu0 0
        %2573 = vmatpush1.bf16.msra.mxu0 %v2545
        %2574 = vmatprep.subr.bf16.mxu0 0
        %2575 = vmatpush1.bf16.msra.mxu0 %v2544
        %2576 = vmatprep.subr.bf16.mxu0 0
        %2577 = vmatpush2.bf16.msra.mxu0 0
        %2578 = vmatprep.subr.bf16.mxu0 0
        %2579 = vmatpush2.bf16.msra.mxu0 0
        %2580 = vmatprep.subr.bf16.mxu0 0
        %2581 = vmatpush2.bf16.msra.mxu0 0
        %2582 = vmatprep.subr.bf16.mxu0 0
        %2583 = vmatpush2.bf16.msra.mxu0 0
        %2584 = vmatprep.subr.bf16.mxu0 0
        %2585 = vmatpush2.bf16.msra.mxu0 0
        %2586 = vmatprep.subr.bf16.mxu0 0
        %2587 = vmatpush2.bf16.msra.mxu0 0
        %2588 = vmatprep.subr.bf16.mxu0 0
        %2589 = vmatpush2.bf16.msra.mxu0 0
        %2590 = vmatprep.subr.bf16.mxu0 0
        %2591 = vmatpush2.bf16.msra.mxu0 0
        %2592 = vmatprep.mubr.bf16.mxu0 0
        %2593 = vmatmul.mubr.bf16.gmra.mxu0 %v2494
        %v2594 = vpop.f32.mrf.mxu0
        %v2595 = vadd.f32 0.0, %v2594
        %v2596 = vpop.f32.mrf.mxu0
        %v2597 = vpop.f32.mrf.mxu0
        %v2598 = vadd.f32 0.0, %v2597
        %v2599 = vpop.f32.mrf.mxu0
        %2600 = vdwg.mxu0
        %v2601 = vadd.f32 %v2490, %v2595
        %v2602 = vadd.f32 %v2491, %v2598
        %s2603 = scalar_lea.vmem %s2, 3
        %v2604 = vld [vmem:[%s2603] sm:$0x1]
        %v2606 = vlaneseq
        %v2607 = vshrl.u32 %v2606, 7
        %v2608 = vsub.s32 0, %v2607
        %v2609 = vrot.slane %v2604, %v2608
        %v2611 = vadd.f32 %v2601, %v2609
        %v2612 = vadd.f32 %v2602, %v2609
        %v2613 = vmax.f32 %v2611, 0.0
        %v2614 = vmax.f32 %v2612, 0.0
        %s2615 = scalar_lea.vmem %s3, 3
        %v2616 = vld [vmem:[%s2615] sm:$0x1]
        %v2618 = vlaneseq
        %v2619 = vshrl.u32 %v2618, 7
        %v2620 = vsub.s32 0, %v2619
        %v2621 = vrot.slane %v2616, %v2620
        %v2623 = vmul.f32 %v2613, %v2621
        %v2624 = vmul.f32 %v2614, %v2621
        %s2625 = scalar_lea.vmem %s4, 3
        %v2626 = vld [vmem:[%s2625] sm:$0x1]
        %v2628 = vlaneseq
        %v2629 = vshrl.u32 %v2628, 7
        %v2630 = vsub.s32 0, %v2629
        %v2631 = vrot.slane %v2626, %v2630
        %v2633 = vadd.f32 %v2623, %v2631
        %v2634 = vadd.f32 %v2624, %v2631
        %v2635 = vadd.f32 %v2633, %v2634
        %v2636 = vrot.slane %v2635, 4
        %v2637 = vadd.f32 %v2635, %v2636
        %v2638 = vrot.slane %v2637, 2
        %v2639 = vadd.f32 %v2637, %v2638
        %v2640 = vrot.slane %v2639, 1
        %v2641 = vadd.f32 %v2639, %v2640
        %v2642 = vmul.f32 %v2641, 0.0625
        %v2643 = vld [vmem:[%s5] sm:$0xff]
        %v2644 = vld [vmem:[%s5 + $0x8] sm:$0xff]
        %v2645 = vld [vmem:[%s5 + $0x10] sm:$0xff]
        %v2646 = vld [vmem:[%s5 + $0x18] sm:$0xff]
        %v2647 = vld [vmem:[%s5 + $0x20] sm:$0xff]
        %v2648 = vld [vmem:[%s5 + $0x28] sm:$0xff]
        %v2649 = vld [vmem:[%s5 + $0x30] sm:$0xff]
        %v2650 = vld [vmem:[%s5 + $0x38] sm:$0xff]
        %v2651 = vld [vmem:[%s5 + $0x40] sm:$0xff]
        %v2652 = vld [vmem:[%s5 + $0x48] sm:$0xff]
        %v2653 = vld [vmem:[%s5 + $0x50] sm:$0xff]
        %v2654 = vld [vmem:[%s5 + $0x58] sm:$0xff]
        %v2655 = vld [vmem:[%s5 + $0x60] sm:$0xff]
        %v2656 = vld [vmem:[%s5 + $0x68] sm:$0xff]
        %v2657 = vld [vmem:[%s5 + $0x70] sm:$0xff]
        %v2658 = vld [vmem:[%s5 + $0x78] sm:$0xff]
        %v2659 = vld [vmem:[%s6] sm:$0x1]
        %2660 = vmatprep.subr.mxu0 0.0
        %2661 = vmatpush1.msra.mxu0 %v2658
        %2662 = vmatprep.subr.mxu0 0.0
        %2663 = vmatpush1.msra.mxu0 %v2657
        %2664 = vmatprep.subr.mxu0 0.0
        %2665 = vmatpush1.msra.mxu0 %v2656
        %2666 = vmatprep.subr.mxu0 0.0
        %2667 = vmatpush1.msra.mxu0 %v2655
        %2668 = vmatprep.subr.mxu0 0.0
        %2669 = vmatpush1.msra.mxu0 %v2654
        %2670 = vmatprep.subr.mxu0 0.0
        %2671 = vmatpush1.msra.mxu0 %v2653
        %2672 = vmatprep.subr.mxu0 0.0
        %2673 = vmatpush1.msra.mxu0 %v2652
        %2674 = vmatprep.subr.mxu0 0.0
        %2675 = vmatpush1.msra.mxu0 %v2651
        %2676 = vmatprep.subr.mxu0 0.0
        %2677 = vmatpush1.msra.mxu0 %v2650
        %2678 = vmatprep.subr.mxu0 0.0
        %2679 = vmatpush1.msra.mxu0 %v2649
        %2680 = vmatprep.subr.mxu0 0.0
        %2681 = vmatpush1.msra.mxu0 %v2648
        %2682 = vmatprep.subr.mxu0 0.0
        %2683 = vmatpush1.msra.mxu0 %v2647
        %2684 = vmatprep.subr.mxu0 0.0
        %2685 = vmatpush1.msra.mxu0 %v2646
        %2686 = vmatprep.subr.mxu0 0.0
        %2687 = vmatpush1.msra.mxu0 %v2645
        %2688 = vmatprep.subr.mxu0 0.0
        %2689 = vmatpush1.msra.mxu0 %v2644
        %2690 = vmatprep.subr.mxu0 0.0
        %2691 = vmatpush1.msra.mxu0 %v2643
        %2692 = vmatprep.subr.mxu0 0.0
        %2693 = vmatpush2.msra.mxu0 0.0
        %2694 = vmatprep.subr.mxu0 0.0
        %2695 = vmatpush2.msra.mxu0 0.0
        %2696 = vmatprep.subr.mxu0 0.0
        %2697 = vmatpush2.msra.mxu0 0.0
        %2698 = vmatprep.subr.mxu0 0.0
        %2699 = vmatpush2.msra.mxu0 0.0
        %2700 = vmatprep.subr.mxu0 0.0
        %2701 = vmatpush2.msra.mxu0 0.0
        %2702 = vmatprep.subr.mxu0 0.0
        %2703 = vmatpush2.msra.mxu0 0.0
        %2704 = vmatprep.subr.mxu0 0.0
        %2705 = vmatpush2.msra.mxu0 0.0
        %2706 = vmatprep.subr.mxu0 0.0
        %2707 = vmatpush2.msra.mxu0 0.0
        %2708 = vmatprep.subr.mxu0 0.0
        %2709 = vmatpush2.msra.mxu0 0.0
        %2710 = vmatprep.subr.mxu0 0.0
        %2711 = vmatpush2.msra.mxu0 0.0
        %2712 = vmatprep.subr.mxu0 0.0
        %2713 = vmatpush2.msra.mxu0 0.0
        %2714 = vmatprep.subr.mxu0 0.0
        %2715 = vmatpush2.msra.mxu0 0.0
        %2716 = vmatprep.subr.mxu0 0.0
        %2717 = vmatpush2.msra.mxu0 0.0
        %2718 = vmatprep.subr.mxu0 0.0
        %2719 = vmatpush2.msra.mxu0 0.0
        %2720 = vmatprep.subr.mxu0 0.0
        %2721 = vmatpush2.msra.mxu0 0.0
        %2722 = vmatprep.subr.mxu0 0.0
        %2723 = vmatpush2.msra.mxu0 0.0
        %2724 = vmatprep.mubr.f32.mxu0 0.0
        %2725 = vmatmul.mubr.f32.gmra.mxu0 %v2642
        %v2726 = vpop.f32.mrf.mxu0
        %v2727 = vadd.f32 %v2659, %v2726
        %v2728 = vpop.f32.mrf.mxu0
        %2729 = vdwg.mxu0
        %vm2730 = vcmask 385024
        %2731 = vst.msk [vmem:[%s285] sm:$0x1] %vm2730, %v2727
        %s2732 = sand.u32 %s182, 1
        %s2733 = scalar_lea.sflag [#allocation5], %s2732
        %s2734 = sand.u32 %s182, 1
        %s2735 = scalar_lea.vmem [#allocation6], %s2734
        // Predicated region
        $region53: #{tpu_custom_call.1} parent=47 // pred_check
          %p2736 = pneg %p192
        $region54: #{tpu_custom_call.1} parent=47 // pred_check_branch
          %2738 = sbr.rel (%p2736) target = $region56
        $region55: #{tpu_custom_call.1} parent=47 // pred_region
          %s2740 = ssub.s32 16, 16
          %2741 = vsyncadd %s2733, %s2740
          %s2742 = smul.addr %s22, 16
          %s2743 = scalar_lea.hbm %s7, %s2742
          %s2745 = sshll.u32 %s2735, 4
          %s2746 = int_to_ptr.vmem [resolvable:$true] %s2745
          %2748 = dma.vmem_to_hbm [thread:$0]  %s2746, 16, %s2743, %s2733
        $region56: #{tpu_custom_call.1} parent=47 // pred_fallthru
          _
      $region48: #{tpu_custom_call.1} parent=5 // pred_fallthru
        _
      %p2749 = scmp.le.s32.totalorder 2, %s17
      // Predicated region
      $region57: #{tpu_custom_call.1} parent=5 // pred_check
        %p2750 = pneg %p2749
      $region58: #{tpu_custom_call.1} parent=5 // pred_check_branch
        %2752 = sbr.rel (%p2750) target = $region60
      $region59: #{tpu_custom_call.1} parent=5 // pred_region
        %s2753 = ssub.s32 %s17, 2
        // Predicated region
        $region61: #{tpu_custom_call.1} parent=59 // pred_check
          %p2754 = pneg %p198
        $region62: #{tpu_custom_call.1} parent=59 // pred_check_branch
          %2756 = sbr.rel (%p2754) target = $region64
        $region63: #{tpu_custom_call.1} parent=59 // pred_region
          %s2757 = sand.u32 %s183, 1
          %s2758 = scalar_lea.sflag [#allocation5], %s2757
          %s2759 = sand.u32 %s183, 1
          %s2760 = scalar_lea.vmem [#allocation6], %s2759
          %2761 = dma.done %s2758, 16
        $region64: #{tpu_custom_call.1} parent=59 // pred_fallthru
          _
      $region60: #{tpu_custom_call.1} parent=5 // pred_fallthru
        _
    $region6: #{tpu_custom_call.1} parent=1 // loop_footer
      %s21 = sadd.s32 1, %s17
    $region7: #{tpu_custom_call.1} parent=1 // loop_footer_branch
      %16 = sbr.rel target = $region3
    $region8: #{tpu_custom_call.1} parent=1 // loop_exit
      _
    %2762 = vsyncpa [#allocation4], 1
    %s2763 = scalar_lea.sflag [#allocation4], 1
    %2764 = vsyncpa %s2763, 1
    %2765 = vsyncpa [#allocation5], 1
    %s2766 = scalar_lea.sflag [#allocation5], 1
    %2767 = vsyncpa %s2766, 1

</llo_original>
